<compile_context>
chip_gen: v6e
topology: v6e:2x2x1
jax: 0.10.0
libtpu: 0.0.40
codegen_flags: <defaults>
</compile_context>

<pallas_src>
import jax
import jax.numpy as jnp
from jax import lax
from jax.experimental import pallas as pl
from jax.experimental.pallas import tpu as pltpu

EPS = 1e-5

# 3x3 tap offsets, row-major (di, dj).  Tap t matches weight slice
# w2_flat[:, t*C_mid:(t+1)*C_mid]  (OIHW -> (O, ki, kj, I) flatten).
_TAPS = [(di, dj) for di in (-1, 0, 1) for dj in (-1, 0, 1)]


def _pick_band_h(H, W, heavy_c, bytes_cap=4 << 20, lane_target=512):
    """Band height BH: divides H, BH*W is a multiple of 128, heaviest per-band
    block stays under bytes_cap, lane extent reaches lane_target if possible.
    Falls back to a single whole-image band (full-extent block)."""
    cands = [bh for bh in range(1, H + 1)
             if H % bh == 0 and (bh * W) % 128 == 0
             and heavy_c * bh * W * 4 <= bytes_cap]
    if not cands:
        return H
    for bh in cands:
        if bh * W >= lane_target:
            return bh
    return cands[-1]


# ----------------------------- kernel 1 --------------------------------------
# Fused BN1 (affine scale/bias) + ReLU + 1x1 conv, one (batch, row-band) tile
# per grid step.  Also emits the band's first/last y rows (the neighbours'
# 3x3 halo rows) and the band's sum / sum-of-squares for BN2 statistics.
def _bn_relu_conv1x1_kernel(x_ref, s_ref, b_ref, w_ref, y_ref, edge_ref, mom_ref):
    W = edge_ref.shape[2]
    a = jnp.maximum(x_ref[...] * s_ref[...] + b_ref[...], 0.0)        # (C_in, T) f32
    y = jnp.dot(w_ref[...], a.astype(jnp.bfloat16),
                preferred_element_type=jnp.float32)                   # (C_mid, T) f32
    y_ref[...] = y.astype(jnp.bfloat16)
    # first / last row of this band: halo rows for the neighbouring bands.
    edge_ref[0, :, :] = y[:, :W].astype(jnp.bfloat16)
    edge_ref[1, :, :] = y[:, y.shape[1] - W:].astype(jnp.bfloat16)
    # per-band moments for BN2, C_mid on the lane axis.
    mom_ref[...] = jnp.stack(
        [jnp.sum(y, axis=1), jnp.sum(y * y, axis=1)], axis=0)         # (2, C_mid)


# ----------------------------- kernel 2 --------------------------------------
# Fused BN2 + ReLU + 3x3 conv (padding=1) on one (batch, row-band) tile.
# Halo rows come from the edge array; the 9 taps are static lane shifts of a
# lane-padded activation, accumulated through 9 K=C_mid MXU matmuls.  The conv
# result is written into the pre-concat output buffer (residual already there,
# aliased via input_output_aliases) at channels [0, G).
def _bn_relu_conv3x3_kernel(y_ref, top_ref, bot_ref, s_ref, b_ref, w_ref,
                            res_ref, o_ref):
    del res_ref                          # aliased pre-concat buffer, never touched
    C_mid, T = y_ref.shape               # T = BH * W
    W = top_ref.shape[1]
    G = o_ref.shape[0]
    pid = pl.program_id(1)
    nb = pl.num_programs(1)

    s = s_ref[...]
    bias = b_ref[...]
    a_cur = jnp.maximum(y_ref[...].astype(jnp.float32) * s + bias, 0.0)    # (C_mid, T)
    a_top = jnp.maximum(top_ref[...].astype(jnp.float32) * s + bias, 0.0)  # (C_mid, W)
    a_bot = jnp.maximum(bot_ref[...].astype(jnp.float32) * s + bias, 0.0)  # (C_mid, W)
    # Conv zero-padding acts on the activation: zero the halo rows at the
    # image boundary (their clamped-copy contents are invalid there).
    a_top = jnp.where(pid > 0, a_top, 0.0)
    a_bot = jnp.where(pid < nb - 1, a_bot, 0.0)

    zcol = jnp.zeros((C_mid, 1), jnp.float32)
    ap = jnp.concatenate([zcol, a_top, a_cur, a_bot, zcol], axis=1)   # (C_mid, (BH+2)*W + 2)

    # Column-edge validity (only the dj = +-1 taps need a mask).
    col = lax.broadcasted_iota(jnp.int32, (1, T), 1) % W
    ok_l = col > 0
    ok_r = col < (W - 1)

    wflat = w_ref[...]                                                # (G, 9*C_mid) bf16
    acc = jnp.zeros((G, T), jnp.float32)
    for t, (di, dj) in enumerate(_TAPS):
        off = 1 + (1 + di) * W + dj                                   # static lane shift
        sh = ap[:, off:off + T]                                       # (C_mid, T)
        if dj == -1:
            sh = jnp.where(ok_l, sh, 0.0)
        elif dj == 1:
            sh = jnp.where(ok_r, sh, 0.0)
        acc = acc + jnp.dot(wflat[:, t * C_mid:(t + 1) * C_mid],
                            sh.astype(jnp.bfloat16),
                            preferred_element_type=jnp.float32)
    o_ref[...] = acc


# ------------------------------ wrapper ---------------------------------------
def bottleneck_block(x_nchw, params, band_h=None):
    gamma1, beta1 = params["gamma1"], params["beta1"]
    gamma2, beta2 = params["gamma2"], params["beta2"]
    w1 = params["w1"]                       # (C_mid, C_in)      PyTorch layout
    w2 = params["w2"]                       # (G, C_mid, 3, 3)   PyTorch OIHW

    N, C_in, H, W = x_nchw.shape
    C_mid = w1.shape[0]
    G = w2.shape[0]
    HW = H * W
    C_out = G + C_in

    x2 = x_nchw.reshape(N, C_in, HW)        # channel-major, free reshape

    # BN1 batch statistics (training-mode nn.BatchNorm2d, biased variance),
    # single fused sum / sum-of-squares pass over x.
    m_cnt = float(N * HW)
    s1 = jnp.sum(x2, axis=(0, 2))
    ss1 = jnp.sum(x2 * x2, axis=(0, 2))
    mean1 = s1 / m_cnt
    var1 = jnp.maximum(ss1 / m_cnt - mean1 * mean1, 0.0)
    scale1 = (gamma1 / jnp.sqrt(var1 + EPS)).reshape(C_in, 1)
    bias1 = beta1.reshape(C_in, 1) - mean1.reshape(C_in, 1) * scale1

    if band_h is None:
        band_h = _pick_band_h(H, W, max(C_in, C_mid))
    BH = band_h
    nb = H // BH
    T = BH * W

    w1_b = w1.astype(jnp.bfloat16)

    y, edge, mom = pl.pallas_call(
        _bn_relu_conv1x1_kernel,
        out_shape=(
            jax.ShapeDtypeStruct((N, C_mid, HW), jnp.bfloat16),
            jax.ShapeDtypeStruct((N, nb, 2, C_mid, W), jnp.bfloat16),
            jax.ShapeDtypeStruct((N, nb, 2, C_mid), jnp.float32),
        ),
        grid=(N, nb),
        in_specs=[
            pl.BlockSpec((None, C_in, T), lambda n, b: (n, 0, b)),
            pl.BlockSpec((C_in, 1), lambda n, b: (0, 0)),
            pl.BlockSpec((C_in, 1), lambda n, b: (0, 0)),
            pl.BlockSpec((C_mid, C_in), lambda n, b: (0, 0)),
        ],
        out_specs=(
            pl.BlockSpec((None, C_mid, T), lambda n, b: (n, 0, b)),
            pl.BlockSpec((None, None, 2, C_mid, W), lambda n, b: (n, b, 0, 0, 0)),
            pl.BlockSpec((None, None, 2, C_mid), lambda n, b: (n, b, 0, 0)),
        ),
        compiler_params=pltpu.CompilerParams(
            dimension_semantics=("parallel", "parallel")),
    )(x2, scale1, bias1, w1_b)

    # BN2 batch statistics from the in-kernel band moments (no extra HBM pass
    # over y).  E[y^2]-E[y]^2 in f32 is fine at these magnitudes.
    mean2 = jnp.sum(mom[:, :, 0, :], axis=(0, 1)) / m_cnt
    var2 = jnp.maximum(jnp.sum(mom[:, :, 1, :], axis=(0, 1)) / m_cnt
                       - mean2 * mean2, 0.0)
    scale2 = (gamma2 / jnp.sqrt(var2 + EPS)).reshape(C_mid, 1)
    bias2 = beta2.reshape(C_mid, 1) - mean2.reshape(C_mid, 1) * scale2

    # (G, C_mid, 3, 3) OIHW -> (G, 9*C_mid), tap-major (matches _TAPS order).
    w2_flat = jnp.transpose(w2, (0, 2, 3, 1)).reshape(G, 9 * C_mid)
    w2_b = w2_flat.astype(jnp.bfloat16)

    # DenseNet-style pre-concat buffer: the residual already sits in channels
    # [G:), kernel 2 only writes the conv channels [0:G) (aliased in/out).
    out_init = jnp.pad(x2, ((0, 0), (G, 0), (0, 0)))

    nb_total = nb

    out = pl.pallas_call(
        _bn_relu_conv3x3_kernel,
        out_shape=jax.ShapeDtypeStruct((N, C_out, HW), jnp.float32),
        grid=(N, nb),
        in_specs=[
            pl.BlockSpec((None, C_mid, T), lambda n, b: (n, 0, b)),
            # top halo: last row of the previous band (zeroed in-kernel at b==0)
            pl.BlockSpec((None, None, None, C_mid, W),
                         lambda n, b: (n, jnp.maximum(b - 1, 0), 1, 0, 0)),
            # bottom halo: first row of the next band (zeroed at b==nb-1)
            pl.BlockSpec((None, None, None, C_mid, W),
                         lambda n, b: (n, jnp.minimum(b + 1, nb_total - 1), 0, 0, 0)),
            pl.BlockSpec((C_mid, 1), lambda n, b: (0, 0)),
            pl.BlockSpec((C_mid, 1), lambda n, b: (0, 0)),
            pl.BlockSpec((G, 9 * C_mid), lambda n, b: (0, 0)),
            pl.BlockSpec(memory_space=pl.ANY),   # pre-concat residual buffer
        ],
        out_specs=pl.BlockSpec((None, G, T), lambda n, b: (n, 0, b)),
        input_output_aliases={6: 0},
        compiler_params=pltpu.CompilerParams(
            dimension_semantics=("parallel", "parallel")),
    )(y, edge, edge, scale2, bias2, w2_b, out_init)

    return out.reshape(N, C_out, H, W)       # free reshape, already NCHW


# --------------------------- pure-JAX reference --------------------------------
def bottleneck_block_ref(x, params):
    gamma1, beta1 = params["gamma1"], params["beta1"]
    gamma2, beta2 = params["gamma2"], params["beta2"]
    w1, w2 = params["w1"], params["w2"]      # (C_mid, C_in), (G, C_mid, 3, 3)

    m1 = jnp.mean(x, axis=(0, 2, 3))
    v1 = jnp.var(x, axis=(0, 2, 3))
    a1 = jnp.maximum(
        (x - m1[None, :, None, None]) / jnp.sqrt(v1 + EPS)[None, :, None, None]
        * gamma1[None, :, None, None] + beta1[None, :, None, None], 0.0)
    y = jnp.einsum("nchw,oc->nohw", a1, w1)

    m2 = jnp.mean(y, axis=(0, 2, 3))
    v2 = jnp.var(y, axis=(0, 2, 3))
    a2 = jnp.maximum(
        (y - m2[None, :, None, None]) / jnp.sqrt(v2 + EPS)[None, :, None, None]
        * gamma2[None, :, None, None] + beta2[None, :, None, None], 0.0)
    c2 = lax.conv_general_dilated(
        a2, w2, window_strides=(1, 1), padding="SAME",
        dimension_numbers=("NCHW", "OIHW", "NCHW"))

    return jnp.concatenate([c2, x], axis=1)


if __name__ == "__main__":
    # small shapes: batch=2, in_channels=8, growth_rate=8, spatial=32x32.
    # (32x32 so the band chooser picks BH=16 -> 2 row-bands per image and the
    # cross-band halo path is actually exercised.)
    N, C_IN, H, W = 2, 8, 32, 32
    GROWTH = 8
    C_MID = 4 * GROWTH

    key = jax.random.PRNGKey(0)
    kx, kw1, kw2 = jax.random.split(key, 3)

    x = jax.random.normal(kx, (N, C_IN, H, W), dtype=jnp.float32)

    params = {
        # nn.BatchNorm2d default affine init: weight=1, bias=0
        "gamma1": jnp.ones((C_IN,), jnp.float32),
        "beta1": jnp.zeros((C_IN,), jnp.float32),
        "gamma2": jnp.ones((C_MID,), jnp.float32),
        "beta2": jnp.zeros((C_MID,), jnp.float32),
        # conv1 weight (C_mid, C_in) == PyTorch (C_mid, C_in, 1, 1) squeezed
        "w1": 0.1 * jax.random.normal(kw1, (C_MID, C_IN), dtype=jnp.float32),
        # conv2 weight (G, C_mid, 3, 3) == PyTorch OIHW
        "w2": 0.1 * jax.random.normal(kw2, (GROWTH, C_MID, 3, 3),
                                      dtype=jnp.float32),
    }

    out = jax.block_until_ready(jax.jit(bottleneck_block)(x, params))
    ref = jax.block_until_ready(bottleneck_block_ref(x, params))

    assert out.shape == (N, GROWTH + C_IN, H, W), out.shape
    err = float(jnp.max(jnp.abs(out - ref)))
    # bf16 matmul operands + bf16 y intermediate: loosened tolerance vs the
    # f32 reference (residual channels are bit-exact; conv channels carry
    # ~0.3% bf16 rounding).
    assert jnp.allclose(out, ref, rtol=5e-2, atol=5e-2), err
    print("KERNEL_OK")
</pallas_src>

<mosaic_0001>
module attributes {stable_mosaic.version = 11 : i64} {
  func.func @_bn_relu_conv1x1_kernel(%arg0: i32, %arg1: i32, %arg2: memref<1x8x512xf32, #tpu.memory_space<vmem>>, %arg3: memref<8x1xf32, #tpu.memory_space<vmem>>, %arg4: memref<8x1xf32, #tpu.memory_space<vmem>>, %arg5: memref<32x8xbf16, #tpu.memory_space<vmem>>, %arg6: memref<1x32x512xbf16, #tpu.memory_space<vmem>>, %arg7: memref<1x1x2x32x32xbf16, #tpu.memory_space<vmem>>, %arg8: memref<1x1x2x32xf32, #tpu.memory_space<vmem>>) attributes {dimension_semantics = [#tpu.dimension_semantics<parallel>, #tpu.dimension_semantics<parallel>], iteration_bounds = array<i64: 2, 2>, scalar_prefetch = 0 : i64, scratch_operands = 0 : i64, tpu.core_type = #tpu.core_type<tc>, window_params = [{transform_indices = @transform_0, window_bounds = array<i64: 1, 8, 512>}, {pipeline_mode = #tpu.pipeline_mode<synchronous>, transform_indices = @transform_1, window_bounds = array<i64: 8, 1>}, {pipeline_mode = #tpu.pipeline_mode<synchronous>, transform_indices = @transform_2, window_bounds = array<i64: 8, 1>}, {pipeline_mode = #tpu.pipeline_mode<synchronous>, transform_indices = @transform_3, window_bounds = array<i64: 32, 8>}, {transform_indices = @transform_4, window_bounds = array<i64: 1, 32, 512>}, {transform_indices = @transform_5, window_bounds = array<i64: 1, 1, 2, 32, 32>}, {transform_indices = @transform_6, window_bounds = array<i64: 1, 1, 2, 32>}]} {
    %c0 = arith.constant 0 : index
    %c0_0 = arith.constant 0 : index
    %c0_1 = arith.constant 0 : index
    %0 = vector.load %arg2[%c0, %c0_0, %c0_1] : memref<1x8x512xf32, #tpu.memory_space<vmem>>, vector<1x8x512xf32>
    %1 = vector.shape_cast %0 : vector<1x8x512xf32> to vector<8x512xf32>
    %c0_2 = arith.constant 0 : index
    %c0_3 = arith.constant 0 : index
    %2 = vector.load %arg3[%c0_2, %c0_3] : memref<8x1xf32, #tpu.memory_space<vmem>>, vector<8x1xf32>
    %3 = vector.broadcast %2 : vector<8x1xf32> to vector<8x512xf32>
    %4 = arith.mulf %1, %3 : vector<8x512xf32>
    %c0_4 = arith.constant 0 : index
    %c0_5 = arith.constant 0 : index
    %5 = vector.load %arg4[%c0_4, %c0_5] : memref<8x1xf32, #tpu.memory_space<vmem>>, vector<8x1xf32>
    %6 = vector.broadcast %5 : vector<8x1xf32> to vector<8x512xf32>
    %7 = arith.addf %4, %6 : vector<8x512xf32>
    %cst = arith.constant 0.000000e+00 : f32
    %8 = vector.broadcast %cst : f32 to vector<8x512xf32>
    %9 = arith.maximumf %7, %8 : vector<8x512xf32>
    %c0_6 = arith.constant 0 : index
    %c0_7 = arith.constant 0 : index
    %10 = vector.load %arg5[%c0_6, %c0_7] : memref<32x8xbf16, #tpu.memory_space<vmem>>, vector<32x8xbf16>
    %11 = arith.truncf %9 : vector<8x512xf32> to vector<8x512xbf16>
    %cst_8 = arith.constant dense<0.000000e+00> : vector<32x512xf32>
    %12 = tpu.matmul %10, %11, %cst_8 {dimension_numbers = #tpu.dot_dimension_numbers<[1], [0], [0], [1], [0, 0, 1, 1], [], []>} : vector<32x8xbf16>, vector<8x512xbf16>, vector<32x512xf32> -> vector<32x512xf32>
    %13 = arith.truncf %12 : vector<32x512xf32> to vector<32x512xbf16>
    %c0_9 = arith.constant 0 : index
    %c0_10 = arith.constant 0 : index
    %c0_11 = arith.constant 0 : index
    %14 = vector.load %arg6[%c0_9, %c0_10, %c0_11] : memref<1x32x512xbf16, #tpu.memory_space<vmem>>, vector<1x32x512xbf16>
    %15 = vector.shape_cast %14 : vector<1x32x512xbf16> to vector<32x512xbf16>
    %16 = vector.shape_cast %13 : vector<32x512xbf16> to vector<1x32x512xbf16>
    tpu.vector_store %arg6[%c0_9, %c0_10, %c0_11], %16 {strides = array<i32>} : memref<1x32x512xbf16, #tpu.memory_space<vmem>>, vector<1x32x512xbf16>,
    %17 = vector.extract_strided_slice %12 {offsets = [0, 0], sizes = [32, 32], strides = [1, 1]} : vector<32x512xf32> to vector<32x32xf32>
    %18 = arith.truncf %17 : vector<32x32xf32> to vector<32x32xbf16>
    %c0_12 = arith.constant 0 : index
    %c0_13 = arith.constant 0 : index
    %c0_14 = arith.constant 0 : index
    %c0_15 = arith.constant 0 : index
    %c0_16 = arith.constant 0 : index
    %19 = vector.load %arg7[%c0_12, %c0_13, %c0_14, %c0_15, %c0_16] : memref<1x1x2x32x32xbf16, #tpu.memory_space<vmem>>, vector<1x1x1x32x32xbf16>
    %20 = vector.shape_cast %19 : vector<1x1x1x32x32xbf16> to vector<32x32xbf16>
    %21 = vector.shape_cast %18 : vector<32x32xbf16> to vector<1x1x1x32x32xbf16>
    tpu.vector_store %arg7[%c0_12, %c0_13, %c0_14, %c0_15, %c0_16], %21 {strides = array<i32>} : memref<1x1x2x32x32xbf16, #tpu.memory_space<vmem>>, vector<1x1x1x32x32xbf16>,
    %22 = vector.extract_strided_slice %12 {offsets = [0, 480], sizes = [32, 32], strides = [1, 1]} : vector<32x512xf32> to vector<32x32xf32>
    %23 = arith.truncf %22 : vector<32x32xf32> to vector<32x32xbf16>
    %c0_17 = arith.constant 0 : index
    %c0_18 = arith.constant 0 : index
    %c1 = arith.constant 1 : index
    %c0_19 = arith.constant 0 : index
    %c0_20 = arith.constant 0 : index
    %24 = vector.load %arg7[%c0_17, %c0_18, %c1, %c0_19, %c0_20] : memref<1x1x2x32x32xbf16, #tpu.memory_space<vmem>>, vector<1x1x1x32x32xbf16>
    %25 = vector.shape_cast %24 : vector<1x1x1x32x32xbf16> to vector<32x32xbf16>
    %26 = vector.shape_cast %23 : vector<32x32xbf16> to vector<1x1x1x32x32xbf16>
    tpu.vector_store %arg7[%c0_17, %c0_18, %c1, %c0_19, %c0_20], %26 {strides = array<i32>} : memref<1x1x2x32x32xbf16, #tpu.memory_space<vmem>>, vector<1x1x1x32x32xbf16>,
    %cst_21 = arith.constant dense<0.000000e+00> : vector<32xf32>
    %27 = vector.multi_reduction <add>, %12, %cst_21 [1] : vector<32x512xf32> to vector<32xf32>
    %28 = arith.mulf %12, %12 : vector<32x512xf32>
    %cst_22 = arith.constant dense<0.000000e+00> : vector<32xf32>
    %29 = vector.multi_reduction <add>, %28, %cst_22 [1] : vector<32x512xf32> to vector<32xf32>
    %30 = vector.shape_cast %27 : vector<32xf32> to vector<1x32xf32>
    %31 = vector.shape_cast %29 : vector<32xf32> to vector<1x32xf32>
    %32 = tpu.concatenate %30, %31 in 0 : vector<1x32xf32>, vector<1x32xf32> -> vector<2x32xf32>
    %c0_23 = arith.constant 0 : index
    %c0_24 = arith.constant 0 : index
    %c0_25 = arith.constant 0 : index
    %c0_26 = arith.constant 0 : index
    %33 = vector.load %arg8[%c0_23, %c0_24, %c0_25, %c0_26] : memref<1x1x2x32xf32, #tpu.memory_space<vmem>>, vector<1x1x2x32xf32>
    %34 = vector.shape_cast %33 : vector<1x1x2x32xf32> to vector<2x32xf32>
    %35 = vector.shape_cast %32 : vector<2x32xf32> to vector<1x1x2x32xf32>
    tpu.vector_store %arg8[%c0_23, %c0_24, %c0_25, %c0_26], %35 {strides = array<i32>} : memref<1x1x2x32xf32, #tpu.memory_space<vmem>>, vector<1x1x2x32xf32>,
    return
  }
  func.func @transform_0(%arg0: i32, %arg1: i32) -> (i32, i32, i32) {
    %c0_i32 = arith.constant 0 : i32
    %c0_i32_0 = arith.constant 0 : i32
    return %arg0, %c0_i32, %arg1 : i32, i32, i32
  }
  func.func @transform_1(%arg0: i32, %arg1: i32) -> (i32, i32) {
    %c0_i32 = arith.constant 0 : i32
    %c0_i32_0 = arith.constant 0 : i32
    %c0_i32_1 = arith.constant 0 : i32
    return %c0_i32, %c0_i32_0 : i32, i32
  }
  func.func @transform_2(%arg0: i32, %arg1: i32) -> (i32, i32) {
    %c0_i32 = arith.constant 0 : i32
    %c0_i32_0 = arith.constant 0 : i32
    %c0_i32_1 = arith.constant 0 : i32
    return %c0_i32, %c0_i32_0 : i32, i32
  }
  func.func @transform_3(%arg0: i32, %arg1: i32) -> (i32, i32) {
    %c0_i32 = arith.constant 0 : i32
    %c0_i32_0 = arith.constant 0 : i32
    %c0_i32_1 = arith.constant 0 : i32
    return %c0_i32, %c0_i32_0 : i32, i32
  }
  func.func @transform_4(%arg0: i32, %arg1: i32) -> (i32, i32, i32) {
    %c0_i32 = arith.constant 0 : i32
    %c0_i32_0 = arith.constant 0 : i32
    return %arg0, %c0_i32, %arg1 : i32, i32, i32
  }
  func.func @transform_5(%arg0: i32, %arg1: i32) -> (i32, i32, i32, i32, i32) {
    %c0_i32 = arith.constant 0 : i32
    %c0_i32_0 = arith.constant 0 : i32
    %c0_i32_1 = arith.constant 0 : i32
    %c0_i32_2 = arith.constant 0 : i32
    return %arg0, %arg1, %c0_i32, %c0_i32_0, %c0_i32_1 : i32, i32, i32, i32, i32
  }
  func.func @transform_6(%arg0: i32, %arg1: i32) -> (i32, i32, i32, i32) {
    %c0_i32 = arith.constant 0 : i32
    %c0_i32_0 = arith.constant 0 : i32
    %c0_i32_1 = arith.constant 0 : i32
    return %arg0, %arg1, %c0_i32, %c0_i32_0 : i32, i32, i32, i32
  }
}

module attributes {stable_mosaic.version = 11 : i64} {
  func.func @_bn_relu_conv3x3_kernel(%arg0: i32, %arg1: i32, %arg2: memref<1x32x512xbf16, #tpu.memory_space<vmem>>, %arg3: memref<1x1x1x32x32xbf16, #tpu.memory_space<vmem>>, %arg4: memref<1x1x1x32x32xbf16, #tpu.memory_space<vmem>>, %arg5: memref<32x1xf32, #tpu.memory_space<vmem>>, %arg6: memref<32x1xf32, #tpu.memory_space<vmem>>, %arg7: memref<8x288xbf16, #tpu.memory_space<vmem>>, %arg8: memref<2x16x1024xf32, #tpu.memory_space<any>>, %arg9: memref<1x8x512xf32, #tpu.memory_space<vmem>>) attributes {dimension_semantics = [#tpu.dimension_semantics<parallel>, #tpu.dimension_semantics<parallel>], iteration_bounds = array<i64: 2, 2>, scalar_prefetch = 0 : i64, scratch_operands = 0 : i64, tpu.core_type = #tpu.core_type<tc>, window_params = [{transform_indices = @transform_0, window_bounds = array<i64: 1, 32, 512>}, {transform_indices = @transform_1, window_bounds = array<i64: 1, 1, 1, 32, 32>}, {transform_indices = @transform_2, window_bounds = array<i64: 1, 1, 1, 32, 32>}, {pipeline_mode = #tpu.pipeline_mode<synchronous>, transform_indices = @transform_3, window_bounds = array<i64: 32, 1>}, {pipeline_mode = #tpu.pipeline_mode<synchronous>, transform_indices = @transform_4, window_bounds = array<i64: 32, 1>}, {pipeline_mode = #tpu.pipeline_mode<synchronous>, transform_indices = @transform_5, window_bounds = array<i64: 8, 288>}, {}, {transform_indices = @transform_7, window_bounds = array<i64: 1, 8, 512>}]} {
    %c0 = arith.constant 0 : index
    %c0_0 = arith.constant 0 : index
    %0 = vector.load %arg5[%c0, %c0_0] : memref<32x1xf32, #tpu.memory_space<vmem>>, vector<32x1xf32>
    %c0_1 = arith.constant 0 : index
    %c0_2 = arith.constant 0 : index
    %1 = vector.load %arg6[%c0_1, %c0_2] : memref<32x1xf32, #tpu.memory_space<vmem>>, vector<32x1xf32>
    %c0_3 = arith.constant 0 : index
    %c0_4 = arith.constant 0 : index
    %c0_5 = arith.constant 0 : index
    %2 = vector.load %arg2[%c0_3, %c0_4, %c0_5] : memref<1x32x512xbf16, #tpu.memory_space<vmem>>, vector<1x32x512xbf16>
    %3 = vector.shape_cast %2 : vector<1x32x512xbf16> to vector<32x512xbf16>
    %4 = arith.extf %3 : vector<32x512xbf16> to vector<32x512xf32>
    %5 = vector.broadcast %0 : vector<32x1xf32> to vector<32x512xf32>
    %6 = arith.mulf %4, %5 : vector<32x512xf32>
    %7 = vector.broadcast %1 : vector<32x1xf32> to vector<32x512xf32>
    %8 = arith.addf %6, %7 : vector<32x512xf32>
    %cst = arith.constant 0.000000e+00 : f32
    %9 = vector.broadcast %cst : f32 to vector<32x512xf32>
    %10 = arith.maximumf %8, %9 : vector<32x512xf32>
    %c0_6 = arith.constant 0 : index
    %c0_7 = arith.constant 0 : index
    %c0_8 = arith.constant 0 : index
    %c0_9 = arith.constant 0 : index
    %c0_10 = arith.constant 0 : index
    %11 = vector.load %arg3[%c0_6, %c0_7, %c0_8, %c0_9, %c0_10] : memref<1x1x1x32x32xbf16, #tpu.memory_space<vmem>>, vector<1x1x1x32x32xbf16>
    %12 = vector.shape_cast %11 : vector<1x1x1x32x32xbf16> to vector<32x32xbf16>
    %13 = arith.extf %12 : vector<32x32xbf16> to vector<32x32xf32>
    %14 = vector.broadcast %0 : vector<32x1xf32> to vector<32x32xf32>
    %15 = arith.mulf %13, %14 : vector<32x32xf32>
    %16 = vector.broadcast %1 : vector<32x1xf32> to vector<32x32xf32>
    %17 = arith.addf %15, %16 : vector<32x32xf32>
    %cst_11 = arith.constant 0.000000e+00 : f32
    %18 = vector.broadcast %cst_11 : f32 to vector<32x32xf32>
    %19 = arith.maximumf %17, %18 : vector<32x32xf32>
    %c0_12 = arith.constant 0 : index
    %c0_13 = arith.constant 0 : index
    %c0_14 = arith.constant 0 : index
    %c0_15 = arith.constant 0 : index
    %c0_16 = arith.constant 0 : index
    %20 = vector.load %arg4[%c0_12, %c0_13, %c0_14, %c0_15, %c0_16] : memref<1x1x1x32x32xbf16, #tpu.memory_space<vmem>>, vector<1x1x1x32x32xbf16>
    %21 = vector.shape_cast %20 : vector<1x1x1x32x32xbf16> to vector<32x32xbf16>
    %22 = arith.extf %21 : vector<32x32xbf16> to vector<32x32xf32>
    %23 = vector.broadcast %0 : vector<32x1xf32> to vector<32x32xf32>
    %24 = arith.mulf %22, %23 : vector<32x32xf32>
    %25 = vector.broadcast %1 : vector<32x1xf32> to vector<32x32xf32>
    %26 = arith.addf %24, %25 : vector<32x32xf32>
    %cst_17 = arith.constant 0.000000e+00 : f32
    %27 = vector.broadcast %cst_17 : f32 to vector<32x32xf32>
    %28 = arith.maximumf %26, %27 : vector<32x32xf32>
    %c0_i32 = arith.constant 0 : i32
    %29 = arith.cmpi sgt, %arg1, %c0_i32 : i32
    %cst_18 = arith.constant 0.000000e+00 : f32
    %30 = vector.broadcast %cst_18 : f32 to vector<32x32xf32>
    %31 = arith.select %29, %19, %30 : vector<32x32xf32>
    %c1_i32 = arith.constant 1 : i32
    %32 = arith.cmpi slt, %arg1, %c1_i32 : i32
    %cst_19 = arith.constant 0.000000e+00 : f32
    %33 = vector.broadcast %cst_19 : f32 to vector<32x32xf32>
    %34 = arith.select %32, %28, %33 : vector<32x32xf32>
    %cst_20 = arith.constant 0.000000e+00 : f32
    %35 = vector.broadcast %cst_20 : f32 to vector<32x1xf32>
    %36 = tpu.concatenate %35, %31, %10, %34, %35 in 1 : vector<32x1xf32>, vector<32x32xf32>, vector<32x512xf32>, vector<32x32xf32>, vector<32x1xf32> -> vector<32x578xf32>
    %37 = tpu.iota {dimensions = array<i32: 1>} : vector<1x512xi32>
    %c32_i32 = arith.constant 32 : i32
    %c0_i32_21 = arith.constant 0 : i32
    %38 = arith.cmpi eq, %c32_i32, %c0_i32_21 : i32
    %c1_i32_22 = arith.constant 1 : i32
    %39 = arith.select %38, %c1_i32_22, %c32_i32 : i32
    %40 = vector.broadcast %39 : i32 to vector<1x512xi32>
    %41 = arith.remsi %37, %40 : vector<1x512xi32>
    %c0_i32_23 = arith.constant 0 : i32
    %42 = vector.broadcast %c0_i32_23 : i32 to vector<1x512xi32>
    %43 = arith.cmpi ne, %41, %42 : vector<1x512xi32>
    %c0_i32_24 = arith.constant 0 : i32
    %44 = vector.broadcast %c0_i32_24 : i32 to vector<1x512xi32>
    %45 = arith.cmpi slt, %41, %44 : vector<1x512xi32>
    %c0_i32_25 = arith.constant 0 : i32
    %46 = arith.cmpi slt, %39, %c0_i32_25 : i32
    %47 = vector.broadcast %46 : i1 to vector<1x512xi1>
    %48 = vector.broadcast %47 : vector<1x512xi1> to vector<1x512xi1>
    %49 = arith.xori %45, %48 : vector<1x512xi1>
    %50 = arith.andi %49, %43 : vector<1x512xi1>
    %51 = vector.broadcast %39 : i32 to vector<1x512xi32>
    %52 = arith.addi %41, %51 : vector<1x512xi32>
    %53 = arith.select %50, %52, %41 : vector<1x512xi1>, vector<1x512xi32>
    %c0_i32_26 = arith.constant 0 : i32
    %54 = vector.broadcast %c0_i32_26 : i32 to vector<1x512xi32>
    %55 = arith.cmpi sgt, %53, %54 : vector<1x512xi32>
    %c31_i32 = arith.constant 31 : i32
    %56 = vector.broadcast %c31_i32 : i32 to vector<1x512xi32>
    %57 = arith.cmpi slt, %53, %56 : vector<1x512xi32>
    %c0_27 = arith.constant 0 : index
    %c0_28 = arith.constant 0 : index
    %58 = vector.load %arg7[%c0_27, %c0_28] : memref<8x288xbf16, #tpu.memory_space<vmem>>, vector<8x288xbf16>
    %cst_29 = arith.constant 0.000000e+00 : f32
    %59 = vector.broadcast %cst_29 : f32 to vector<8x512xf32>
    %60 = vector.extract_strided_slice %36 {offsets = [0, 0], sizes = [32, 512], strides = [1, 1]} : vector<32x578xf32> to vector<32x512xf32>
    %cst_30 = arith.constant 0.000000e+00 : f32
    %61 = vector.shape_cast %55 : vector<1x512xi1> to vector<1x512xi1>
    %62 = vector.broadcast %61 : vector<1x512xi1> to vector<32x512xi1>
    %63 = vector.broadcast %cst_30 : f32 to vector<32x512xf32>
    %64 = arith.select %62, %60, %63 : vector<32x512xi1>, vector<32x512xf32>
    %65 = vector.extract_strided_slice %58 {offsets = [0, 0], sizes = [8, 32], strides = [1, 1]} : vector<8x288xbf16> to vector<8x32xbf16>
    %66 = arith.truncf %64 : vector<32x512xf32> to vector<32x512xbf16>
    %cst_31 = arith.constant dense<0.000000e+00> : vector<8x512xf32>
    %67 = tpu.matmul %65, %66, %cst_31 {dimension_numbers = #tpu.dot_dimension_numbers<[1], [0], [0], [1], [0, 0, 1, 1], [], []>} : vector<8x32xbf16>, vector<32x512xbf16>, vector<8x512xf32> -> vector<8x512xf32>
    %68 = arith.addf %59, %67 : vector<8x512xf32>
    %69 = vector.extract_strided_slice %36 {offsets = [0, 1], sizes = [32, 512], strides = [1, 1]} : vector<32x578xf32> to vector<32x512xf32>
    %70 = vector.extract_strided_slice %58 {offsets = [0, 32], sizes = [8, 32], strides = [1, 1]} : vector<8x288xbf16> to vector<8x32xbf16>
    %71 = arith.truncf %69 : vector<32x512xf32> to vector<32x512xbf16>
    %cst_32 = arith.constant dense<0.000000e+00> : vector<8x512xf32>
    %72 = tpu.matmul %70, %71, %cst_32 {dimension_numbers = #tpu.dot_dimension_numbers<[1], [0], [0], [1], [0, 0, 1, 1], [], []>} : vector<8x32xbf16>, vector<32x512xbf16>, vector<8x512xf32> -> vector<8x512xf32>
    %73 = arith.addf %68, %72 : vector<8x512xf32>
    %74 = vector.extract_strided_slice %36 {offsets = [0, 2], sizes = [32, 512], strides = [1, 1]} : vector<32x578xf32> to vector<32x512xf32>
    %cst_33 = arith.constant 0.000000e+00 : f32
    %75 = vector.shape_cast %57 : vector<1x512xi1> to vector<1x512xi1>
    %76 = vector.broadcast %75 : vector<1x512xi1> to vector<32x512xi1>
    %77 = vector.broadcast %cst_33 : f32 to vector<32x512xf32>
    %78 = arith.select %76, %74, %77 : vector<32x512xi1>, vector<32x512xf32>
    %79 = vector.extract_strided_slice %58 {offsets = [0, 64], sizes = [8, 32], strides = [1, 1]} : vector<8x288xbf16> to vector<8x32xbf16>
    %80 = arith.truncf %78 : vector<32x512xf32> to vector<32x512xbf16>
    %cst_34 = arith.constant dense<0.000000e+00> : vector<8x512xf32>
    %81 = tpu.matmul %79, %80, %cst_34 {dimension_numbers = #tpu.dot_dimension_numbers<[1], [0], [0], [1], [0, 0, 1, 1], [], []>} : vector<8x32xbf16>, vector<32x512xbf16>, vector<8x512xf32> -> vector<8x512xf32>
    %82 = arith.addf %73, %81 : vector<8x512xf32>
    %83 = vector.extract_strided_slice %36 {offsets = [0, 32], sizes = [32, 512], strides = [1, 1]} : vector<32x578xf32> to vector<32x512xf32>
    %cst_35 = arith.constant 0.000000e+00 : f32
    %84 = vector.shape_cast %55 : vector<1x512xi1> to vector<1x512xi1>
    %85 = vector.broadcast %84 : vector<1x512xi1> to vector<32x512xi1>
    %86 = vector.broadcast %cst_35 : f32 to vector<32x512xf32>
    %87 = arith.select %85, %83, %86 : vector<32x512xi1>, vector<32x512xf32>
    %88 = vector.extract_strided_slice %58 {offsets = [0, 96], sizes = [8, 32], strides = [1, 1]} : vector<8x288xbf16> to vector<8x32xbf16>
    %89 = arith.truncf %87 : vector<32x512xf32> to vector<32x512xbf16>
    %cst_36 = arith.constant dense<0.000000e+00> : vector<8x512xf32>
    %90 = tpu.matmul %88, %89, %cst_36 {dimension_numbers = #tpu.dot_dimension_numbers<[1], [0], [0], [1], [0, 0, 1, 1], [], []>} : vector<8x32xbf16>, vector<32x512xbf16>, vector<8x512xf32> -> vector<8x512xf32>
    %91 = arith.addf %82, %90 : vector<8x512xf32>
    %92 = vector.extract_strided_slice %36 {offsets = [0, 33], sizes = [32, 512], strides = [1, 1]} : vector<32x578xf32> to vector<32x512xf32>
    %93 = vector.extract_strided_slice %58 {offsets = [0, 128], sizes = [8, 32], strides = [1, 1]} : vector<8x288xbf16> to vector<8x32xbf16>
    %94 = arith.truncf %92 : vector<32x512xf32> to vector<32x512xbf16>
    %cst_37 = arith.constant dense<0.000000e+00> : vector<8x512xf32>
    %95 = tpu.matmul %93, %94, %cst_37 {dimension_numbers = #tpu.dot_dimension_numbers<[1], [0], [0], [1], [0, 0, 1, 1], [], []>} : vector<8x32xbf16>, vector<32x512xbf16>, vector<8x512xf32> -> vector<8x512xf32>
    %96 = arith.addf %91, %95 : vector<8x512xf32>
    %97 = vector.extract_strided_slice %36 {offsets = [0, 34], sizes = [32, 512], strides = [1, 1]} : vector<32x578xf32> to vector<32x512xf32>
    %cst_38 = arith.constant 0.000000e+00 : f32
    %98 = vector.shape_cast %57 : vector<1x512xi1> to vector<1x512xi1>
    %99 = vector.broadcast %98 : vector<1x512xi1> to vector<32x512xi1>
    %100 = vector.broadcast %cst_38 : f32 to vector<32x512xf32>
    %101 = arith.select %99, %97, %100 : vector<32x512xi1>, vector<32x512xf32>
    %102 = vector.extract_strided_slice %58 {offsets = [0, 160], sizes = [8, 32], strides = [1, 1]} : vector<8x288xbf16> to vector<8x32xbf16>
    %103 = arith.truncf %101 : vector<32x512xf32> to vector<32x512xbf16>
    %cst_39 = arith.constant dense<0.000000e+00> : vector<8x512xf32>
    %104 = tpu.matmul %102, %103, %cst_39 {dimension_numbers = #tpu.dot_dimension_numbers<[1], [0], [0], [1], [0, 0, 1, 1], [], []>} : vector<8x32xbf16>, vector<32x512xbf16>, vector<8x512xf32> -> vector<8x512xf32>
    %105 = arith.addf %96, %104 : vector<8x512xf32>
    %106 = vector.extract_strided_slice %36 {offsets = [0, 64], sizes = [32, 512], strides = [1, 1]} : vector<32x578xf32> to vector<32x512xf32>
    %cst_40 = arith.constant 0.000000e+00 : f32
    %107 = vector.shape_cast %55 : vector<1x512xi1> to vector<1x512xi1>
    %108 = vector.broadcast %107 : vector<1x512xi1> to vector<32x512xi1>
    %109 = vector.broadcast %cst_40 : f32 to vector<32x512xf32>
    %110 = arith.select %108, %106, %109 : vector<32x512xi1>, vector<32x512xf32>
    %111 = vector.extract_strided_slice %58 {offsets = [0, 192], sizes = [8, 32], strides = [1, 1]} : vector<8x288xbf16> to vector<8x32xbf16>
    %112 = arith.truncf %110 : vector<32x512xf32> to vector<32x512xbf16>
    %cst_41 = arith.constant dense<0.000000e+00> : vector<8x512xf32>
    %113 = tpu.matmul %111, %112, %cst_41 {dimension_numbers = #tpu.dot_dimension_numbers<[1], [0], [0], [1], [0, 0, 1, 1], [], []>} : vector<8x32xbf16>, vector<32x512xbf16>, vector<8x512xf32> -> vector<8x512xf32>
    %114 = arith.addf %105, %113 : vector<8x512xf32>
    %115 = vector.extract_strided_slice %36 {offsets = [0, 65], sizes = [32, 512], strides = [1, 1]} : vector<32x578xf32> to vector<32x512xf32>
    %116 = vector.extract_strided_slice %58 {offsets = [0, 224], sizes = [8, 32], strides = [1, 1]} : vector<8x288xbf16> to vector<8x32xbf16>
    %117 = arith.truncf %115 : vector<32x512xf32> to vector<32x512xbf16>
    %cst_42 = arith.constant dense<0.000000e+00> : vector<8x512xf32>
    %118 = tpu.matmul %116, %117, %cst_42 {dimension_numbers = #tpu.dot_dimension_numbers<[1], [0], [0], [1], [0, 0, 1, 1], [], []>} : vector<8x32xbf16>, vector<32x512xbf16>, vector<8x512xf32> -> vector<8x512xf32>
    %119 = arith.addf %114, %118 : vector<8x512xf32>
    %120 = vector.extract_strided_slice %36 {offsets = [0, 66], sizes = [32, 512], strides = [1, 1]} : vector<32x578xf32> to vector<32x512xf32>
    %cst_43 = arith.constant 0.000000e+00 : f32
    %121 = vector.shape_cast %57 : vector<1x512xi1> to vector<1x512xi1>
    %122 = vector.broadcast %121 : vector<1x512xi1> to vector<32x512xi1>
    %123 = vector.broadcast %cst_43 : f32 to vector<32x512xf32>
    %124 = arith.select %122, %120, %123 : vector<32x512xi1>, vector<32x512xf32>
    %125 = vector.extract_strided_slice %58 {offsets = [0, 256], sizes = [8, 32], strides = [1, 1]} : vector<8x288xbf16> to vector<8x32xbf16>
    %126 = arith.truncf %124 : vector<32x512xf32> to vector<32x512xbf16>
    %cst_44 = arith.constant dense<0.000000e+00> : vector<8x512xf32>
    %127 = tpu.matmul %125, %126, %cst_44 {dimension_numbers = #tpu.dot_dimension_numbers<[1], [0], [0], [1], [0, 0, 1, 1], [], []>} : vector<8x32xbf16>, vector<32x512xbf16>, vector<8x512xf32> -> vector<8x512xf32>
    %128 = arith.addf %119, %127 : vector<8x512xf32>
    %c0_45 = arith.constant 0 : index
    %c0_46 = arith.constant 0 : index
    %c0_47 = arith.constant 0 : index
    %129 = vector.load %arg9[%c0_45, %c0_46, %c0_47] : memref<1x8x512xf32, #tpu.memory_space<vmem>>, vector<1x8x512xf32>
    %130 = vector.shape_cast %129 : vector<1x8x512xf32> to vector<8x512xf32>
    %131 = vector.shape_cast %128 : vector<8x512xf32> to vector<1x8x512xf32>
    tpu.vector_store %arg9[%c0_45, %c0_46, %c0_47], %131 {strides = array<i32>} : memref<1x8x512xf32, #tpu.memory_space<vmem>>, vector<1x8x512xf32>,
    return
  }
  func.func @transform_0(%arg0: i32, %arg1: i32) -> (i32, i32, i32) {
    %c0_i32 = arith.constant 0 : i32
    %c0_i32_0 = arith.constant 0 : i32
    return %arg0, %c0_i32, %arg1 : i32, i32, i32
  }
  func.func @transform_1(%arg0: i32, %arg1: i32) -> (i32, i32, i32, i32, i32) {
    %c1_i32 = arith.constant 1 : i32
    %0 = arith.subi %arg1, %c1_i32 : i32
    %c0_i32 = arith.constant 0 : i32
    %1 = arith.maxsi %0, %c0_i32 : i32
    %c1_i32_0 = arith.constant 1 : i32
    %c0_i32_1 = arith.constant 0 : i32
    %c0_i32_2 = arith.constant 0 : i32
    %c0_i32_3 = arith.constant 0 : i32
    return %arg0, %1, %c1_i32_0, %c0_i32_1, %c0_i32_2 : i32, i32, i32, i32, i32
  }
  func.func @transform_2(%arg0: i32, %arg1: i32) -> (i32, i32, i32, i32, i32) {
    %c1_i32 = arith.constant 1 : i32
    %0 = arith.addi %arg1, %c1_i32 : i32
    %c1_i32_0 = arith.constant 1 : i32
    %1 = arith.minsi %0, %c1_i32_0 : i32
    %c0_i32 = arith.constant 0 : i32
    %c0_i32_1 = arith.constant 0 : i32
    %c0_i32_2 = arith.constant 0 : i32
    %c0_i32_3 = arith.constant 0 : i32
    return %arg0, %1, %c0_i32, %c0_i32_1, %c0_i32_2 : i32, i32, i32, i32, i32
  }
  func.func @transform_3(%arg0: i32, %arg1: i32) -> (i32, i32) {
    %c0_i32 = arith.constant 0 : i32
    %c0_i32_0 = arith.constant 0 : i32
    %c0_i32_1 = arith.constant 0 : i32
    return %c0_i32, %c0_i32_0 : i32, i32
  }
  func.func @transform_4(%arg0: i32, %arg1: i32) -> (i32, i32) {
    %c0_i32 = arith.constant 0 : i32
    %c0_i32_0 = arith.constant 0 : i32
    %c0_i32_1 = arith.constant 0 : i32
    return %c0_i32, %c0_i32_0 : i32, i32
  }
  func.func @transform_5(%arg0: i32, %arg1: i32) -> (i32, i32) {
    %c0_i32 = arith.constant 0 : i32
    %c0_i32_0 = arith.constant 0 : i32
    %c0_i32_1 = arith.constant 0 : i32
    return %c0_i32, %c0_i32_0 : i32, i32
  }
  func.func @transform_7(%arg0: i32, %arg1: i32) -> (i32, i32, i32) {
    %c0_i32 = arith.constant 0 : i32
    %c0_i32_0 = arith.constant 0 : i32
    return %arg0, %c0_i32, %arg1 : i32, i32, i32
  }
}

</mosaic_0001>

<llo_original>
// kernel: bottleneck_block.2
$region0: #{bottleneck_block.2}
  #allocation0 [shape = 'u32[]', space=smem, size = 0x4, offset = 0x4, fixed_abs, tag = 'smem constant byte address 0x4 - core index']
  #allocation1 [shape = 'u32[144,128]{1,0:T(1,128)}', space=vmem, size = 0x12000, scoped, tag = 'internal scratch']
  %s0 = inlined_call_operand.vmem [shape: f32[2,8,1024], index: 0, kind: input, shape index: {}]
  %s1 = inlined_call_operand.vmem [shape: f32[8,1], index: 1, kind: input, shape index: {}]
  %s2 = inlined_call_operand.vmem [shape: f32[8,1], index: 2, kind: input, shape index: {}]
  %s3 = inlined_call_operand.vmem [shape: bf16[32,8], index: 3, kind: input, shape index: {}]
  %s4 = inlined_call_operand.vmem [shape: bf16[2,32,1024], index: 4, kind: output, shape index: {0}]
  %s5 = inlined_call_operand.vmem [shape: bf16[2,2,2,32,32], index: 5, kind: output, shape index: {1}]
  %s6 = inlined_call_operand.vmem [shape: f32[2,2,2,32], index: 6, kind: output, shape index: {2}]
  %7 = xla_tuple %s4, %s5, %s6
  %s8 = sld [smem:[#allocation0]]
  $region84: #{bottleneck_block.2} parent=0
    _
  %s10 = ssub.s32 1, %s8
  %s11 = scalar_select 0, %s10, %s8
  $region1: #{bottleneck_block.2} parent=0
    #allocation2 [shape = 'u8[65536]{0}', space=vmem, size = 0x10000, scoped, tag = 'output window, operand 0']
    loop: start=0, step=1, limit=6
    $region2: #{bottleneck_block.2} parent=1 // loop_pre_header
      _
    $region3: #{bottleneck_block.2} parent=1 // loop_header
      %s13 = sphi 0, %s17
      %p14 = scmp.ge.s32.totalorder %s13, 6
      %s20 = sphi 0, %s32
      %s21 = sphi 0, %s28
      %s22 = sphi 0, %s20
      %s23 = sphi 0, %s21
      %s24 = sphi 0, %s22
      %s25 = sphi 0, %s23
      %s37 = sphi 0, %s39
      %s40 = sphi 0, %s37
      %s41 = sphi 0, %s40
      %s57 = sphi 0, %s41
      %s61 = sphi 0, %s61
      %s63 = sphi 0, %s61
      %s64 = sphi 0, %s63
      %s78 = sphi 0, %s64
      %s82 = sphi 0, %s82
      %s84 = sphi 0, %s82
      %s85 = sphi 0, %s84
      %s99 = sphi 0, %s85
      %s103 = sphi 0, %s103
      %s105 = sphi 0, %s103
      %s106 = sphi 0, %s105
      %s120 = sphi 0, %s106
      %s128 = sphi 0, %s130
      %s131 = sphi 0, %s128
      %s132 = sphi 0, %s131
      %s148 = sphi 0, %s132
      %s156 = sphi 0, %s158
      %s159 = sphi 0, %s156
      %s160 = sphi 0, %s159
      %s176 = sphi 0, %s160
      %s184 = sphi 0, %s186
      %s187 = sphi 0, %s184
      %s188 = sphi 0, %s187
      %s204 = sphi 0, %s188
    $region4: #{bottleneck_block.2} parent=1 // loop_header_branch
      %16 = sbr.rel (%p14) target = $region8
    $region5: #{bottleneck_block.2} parent=1 // loop_body
      %s18 = ssub.s32 %s13, 1
      %s19 = ssub.s32 %s13, 2
      %s26 = sadd.s32 1, %s21
      %p27 = scmp.ge.s32.totalorder %s26, 2
      %s28 = scalar_select %p27, 0, %s26
      %s29 = sadd.s32 1, %s20
      %s30 = scalar_select %p27, %s29, %s20
      %p31 = scmp.ge.s32.totalorder %s30, 2
      %s32 = scalar_select %p31, 0, %s30
      %s33 = ssub.s32 %s20, %s32
      %s34 = ssub.s32 %s21, %s28
      %s35 = sor.u32 %s33, %s34
      %p36 = scmp.eq.s32.totalorder %s35, 0
      %s38 = sadd.s32 %s37, 1
      %s39 = scalar_select %p36, %s37, %s38
      %p42 = pneg %p36
      %p43 = scmp.eq.s32.totalorder %s13, 3
      %p44 = por %p42, %p43
      %p45 = scmp.ne.s32.totalorder %s37, %s40
      %p46 = scmp.eq.s32.totalorder %s13, 0
      %p47 = por %p45, %p46
      %p48 = scmp.ne.s32.totalorder %s37, %s40
      %p49 = scmp.eq.s32.totalorder %s18, 3
      %p50 = por %p48, %p49
      %p51 = scmp.ne.s32.totalorder %s40, %s41
      %p52 = scmp.eq.s32.totalorder %s18, 0
      %p53 = por %p51, %p52
      %p54 = scmp.ne.s32.totalorder %s40, %s41
      %p55 = scmp.eq.s32.totalorder %s19, 3
      %p56 = por %p54, %p55
      %p58 = scmp.ne.s32.totalorder %s41, %s57
      %p59 = scmp.eq.s32.totalorder %s19, 0
      %p60 = por %p58, %p59
      %s62 = sadd.s32 %s61, 1
      %p65 = scmp.eq.s32.totalorder %s13, 3
      %p66 = scmp.ne.s32.totalorder %s61, %s63
      %p67 = scmp.eq.s32.totalorder %s13, 0
      %p68 = por %p66, %p67
      %p69 = scmp.ne.s32.totalorder %s61, %s63
      %p70 = scmp.eq.s32.totalorder %s18, 3
      %p71 = por %p69, %p70
      %p72 = scmp.ne.s32.totalorder %s63, %s64
      %p73 = scmp.eq.s32.totalorder %s18, 0
      %p74 = por %p72, %p73
      %p75 = scmp.ne.s32.totalorder %s63, %s64
      %p76 = scmp.eq.s32.totalorder %s19, 3
      %p77 = por %p75, %p76
      %p79 = scmp.ne.s32.totalorder %s64, %s78
      %p80 = scmp.eq.s32.totalorder %s19, 0
      %p81 = por %p79, %p80
      %s83 = sadd.s32 %s82, 1
      %p86 = scmp.eq.s32.totalorder %s13, 3
      %p87 = scmp.ne.s32.totalorder %s82, %s84
      %p88 = scmp.eq.s32.totalorder %s13, 0
      %p89 = por %p87, %p88
      %p90 = scmp.ne.s32.totalorder %s82, %s84
      %p91 = scmp.eq.s32.totalorder %s18, 3
      %p92 = por %p90, %p91
      %p93 = scmp.ne.s32.totalorder %s84, %s85
      %p94 = scmp.eq.s32.totalorder %s18, 0
      %p95 = por %p93, %p94
      %p96 = scmp.ne.s32.totalorder %s84, %s85
      %p97 = scmp.eq.s32.totalorder %s19, 3
      %p98 = por %p96, %p97
      %p100 = scmp.ne.s32.totalorder %s85, %s99
      %p101 = scmp.eq.s32.totalorder %s19, 0
      %p102 = por %p100, %p101
      %s104 = sadd.s32 %s103, 1
      %p107 = scmp.eq.s32.totalorder %s13, 3
      %p108 = scmp.ne.s32.totalorder %s103, %s105
      %p109 = scmp.eq.s32.totalorder %s13, 0
      %p110 = por %p108, %p109
      %p111 = scmp.ne.s32.totalorder %s103, %s105
      %p112 = scmp.eq.s32.totalorder %s18, 3
      %p113 = por %p111, %p112
      %p114 = scmp.ne.s32.totalorder %s105, %s106
      %p115 = scmp.eq.s32.totalorder %s18, 0
      %p116 = por %p114, %p115
      %p117 = scmp.ne.s32.totalorder %s105, %s106
      %p118 = scmp.eq.s32.totalorder %s19, 3
      %p119 = por %p117, %p118
      %p121 = scmp.ne.s32.totalorder %s106, %s120
      %p122 = scmp.eq.s32.totalorder %s19, 0
      %p123 = por %p121, %p122
      %s124 = ssub.s32 %s20, %s32
      %s125 = ssub.s32 %s21, %s28
      %s126 = sor.u32 %s124, %s125
      %p127 = scmp.eq.s32.totalorder %s126, 0
      %s129 = sadd.s32 %s128, 1
      %s130 = scalar_select %p127, %s128, %s129
      %p133 = pneg %p127
      %p134 = scmp.eq.s32.totalorder %s13, 3
      %p135 = por %p133, %p134
      %p136 = scmp.ne.s32.totalorder %s128, %s131
      %p137 = scmp.eq.s32.totalorder %s13, 0
      %p138 = por %p136, %p137
      %p139 = scmp.ne.s32.totalorder %s128, %s131
      %p140 = scmp.eq.s32.totalorder %s18, 3
      %p141 = por %p139, %p140
      %p142 = scmp.ne.s32.totalorder %s131, %s132
      %p143 = scmp.eq.s32.totalorder %s18, 0
      %p144 = por %p142, %p143
      %p145 = scmp.ne.s32.totalorder %s131, %s132
      %p146 = scmp.eq.s32.totalorder %s19, 3
      %p147 = por %p145, %p146
      %p149 = scmp.ne.s32.totalorder %s132, %s148
      %p150 = scmp.eq.s32.totalorder %s19, 0
      %p151 = por %p149, %p150
      %s152 = ssub.s32 %s20, %s32
      %s153 = ssub.s32 %s21, %s28
      %s154 = sor.u32 %s152, %s153
      %p155 = scmp.eq.s32.totalorder %s154, 0
      %s157 = sadd.s32 %s156, 1
      %s158 = scalar_select %p155, %s156, %s157
      %p161 = pneg %p155
      %p162 = scmp.eq.s32.totalorder %s13, 3
      %p163 = por %p161, %p162
      %p164 = scmp.ne.s32.totalorder %s156, %s159
      %p165 = scmp.eq.s32.totalorder %s13, 0
      %p166 = por %p164, %p165
      %p167 = scmp.ne.s32.totalorder %s156, %s159
      %p168 = scmp.eq.s32.totalorder %s18, 3
      %p169 = por %p167, %p168
      %p170 = scmp.ne.s32.totalorder %s159, %s160
      %p171 = scmp.eq.s32.totalorder %s18, 0
      %p172 = por %p170, %p171
      %p173 = scmp.ne.s32.totalorder %s159, %s160
      %p174 = scmp.eq.s32.totalorder %s19, 3
      %p175 = por %p173, %p174
      %p177 = scmp.ne.s32.totalorder %s160, %s176
      %p178 = scmp.eq.s32.totalorder %s19, 0
      %p179 = por %p177, %p178
      %s180 = ssub.s32 %s20, %s32
      %s181 = ssub.s32 %s21, %s28
      %s182 = sor.u32 %s180, %s181
      %p183 = scmp.eq.s32.totalorder %s182, 0
      %s185 = sadd.s32 %s184, 1
      %s186 = scalar_select %p183, %s184, %s185
      %p189 = pneg %p183
      %p190 = scmp.eq.s32.totalorder %s13, 3
      %p191 = por %p189, %p190
      %p192 = scmp.ne.s32.totalorder %s184, %s187
      %p193 = scmp.eq.s32.totalorder %s13, 0
      %p194 = por %p192, %p193
      %p195 = scmp.ne.s32.totalorder %s184, %s187
      %p196 = scmp.eq.s32.totalorder %s18, 3
      %p197 = por %p195, %p196
      %p198 = scmp.ne.s32.totalorder %s187, %s188
      %p199 = scmp.eq.s32.totalorder %s18, 0
      %p200 = por %p198, %p199
      %p201 = scmp.ne.s32.totalorder %s187, %s188
      %p202 = scmp.eq.s32.totalorder %s19, 3
      %p203 = por %p201, %p202
      %p205 = scmp.ne.s32.totalorder %s188, %s204
      %p206 = scmp.eq.s32.totalorder %s19, 0
      %p207 = por %p205, %p206
      %p208 = scmp.le.s32.totalorder 1, %s13
      %p209 = scmp.lt.s32.totalorder %s13, 5
      %p210 = pnand %p208, %p209
      %p211 = pneg %p210
      // Predicated region
      $region9: #{bottleneck_block.2} parent=5 // pred_check
        _
      $region10: #{bottleneck_block.2} parent=5 // pred_check_branch
        %213 = sbr.rel (%p210) target = $region12
      $region11: #{bottleneck_block.2} parent=5 // pred_region
        %s214 = ssub.s32 %s13, 1
        // Predicated region
        $region13: #{bottleneck_block.2} parent=11 // pred_check
          %p215 = pneg %p74
        $region14: #{bottleneck_block.2} parent=11 // pred_check_branch
          %217 = sbr.rel (%p215) target = $region16
        $region15: #{bottleneck_block.2} parent=11 // pred_region
          _
        $region16: #{bottleneck_block.2} parent=11 // pred_fallthru
          _
        // Predicated region
        $region17: #{bottleneck_block.2} parent=11 // pred_check
          %p218 = pneg %p95
        $region18: #{bottleneck_block.2} parent=11 // pred_check_branch
          %220 = sbr.rel (%p218) target = $region20
        $region19: #{bottleneck_block.2} parent=11 // pred_region
          _
        $region20: #{bottleneck_block.2} parent=11 // pred_fallthru
          _
        // Predicated region
        $region21: #{bottleneck_block.2} parent=11 // pred_check
          %p221 = pneg %p116
        $region22: #{bottleneck_block.2} parent=11 // pred_check_branch
          %223 = sbr.rel (%p221) target = $region24
        $region23: #{bottleneck_block.2} parent=11 // pred_region
          _
        $region24: #{bottleneck_block.2} parent=11 // pred_fallthru
          _
      $region12: #{bottleneck_block.2} parent=5 // pred_fallthru
        _
      %p224 = scmp.lt.s32.totalorder %s13, 4
      // Predicated region
      $region25: #{bottleneck_block.2} parent=5 // pred_check
        %p225 = pneg %p224
      $region26: #{bottleneck_block.2} parent=5 // pred_check_branch
        %227 = sbr.rel (%p225) target = $region28
      $region27: #{bottleneck_block.2} parent=5 // pred_region
        // Predicated region
        $region29: #{bottleneck_block.2} parent=27 // pred_check
          %p228 = pneg %p47
        $region30: #{bottleneck_block.2} parent=27 // pred_check_branch
          %230 = sbr.rel (%p228) target = $region32
        $region31: #{bottleneck_block.2} parent=27 // pred_region
          %s231 = smul.u32 4, %s21
          %p232 = scmp.lt.s32.totalorder %s20, 1
          %s233 = scalar_select %p232, %s20, 1
          %p234 = scmp.lt.s32.totalorder %s231, 7
          %s235 = scalar_select %p234, %s231, 7
          %s236 = smul.addr %s233, 8
          %s237 = sadd.s32 %s235, %s236
          %s238 = smul.addr %s237, 8
          %s239 = scalar_lea.vmem %s0, %s238
          %s240 = smul.u32 4, %s21
        $region32: #{bottleneck_block.2} parent=27 // pred_fallthru
          _
      $region28: #{bottleneck_block.2} parent=5 // pred_fallthru
        _
      %p241 = scmp.le.s32.totalorder 1, %s13
      %p242 = scmp.lt.s32.totalorder %s13, 5
      %p243 = pnand %p241, %p242
      %p244 = pneg %p243
      // Predicated region
      $region33: #{bottleneck_block.2} parent=5 // pred_check
        _
      $region34: #{bottleneck_block.2} parent=5 // pred_check_branch
        %246 = sbr.rel (%p243) target = $region36
      $region35: #{bottleneck_block.2} parent=5 // pred_region
        %s247 = ssub.s32 %s13, 1
        %s248 = smul.u32 4, %s23
        %p249 = scmp.lt.s32.totalorder %s22, 1
        %s250 = scalar_select %p249, %s22, 1
        %p251 = scmp.lt.s32.totalorder %s248, 7
        %s252 = scalar_select %p251, %s248, 7
        %s253 = smul.addr %s250, 8
        %s254 = sadd.s32 %s252, %s253
        %s255 = smul.addr %s254, 8
        %s256 = scalar_lea.vmem %s0, %s255
        %p257 = pneg %p53
        %p258 = pneg %p50
        %p259 = pneg %p74
        %p260 = pneg %p71
        %p261 = pneg %p95
        %p262 = pneg %p92
        %p263 = pneg %p116
        %p264 = pneg %p113
        %p265 = pneg %p144
        %p266 = pneg %p141
        %s267 = sand.u32 %s131, 1
        %s268 = sand.u32 %s131, 1
        %s269 = smul.addr %s268, 64
        %s270 = scalar_lea.vmem [#allocation2], %s269
        %p271 = pneg %p172
        %p272 = pneg %p169
        %p273 = scmp.lt.s32.totalorder %s22, 1
        %s274 = scalar_select %p273, %s22, 1
        %p275 = scmp.lt.s32.totalorder %s23, 1
        %s276 = scalar_select %p275, %s23, 1
        %s277 = smul.addr %s276, 8
        %s278 = smul.addr %s274, 16
        %s279 = sadd.s32 %s277, %s278
        %s280 = smul.addr %s279, 4
        %s281 = scalar_lea.vmem %s5, %s280
        %p282 = pneg %p200
        %p283 = pneg %p197
        %p284 = scmp.lt.s32.totalorder %s22, 1
        %s285 = scalar_select %p284, %s22, 1
        %p286 = scmp.lt.s32.totalorder %s23, 1
        %s287 = scalar_select %p286, %s23, 1
        %s288 = smul.addr %s285, 2
        %s289 = sadd.s32 %s287, %s288
        %s290 = smul.addr %s289, 2
        %s291 = scalar_lea.vmem %s6, %s290
        %s292 = smul.u32 4, %s23
        %p293 = scmp.lt.s32.totalorder %s22, 1
        %s294 = scalar_select %p293, %s22, 1
        %p295 = scmp.lt.s32.totalorder %s292, 7
        %s296 = scalar_select %p295, %s292, 7
        %s297 = smul.addr %s294, 8
        %s298 = sadd.s32 %s296, %s297
        %s299 = smul.addr %s298, 8
        %s300 = scalar_lea.vmem %s0, %s299
        %s301 = smul.u32 4, %s23
        %s302 = smul.u32 4, %s23
        %p303 = scmp.lt.s32.totalorder %s22, 1
        %s304 = scalar_select %p303, %s22, 1
        %p305 = scmp.lt.s32.totalorder %s23, 1
        %s306 = scalar_select %p305, %s23, 1
        %s307 = smul.addr %s306, 8
        %s308 = smul.addr %s304, 16
        %s309 = sadd.s32 %s307, %s308
        %s310 = smul.addr %s309, 4
        %s311 = scalar_lea.vmem %s5, %s310
        %p312 = scmp.lt.s32.totalorder %s22, 1
        %s313 = scalar_select %p312, %s22, 1
        %p314 = scmp.lt.s32.totalorder %s23, 1
        %s315 = scalar_select %p314, %s23, 1
        %s316 = smul.addr %s313, 2
        %s317 = sadd.s32 %s315, %s316
        %s318 = smul.addr %s317, 2
        %s319 = scalar_lea.vmem %s6, %s318
        %v321 = vld [vmem:[%s300] sm:$0xff]
        %v322 = vld [vmem:[%s300 + $0x8] sm:$0xff]
        %v323 = vld [vmem:[%s300 + $0x10] sm:$0xff]
        %v324 = vld [vmem:[%s300 + $0x18] sm:$0xff]
        %v325 = vld [vmem:[%s1] sm:$0xff]
        %327 = vset.pattern.permute.xlu0 0
        %328 = vperm.xlu0 %327, %v325
        %v329 = vpop.permute.xlu0 %328
        %v331 = vmul.f32 %v321, %v329
        %v332 = vmul.f32 %v322, %v329
        %v333 = vmul.f32 %v323, %v329
        %v334 = vmul.f32 %v324, %v329
        %v335 = vld [vmem:[%s2] sm:$0xff]
        %337 = vset.pattern.permute.xlu0 0
        %338 = vperm.xlu0 %337, %v335
        %v339 = vpop.permute.xlu0 %338
        %v341 = vadd.f32 %v331, %v339
        %v342 = vadd.f32 %v332, %v339
        %v343 = vadd.f32 %v333, %v339
        %v344 = vadd.f32 %v334, %v339
        %v345 = vmax.f32 %v341, 0.0
        %v346 = vmax.f32 %v342, 0.0
        %v347 = vmax.f32 %v343, 0.0
        %v348 = vmax.f32 %v344, 0.0
        %v349 = vld [vmem:[%s3] sm:$0xf]
        %v350 = vld [vmem:[%s3 + $0x4] sm:$0xf]
        %v351 = vld [vmem:[%s3 + $0x8] sm:$0xf]
        %v352 = vld [vmem:[%s3 + $0xc] sm:$0xf]
        %v353 = vpack.c.bf16 %v345, %v345
        %v354 = vpack.c.bf16 %v346, %v346
        %v355 = vpack.c.bf16 %v347, %v347
        %v356 = vpack.c.bf16 %v348, %v348
        %v361 = vunpack.c.l.b16 %v349
        %v362 = vunpack.c.l.b16 %v350
        %v363 = vunpack.c.l.b16 %v351
        %v364 = vunpack.c.l.b16 %v352
        %v365 = vpack.c.b16 %v362, %v361
        %v366 = vpack.c.b16 %v364, %v363
        %vm367 = vcmask 64512
        %v369 = vsel %vm367, %v365, 0
        %v372 = vsel %vm367, %v366, 0
        %vm374 = vcmask 1043456
        %v376 = vsel %vm374, %v353, 0
        %v379 = vsel %vm374, %v354, 0
        %v382 = vsel %vm374, %v355, 0
        %v385 = vsel %vm374, %v356, 0
        %387 = vmatprep.subr.bf16.mxu0 0
        %388 = vmatpush1.bf16.msra.mxu0 0
        %389 = vmatprep.subr.bf16.mxu0 0
        %390 = vmatpush1.bf16.msra.mxu0 0
        %391 = vmatprep.subr.bf16.mxu0 0
        %392 = vmatpush1.bf16.msra.mxu0 0
        %393 = vmatprep.subr.bf16.mxu0 0
        %394 = vmatpush1.bf16.msra.mxu0 0
        %395 = vmatprep.subr.bf16.mxu0 0
        %396 = vmatpush1.bf16.msra.mxu0 0
        %397 = vmatprep.subr.bf16.mxu0 0
        %398 = vmatpush1.bf16.msra.mxu0 0
        %399 = vmatprep.subr.bf16.mxu0 0
        %400 = vmatpush1.bf16.msra.mxu0 0
        %401 = vmatprep.subr.bf16.mxu0 %v379
        %402 = vmatpush1.bf16.msra.mxu0 %v376
        %403 = vmatprep.subr.bf16.mxu0 0
        %404 = vmatpush2.bf16.msra.mxu0 0
        %405 = vmatprep.subr.bf16.mxu0 0
        %406 = vmatpush2.bf16.msra.mxu0 0
        %407 = vmatprep.subr.bf16.mxu0 0
        %408 = vmatpush2.bf16.msra.mxu0 0
        %409 = vmatprep.subr.bf16.mxu0 0
        %410 = vmatpush2.bf16.msra.mxu0 0
        %411 = vmatprep.subr.bf16.mxu0 0
        %412 = vmatpush2.bf16.msra.mxu0 0
        %413 = vmatprep.subr.bf16.mxu0 0
        %414 = vmatpush2.bf16.msra.mxu0 0
        %415 = vmatprep.subr.bf16.mxu0 0
        %416 = vmatpush2.bf16.msra.mxu0 0
        %417 = vmatprep.subr.bf16.mxu0 0
        %418 = vmatpush2.bf16.msra.mxu0 0
        %419 = vmatprep.mubr.bf16.mxu0 0
        %420 = vmatmul.mubr.bf16.gmra.mxu0 %v369
        %v421 = vpop.f32.mrf.mxu0
        %v422 = vadd.f32 0.0, %v421
        %v423 = vpop.f32.mrf.mxu0
        %v424 = vadd.f32 0.0, %v423
        %v425 = vpop.f32.mrf.mxu0
        %v426 = vadd.f32 0.0, %v425
        %v427 = vpop.f32.mrf.mxu0
        %v428 = vadd.f32 0.0, %v427
        %429 = vmatprep.mubr.bf16.mxu0 0
        %430 = vmatmul.mubr.bf16.gmra.mxu0 %v372
        %v431 = vpop.f32.mrf.mxu0
        %v432 = vadd.f32 0.0, %v431
        %v433 = vpop.f32.mrf.mxu0
        %v434 = vadd.f32 0.0, %v433
        %v435 = vpop.f32.mrf.mxu0
        %v436 = vadd.f32 0.0, %v435
        %v437 = vpop.f32.mrf.mxu0
        %v438 = vadd.f32 0.0, %v437
        %439 = vdwg.mxu0
        %440 = vmatprep.subr.bf16.mxu0 0
        %441 = vmatpush1.bf16.msra.mxu0 0
        %442 = vmatprep.subr.bf16.mxu0 0
        %443 = vmatpush1.bf16.msra.mxu0 0
        %444 = vmatprep.subr.bf16.mxu0 0
        %445 = vmatpush1.bf16.msra.mxu0 0
        %446 = vmatprep.subr.bf16.mxu0 0
        %447 = vmatpush1.bf16.msra.mxu0 0
        %448 = vmatprep.subr.bf16.mxu0 0
        %449 = vmatpush1.bf16.msra.mxu0 0
        %450 = vmatprep.subr.bf16.mxu0 0
        %451 = vmatpush1.bf16.msra.mxu0 0
        %452 = vmatprep.subr.bf16.mxu0 0
        %453 = vmatpush1.bf16.msra.mxu0 0
        %454 = vmatprep.subr.bf16.mxu0 %v385
        %455 = vmatpush1.bf16.msra.mxu0 %v382
        %456 = vmatprep.subr.bf16.mxu0 0
        %457 = vmatpush2.bf16.msra.mxu0 0
        %458 = vmatprep.subr.bf16.mxu0 0
        %459 = vmatpush2.bf16.msra.mxu0 0
        %460 = vmatprep.subr.bf16.mxu0 0
        %461 = vmatpush2.bf16.msra.mxu0 0
        %462 = vmatprep.subr.bf16.mxu0 0
        %463 = vmatpush2.bf16.msra.mxu0 0
        %464 = vmatprep.subr.bf16.mxu0 0
        %465 = vmatpush2.bf16.msra.mxu0 0
        %466 = vmatprep.subr.bf16.mxu0 0
        %467 = vmatpush2.bf16.msra.mxu0 0
        %468 = vmatprep.subr.bf16.mxu0 0
        %469 = vmatpush2.bf16.msra.mxu0 0
        %470 = vmatprep.subr.bf16.mxu0 0
        %471 = vmatpush2.bf16.msra.mxu0 0
        %472 = vmatprep.mubr.bf16.mxu0 0
        %473 = vmatmul.mubr.bf16.gmra.mxu0 %v369
        %v474 = vpop.f32.mrf.mxu0
        %v475 = vadd.f32 0.0, %v474
        %v476 = vpop.f32.mrf.mxu0
        %v477 = vadd.f32 0.0, %v476
        %v478 = vpop.f32.mrf.mxu0
        %v479 = vadd.f32 0.0, %v478
        %v480 = vpop.f32.mrf.mxu0
        %v481 = vadd.f32 0.0, %v480
        %482 = vmatprep.mubr.bf16.mxu0 0
        %483 = vmatmul.mubr.bf16.gmra.mxu0 %v372
        %v484 = vpop.f32.mrf.mxu0
        %v485 = vadd.f32 0.0, %v484
        %v486 = vpop.f32.mrf.mxu0
        %v487 = vadd.f32 0.0, %v486
        %v488 = vpop.f32.mrf.mxu0
        %v489 = vadd.f32 0.0, %v488
        %v490 = vpop.f32.mrf.mxu0
        %v491 = vadd.f32 0.0, %v490
        %492 = vdwg.mxu0
        %v493 = vpack.c.bf16 %v426, %v422
        %v494 = vpack.c.bf16 %v428, %v424
        %v495 = vpack.c.bf16 %v479, %v475
        %v496 = vpack.c.bf16 %v481, %v477
        %v497 = vpack.c.bf16 %v436, %v432
        %v498 = vpack.c.bf16 %v438, %v434
        %v499 = vpack.c.bf16 %v489, %v485
        %v500 = vpack.c.bf16 %v491, %v487
        %v509 = vunpack.c.l.b16 %v493
        %v510 = vunpack.c.l.b16 %v494
        %v511 = vunpack.c.l.b16 %v495
        %v512 = vunpack.c.l.b16 %v496
        %v513 = vunpack.c.h.b16 %v493
        %v514 = vunpack.c.h.b16 %v494
        %v515 = vunpack.c.h.b16 %v495
        %v516 = vunpack.c.h.b16 %v496
        %v517 = vunpack.c.l.b16 %v497
        %v518 = vunpack.c.l.b16 %v498
        %v519 = vunpack.c.l.b16 %v499
        %v520 = vunpack.c.l.b16 %v500
        %v521 = vunpack.c.h.b16 %v497
        %v522 = vunpack.c.h.b16 %v498
        %v523 = vunpack.c.h.b16 %v499
        %v524 = vunpack.c.h.b16 %v500
        %v525 = vpack.c.b16 %v510, %v509
        %v526 = vpack.c.b16 %v512, %v511
        %v527 = vpack.c.b16 %v514, %v513
        %v528 = vpack.c.b16 %v516, %v515
        %v529 = vpack.c.b16 %v518, %v517
        %v530 = vpack.c.b16 %v520, %v519
        %v531 = vpack.c.b16 %v522, %v521
        %v532 = vpack.c.b16 %v524, %v523
        %541 = vst [vmem:[%s270] sm:$0xff] %v525
        %542 = vst [vmem:[%s270 + $0x8] sm:$0xff] %v526
        %543 = vst [vmem:[%s270 + $0x10] sm:$0xff] %v527
        %544 = vst [vmem:[%s270 + $0x18] sm:$0xff] %v528
        %545 = vst [vmem:[%s270 + $0x20] sm:$0xff] %v529
        %546 = vst [vmem:[%s270 + $0x28] sm:$0xff] %v530
        %547 = vst [vmem:[%s270 + $0x30] sm:$0xff] %v531
        %548 = vst [vmem:[%s270 + $0x38] sm:$0xff] %v532
        %v549 = vpack.c.b16 %v509, %v509
        %v550 = vpack.c.b16 %v513, %v513
        %v551 = vpack.c.b16 %v517, %v517
        %v552 = vpack.c.b16 %v521, %v521
        %vm557 = vcmask 257024
        %558 = vst.msk [vmem:[%s311] sm:$0xf] %vm557, %v549
        %559 = vst.msk [vmem:[%s311 + $0x4] sm:$0xf] %vm557, %v550
        %560 = vst.msk [vmem:[%s311 + $0x8] sm:$0xf] %vm557, %v551
        %561 = vst.msk [vmem:[%s311 + $0xc] sm:$0xf] %vm557, %v552
        %v562 = vpack.c.b16 %v512, %v512
        %v563 = vpack.c.b16 %v516, %v516
        %v564 = vpack.c.b16 %v520, %v520
        %v565 = vpack.c.b16 %v524, %v524
        %566 = vrot.lane.b32.xlu0 %v562, 32
        %v567 = vpop.permute.xlu0 %566
        %568 = vrot.lane.b32.xlu0 %v563, 32
        %v569 = vpop.permute.xlu0 %568
        %570 = vrot.lane.b32.xlu0 %v564, 32
        %v571 = vpop.permute.xlu0 %570
        %572 = vrot.lane.b32.xlu0 %v565, 32
        %v573 = vpop.permute.xlu0 %572
        %s578 = scalar_lea.vmem %s311, 16
        %579 = vst.msk [vmem:[%s578] sm:$0xf] %vm557, %v567
        %580 = vst.msk [vmem:[%s578 + $0x4] sm:$0xf] %vm557, %v569
        %581 = vst.msk [vmem:[%s578 + $0x8] sm:$0xf] %vm557, %v571
        %582 = vst.msk [vmem:[%s578 + $0xc] sm:$0xf] %vm557, %v573
        %v583 = vadd.f32 %v422, %v424
        %v584 = vadd.f32 %v583, %v475
        %v585 = vadd.f32 %v584, %v477
        %586 = vadd.xlane.f32.xlu0 %v585
        %v587 = vpop.xlane.xlu0 %586
        %v588 = vadd.f32 %v426, %v428
        %v589 = vadd.f32 %v588, %v479
        %v590 = vadd.f32 %v589, %v481
        %591 = vadd.xlane.f32.xlu0 %v590
        %v592 = vpop.xlane.xlu0 %591
        %v593 = vadd.f32 %v432, %v434
        %v594 = vadd.f32 %v593, %v485
        %v595 = vadd.f32 %v594, %v487
        %596 = vadd.xlane.f32.xlu0 %v595
        %v597 = vpop.xlane.xlu0 %596
        %v598 = vadd.f32 %v436, %v438
        %v599 = vadd.f32 %v598, %v489
        %v600 = vadd.f32 %v599, %v491
        %601 = vadd.xlane.f32.xlu0 %v600
        %v602 = vpop.xlane.xlu0 %601
        %v603 = vmul.f32 %v422, %v422
        %v604 = vmul.f32 %v424, %v424
        %v605 = vmul.f32 %v475, %v475
        %v606 = vmul.f32 %v477, %v477
        %v607 = vmul.f32 %v426, %v426
        %v608 = vmul.f32 %v428, %v428
        %v609 = vmul.f32 %v479, %v479
        %v610 = vmul.f32 %v481, %v481
        %v611 = vmul.f32 %v432, %v432
        %v612 = vmul.f32 %v434, %v434
        %v613 = vmul.f32 %v485, %v485
        %v614 = vmul.f32 %v487, %v487
        %v615 = vmul.f32 %v436, %v436
        %v616 = vmul.f32 %v438, %v438
        %v617 = vmul.f32 %v489, %v489
        %v618 = vmul.f32 %v491, %v491
        %v619 = vadd.f32 %v603, %v604
        %v620 = vadd.f32 %v619, %v605
        %v621 = vadd.f32 %v620, %v606
        %622 = vadd.xlane.f32.xlu0 %v621
        %v623 = vpop.xlane.xlu0 %622
        %v624 = vadd.f32 %v607, %v608
        %v625 = vadd.f32 %v624, %v609
        %v626 = vadd.f32 %v625, %v610
        %627 = vadd.xlane.f32.xlu0 %v626
        %v628 = vpop.xlane.xlu0 %627
        %v629 = vadd.f32 %v611, %v612
        %v630 = vadd.f32 %v629, %v613
        %v631 = vadd.f32 %v630, %v614
        %632 = vadd.xlane.f32.xlu0 %v631
        %v633 = vpop.xlane.xlu0 %632
        %v634 = vadd.f32 %v615, %v616
        %v635 = vadd.f32 %v634, %v617
        %v636 = vadd.f32 %v635, %v618
        %637 = vadd.xlane.f32.xlu0 %v636
        %v638 = vpop.xlane.xlu0 %637
        %v643 = vlaneseq
        %v644 = vand.u32 %v643, 127
        %v645 = vlaneseq
        %v646 = vshrl.u32 %v645, 7
        %v647 = vsub.s32 %v644, %v646
        %v648 = vrot.slane %v587, %v647
        %v649 = vadd.s32 %v644, 4294967288
        %v650 = vlaneseq
        %v651 = vshrl.u32 %v650, 7
        %v652 = vsub.s32 %v649, %v651
        %v653 = vrot.slane %v592, %v652
        %vm654 = vcmask 130112
        %v655 = vsel %vm654, %v653, %v648
        %v656 = vadd.s32 %v644, 4294967280
        %v657 = vlaneseq
        %v658 = vshrl.u32 %v657, 7
        %v659 = vsub.s32 %v656, %v658
        %v660 = vrot.slane %v597, %v659
        %vm661 = vcmask 195712
        %v662 = vsel %vm661, %v660, %v655
        %v663 = vadd.s32 %v644, 4294967272
        %v664 = vlaneseq
        %v665 = vshrl.u32 %v664, 7
        %v666 = vsub.s32 %v663, %v665
        %v667 = vrot.slane %v602, %v666
        %vm668 = vcmask 261312
        %v669 = vsel %vm668, %v667, %v662
        %v675 = vlaneseq
        %v676 = vshrl.u32 %v675, 7
        %v677 = vsub.s32 %v644, %v676
        %v678 = vrot.slane %v623, %v677
        %v679 = vlaneseq
        %v680 = vshrl.u32 %v679, 7
        %v681 = vsub.s32 %v649, %v680
        %v682 = vrot.slane %v628, %v681
        %v683 = vsel %vm654, %v682, %v678
        %v684 = vlaneseq
        %v685 = vshrl.u32 %v684, 7
        %v686 = vsub.s32 %v656, %v685
        %v687 = vrot.slane %v633, %v686
        %v688 = vsel %vm661, %v687, %v683
        %v689 = vlaneseq
        %v690 = vshrl.u32 %v689, 7
        %v691 = vsub.s32 %v663, %v690
        %v692 = vrot.slane %v638, %v691
        %v693 = vsel %vm668, %v692, %v688
        %vm695 = vcmask 1040384
        %v696 = vsel %vm695, %v669, %v693
        %vm697 = vcmask 254976
        %698 = vst.msk [vmem:[%s319] sm:$0x3] %vm697, %v696
        %s699 = sand.u32 %s131, 1
        %s700 = sand.u32 %s131, 1
        %s701 = smul.addr %s700, 64
        %s702 = scalar_lea.vmem [#allocation2], %s701
        %p703 = scmp.lt.s32.totalorder %s22, 1
        %s704 = scalar_select %p703, %s22, 1
        %p705 = scmp.lt.s32.totalorder %s23, 1
        %s706 = scalar_select %p705, %s23, 1
        %s707 = smul.addr %s706, 8
        %s708 = smul.addr %s704, 16
        %s709 = sadd.s32 %s707, %s708
        %s710 = smul.addr %s709, 4
        %s711 = scalar_lea.vmem %s5, %s710
        %p712 = scmp.lt.s32.totalorder %s22, 1
        %s713 = scalar_select %p712, %s22, 1
        %p714 = scmp.lt.s32.totalorder %s23, 1
        %s715 = scalar_select %p714, %s23, 1
        %s716 = smul.addr %s713, 2
        %s717 = sadd.s32 %s715, %s716
        %s718 = smul.addr %s717, 2
        %s719 = scalar_lea.vmem %s6, %s718
        // Predicated region
        $region37: #{bottleneck_block.2} parent=35 // pred_check
          %p720 = pneg %p141
        $region38: #{bottleneck_block.2} parent=35 // pred_check_branch
          %722 = sbr.rel (%p720) target = $region40
        $region39: #{bottleneck_block.2} parent=35 // pred_region
          %s723 = smul.u32 4, %s23
          %s724 = smul.addr %s22, 32
          %s725 = sadd.s32 %s723, %s724
          %s726 = smul.addr %s725, 4
          %s727 = scalar_lea.vmem %s4, %s726
          // Predicated region
          $region41: #{bottleneck_block.2} parent=39 // pred_check
            _
          $region42: #{bottleneck_block.2} parent=39 // pred_check_branch
            %729 = sbr.rel (0) target = $region44
          $region43: #{bottleneck_block.2} parent=39 // pred_region
            // Predicated region
            $region45: #{bottleneck_block.2} parent=43 // pred_check
              _
            $region46: #{bottleneck_block.2} parent=43 // pred_check_branch
              %731 = sbr.rel (0) target = $region48
            $region47: #{bottleneck_block.2} parent=43 // pred_region
              loop: start=0, step=1, limit=1
              $region49: #{bottleneck_block.2} parent=47 // loop_pre_header
                _
              $region50: #{bottleneck_block.2} parent=47 // loop_header
                %s733 = sphi 0, %s737
                %p734 = scmp.ge.s32.totalorder %s733, 1
                %s738 = sphi %s702, %s702
                %s739 = sphi %s727, %s727
              $region51: #{bottleneck_block.2} parent=47 // loop_header_branch
                %736 = sbr.rel (%p734) target = $region55
              $region52: #{bottleneck_block.2} parent=47 // loop_body
                %v740 = vld [vmem:[%s738] sm:$0xff]
                %741 = vst [vmem:[%s739] sm:$0xff] %v740
                %v742 = vld [vmem:[%s738 + $0x8] sm:$0xff]
                %743 = vst [vmem:[%s739 + $0x8] sm:$0xff] %v742
                %v744 = vld [vmem:[%s738 + $0x10] sm:$0xff]
                %745 = vst [vmem:[%s739 + $0x20] sm:$0xff] %v744
                %v746 = vld [vmem:[%s738 + $0x18] sm:$0xff]
                %747 = vst [vmem:[%s739 + $0x28] sm:$0xff] %v746
                %v748 = vld [vmem:[%s738 + $0x20] sm:$0xff]
                %749 = vst [vmem:[%s739 + $0x40] sm:$0xff] %v748
                %v750 = vld [vmem:[%s738 + $0x28] sm:$0xff]
                %751 = vst [vmem:[%s739 + $0x48] sm:$0xff] %v750
                %v752 = vld [vmem:[%s738 + $0x30] sm:$0xff]
                %753 = vst [vmem:[%s739 + $0x60] sm:$0xff] %v752
                %v754 = vld [vmem:[%s738 + $0x38] sm:$0xff]
                %755 = vst [vmem:[%s739 + $0x68] sm:$0xff] %v754
              $region53: #{bottleneck_block.2} parent=47 // loop_footer
                %s737 = sadd.s32 1, %s733
              $region54: #{bottleneck_block.2} parent=47 // loop_footer_branch
                %732 = sbr.rel target = $region50
              $region55: #{bottleneck_block.2} parent=47 // loop_exit
                _
            $region48: #{bottleneck_block.2} parent=43 // pred_fallthru
              _
            // Predicated region
            $region56: #{bottleneck_block.2} parent=43 // pred_check
              _
            $region57: #{bottleneck_block.2} parent=43 // pred_check_branch
              %757 = sbr.rel target = $region59
            $region58: #{bottleneck_block.2} parent=43 // pred_region
              _
            $region59: #{bottleneck_block.2} parent=43 // pred_fallthru
              _
          $region44: #{bottleneck_block.2} parent=39 // pred_fallthru
            _
          %758 = vnop
        $region40: #{bottleneck_block.2} parent=35 // pred_fallthru
          _
        // Predicated region
        $region60: #{bottleneck_block.2} parent=35 // pred_check
          %p759 = pneg %p169
        $region61: #{bottleneck_block.2} parent=35 // pred_check_branch
          %761 = sbr.rel (%p759) target = $region63
        $region62: #{bottleneck_block.2} parent=35 // pred_region
          _
        $region63: #{bottleneck_block.2} parent=35 // pred_fallthru
          _
        // Predicated region
        $region64: #{bottleneck_block.2} parent=35 // pred_check
          %p762 = pneg %p197
        $region65: #{bottleneck_block.2} parent=35 // pred_check_branch
          %764 = sbr.rel (%p762) target = $region67
        $region66: #{bottleneck_block.2} parent=35 // pred_region
          _
        $region67: #{bottleneck_block.2} parent=35 // pred_fallthru
          _
      $region36: #{bottleneck_block.2} parent=5 // pred_fallthru
        _
      %p765 = scmp.le.s32.totalorder 2, %s13
      // Predicated region
      $region68: #{bottleneck_block.2} parent=5 // pred_check
        %p766 = pneg %p765
      $region69: #{bottleneck_block.2} parent=5 // pred_check_branch
        %768 = sbr.rel (%p766) target = $region71
      $region70: #{bottleneck_block.2} parent=5 // pred_region
        %s769 = ssub.s32 %s13, 2
        // Predicated region
        $region72: #{bottleneck_block.2} parent=70 // pred_check
          %p770 = pneg %p147
        $region73: #{bottleneck_block.2} parent=70 // pred_check_branch
          %772 = sbr.rel (%p770) target = $region75
        $region74: #{bottleneck_block.2} parent=70 // pred_region
          %s773 = sand.u32 %s132, 1
          %s774 = sand.u32 %s132, 1
          %s775 = smul.addr %s774, 64
          %s776 = scalar_lea.vmem [#allocation2], %s775
        $region75: #{bottleneck_block.2} parent=70 // pred_fallthru
          _
        // Predicated region
        $region76: #{bottleneck_block.2} parent=70 // pred_check
          %p777 = pneg %p175
        $region77: #{bottleneck_block.2} parent=70 // pred_check_branch
          %779 = sbr.rel (%p777) target = $region79
        $region78: #{bottleneck_block.2} parent=70 // pred_region
          %p780 = scmp.lt.s32.totalorder %s24, 1
          %s781 = scalar_select %p780, %s24, 1
          %p782 = scmp.lt.s32.totalorder %s25, 1
          %s783 = scalar_select %p782, %s25, 1
          %s784 = smul.addr %s783, 8
          %s785 = smul.addr %s781, 16
          %s786 = sadd.s32 %s784, %s785
          %s787 = smul.addr %s786, 4
          %s788 = scalar_lea.vmem %s5, %s787
        $region79: #{bottleneck_block.2} parent=70 // pred_fallthru
          _
        // Predicated region
        $region80: #{bottleneck_block.2} parent=70 // pred_check
          %p789 = pneg %p203
        $region81: #{bottleneck_block.2} parent=70 // pred_check_branch
          %791 = sbr.rel (%p789) target = $region83
        $region82: #{bottleneck_block.2} parent=70 // pred_region
          %p792 = scmp.lt.s32.totalorder %s24, 1
          %s793 = scalar_select %p792, %s24, 1
          %p794 = scmp.lt.s32.totalorder %s25, 1
          %s795 = scalar_select %p794, %s25, 1
          %s796 = smul.addr %s793, 2
          %s797 = sadd.s32 %s795, %s796
          %s798 = smul.addr %s797, 2
          %s799 = scalar_lea.vmem %s6, %s798
        $region83: #{bottleneck_block.2} parent=70 // pred_fallthru
          _
      $region71: #{bottleneck_block.2} parent=5 // pred_fallthru
        _
    $region6: #{bottleneck_block.2} parent=1 // loop_footer
      %s17 = sadd.s32 1, %s13
    $region7: #{bottleneck_block.2} parent=1 // loop_footer_branch
      %12 = sbr.rel target = $region3
    $region8: #{bottleneck_block.2} parent=1 // loop_exit
      _

// kernel: bottleneck_block.3
$region0: #{bottleneck_block.3}
  #allocation0 [shape = 'u32[]', space=smem, size = 0x4, offset = 0x4, fixed_abs, tag = 'smem constant byte address 0x4 - core index']
  #allocation1 [shape = 'u32[144,128]{1,0:T(1,128)}', space=vmem, size = 0x12000, scoped, tag = 'internal scratch']
  %s0 = inlined_call_operand.vmem [shape: bf16[2,32,1024], index: 0, kind: input, shape index: {}]
  %s1 = inlined_call_operand.vmem [shape: bf16[2,2,2,32,32], index: 1, kind: input, shape index: {}, may-alias: {1,2}]
  %s2 = inlined_call_operand.vmem [shape: bf16[2,2,2,32,32], index: 2, kind: input, shape index: {}, may-alias: {1,2}]
  %s3 = inlined_call_operand.vmem [shape: f32[32,1], index: 3, kind: input, shape index: {}]
  %s4 = inlined_call_operand.vmem [shape: f32[32,1], index: 4, kind: input, shape index: {}]
  %s5 = inlined_call_operand.vmem [shape: bf16[8,288], index: 5, kind: input, shape index: {}]
  %s6 = inlined_call_operand.vmem [shape: f32[2,16,1024], index: 6, kind: input, shape index: {}, may-alias: {6,7}]
  %s7 = inlined_call_operand.vmem [shape: f32[2,16,1024], index: 7, kind: output, shape index: {}, may-alias: {6,7}]
  %s8 = sld [smem:[#allocation0]]
  $region80: #{bottleneck_block.3} parent=0
    _
  %s10 = ssub.s32 1, %s8
  %s11 = scalar_select 0, %s10, %s8
  $region1: #{bottleneck_block.3} parent=0
    #allocation2 [shape = 'u8[65536]{0}', space=vmem, size = 0x10000, scoped, tag = 'input window, operand 0']
    loop: start=0, step=1, limit=6
    $region2: #{bottleneck_block.3} parent=1 // loop_pre_header
      _
    $region3: #{bottleneck_block.3} parent=1 // loop_header
      %s13 = sphi 0, %s17
      %p14 = scmp.ge.s32.totalorder %s13, 6
      %s20 = sphi 0, %s32
      %s21 = sphi 0, %s28
      %s22 = sphi 0, %s20
      %s23 = sphi 0, %s21
      %s24 = sphi 0, %s22
      %s25 = sphi 0, %s23
      %s37 = sphi 0, %s39
      %s40 = sphi 0, %s37
      %s41 = sphi 0, %s40
      %s57 = sphi 0, %s41
      %s71 = sphi 0, %s73
      %s74 = sphi 0, %s71
      %s75 = sphi 0, %s74
      %s91 = sphi 0, %s75
      %s105 = sphi 0, %s107
      %s108 = sphi 0, %s105
      %s109 = sphi 0, %s108
      %s125 = sphi 0, %s109
      %s129 = sphi 0, %s129
      %s131 = sphi 0, %s129
      %s132 = sphi 0, %s131
      %s146 = sphi 0, %s132
      %s150 = sphi 0, %s150
      %s152 = sphi 0, %s150
      %s153 = sphi 0, %s152
      %s167 = sphi 0, %s153
      %s171 = sphi 0, %s171
      %s173 = sphi 0, %s171
      %s174 = sphi 0, %s173
      %s188 = sphi 0, %s174
      %s196 = sphi 0, %s198
      %s199 = sphi 0, %s196
      %s200 = sphi 0, %s199
      %s216 = sphi 0, %s200
    $region4: #{bottleneck_block.3} parent=1 // loop_header_branch
      %16 = sbr.rel (%p14) target = $region8
    $region5: #{bottleneck_block.3} parent=1 // loop_body
      %s18 = ssub.s32 %s13, 1
      %s19 = ssub.s32 %s13, 2
      %s26 = sadd.s32 1, %s21
      %p27 = scmp.ge.s32.totalorder %s26, 2
      %s28 = scalar_select %p27, 0, %s26
      %s29 = sadd.s32 1, %s20
      %s30 = scalar_select %p27, %s29, %s20
      %p31 = scmp.ge.s32.totalorder %s30, 2
      %s32 = scalar_select %p31, 0, %s30
      %s33 = ssub.s32 %s20, %s32
      %s34 = ssub.s32 %s21, %s28
      %s35 = sor.u32 %s33, %s34
      %p36 = scmp.eq.s32.totalorder %s35, 0
      %s38 = sadd.s32 %s37, 1
      %s39 = scalar_select %p36, %s37, %s38
      %p42 = pneg %p36
      %p43 = scmp.eq.s32.totalorder %s13, 3
      %p44 = por %p42, %p43
      %p45 = scmp.ne.s32.totalorder %s37, %s40
      %p46 = scmp.eq.s32.totalorder %s13, 0
      %p47 = por %p45, %p46
      %p48 = scmp.ne.s32.totalorder %s37, %s40
      %p49 = scmp.eq.s32.totalorder %s18, 3
      %p50 = por %p48, %p49
      %p51 = scmp.ne.s32.totalorder %s40, %s41
      %p52 = scmp.eq.s32.totalorder %s18, 0
      %p53 = por %p51, %p52
      %p54 = scmp.ne.s32.totalorder %s40, %s41
      %p55 = scmp.eq.s32.totalorder %s19, 3
      %p56 = por %p54, %p55
      %p58 = scmp.ne.s32.totalorder %s41, %s57
      %p59 = scmp.eq.s32.totalorder %s19, 0
      %p60 = por %p58, %p59
      %s61 = ssub.s32 %s21, 1
      %p62 = scmp.gt.s32.totalorder %s61, 0
      %s63 = scalar_select %p62, %s61, 0
      %s64 = ssub.s32 %s28, 1
      %p65 = scmp.gt.s32.totalorder %s64, 0
      %s66 = scalar_select %p65, %s64, 0
      %s67 = ssub.s32 %s20, %s32
      %s68 = ssub.s32 %s63, %s66
      %s69 = sor.u32 %s67, %s68
      %p70 = scmp.eq.s32.totalorder %s69, 0
      %s72 = sadd.s32 %s71, 1
      %s73 = scalar_select %p70, %s71, %s72
      %p76 = pneg %p70
      %p77 = scmp.eq.s32.totalorder %s13, 3
      %p78 = por %p76, %p77
      %p79 = scmp.ne.s32.totalorder %s71, %s74
      %p80 = scmp.eq.s32.totalorder %s13, 0
      %p81 = por %p79, %p80
      %p82 = scmp.ne.s32.totalorder %s71, %s74
      %p83 = scmp.eq.s32.totalorder %s18, 3
      %p84 = por %p82, %p83
      %p85 = scmp.ne.s32.totalorder %s74, %s75
      %p86 = scmp.eq.s32.totalorder %s18, 0
      %p87 = por %p85, %p86
      %p88 = scmp.ne.s32.totalorder %s74, %s75
      %p89 = scmp.eq.s32.totalorder %s19, 3
      %p90 = por %p88, %p89
      %p92 = scmp.ne.s32.totalorder %s75, %s91
      %p93 = scmp.eq.s32.totalorder %s19, 0
      %p94 = por %p92, %p93
      %s95 = sadd.s32 %s21, 1
      %p96 = scmp.lt.s32.totalorder %s95, 1
      %s97 = scalar_select %p96, %s95, 1
      %s98 = sadd.s32 %s28, 1
      %p99 = scmp.lt.s32.totalorder %s98, 1
      %s100 = scalar_select %p99, %s98, 1
      %s101 = ssub.s32 %s20, %s32
      %s102 = ssub.s32 %s97, %s100
      %s103 = sor.u32 %s101, %s102
      %p104 = scmp.eq.s32.totalorder %s103, 0
      %s106 = sadd.s32 %s105, 1
      %s107 = scalar_select %p104, %s105, %s106
      %p110 = pneg %p104
      %p111 = scmp.eq.s32.totalorder %s13, 3
      %p112 = por %p110, %p111
      %p113 = scmp.ne.s32.totalorder %s105, %s108
      %p114 = scmp.eq.s32.totalorder %s13, 0
      %p115 = por %p113, %p114
      %p116 = scmp.ne.s32.totalorder %s105, %s108
      %p117 = scmp.eq.s32.totalorder %s18, 3
      %p118 = por %p116, %p117
      %p119 = scmp.ne.s32.totalorder %s108, %s109
      %p120 = scmp.eq.s32.totalorder %s18, 0
      %p121 = por %p119, %p120
      %p122 = scmp.ne.s32.totalorder %s108, %s109
      %p123 = scmp.eq.s32.totalorder %s19, 3
      %p124 = por %p122, %p123
      %p126 = scmp.ne.s32.totalorder %s109, %s125
      %p127 = scmp.eq.s32.totalorder %s19, 0
      %p128 = por %p126, %p127
      %s130 = sadd.s32 %s129, 1
      %p133 = scmp.eq.s32.totalorder %s13, 3
      %p134 = scmp.ne.s32.totalorder %s129, %s131
      %p135 = scmp.eq.s32.totalorder %s13, 0
      %p136 = por %p134, %p135
      %p137 = scmp.ne.s32.totalorder %s129, %s131
      %p138 = scmp.eq.s32.totalorder %s18, 3
      %p139 = por %p137, %p138
      %p140 = scmp.ne.s32.totalorder %s131, %s132
      %p141 = scmp.eq.s32.totalorder %s18, 0
      %p142 = por %p140, %p141
      %p143 = scmp.ne.s32.totalorder %s131, %s132
      %p144 = scmp.eq.s32.totalorder %s19, 3
      %p145 = por %p143, %p144
      %p147 = scmp.ne.s32.totalorder %s132, %s146
      %p148 = scmp.eq.s32.totalorder %s19, 0
      %p149 = por %p147, %p148
      %s151 = sadd.s32 %s150, 1
      %p154 = scmp.eq.s32.totalorder %s13, 3
      %p155 = scmp.ne.s32.totalorder %s150, %s152
      %p156 = scmp.eq.s32.totalorder %s13, 0
      %p157 = por %p155, %p156
      %p158 = scmp.ne.s32.totalorder %s150, %s152
      %p159 = scmp.eq.s32.totalorder %s18, 3
      %p160 = por %p158, %p159
      %p161 = scmp.ne.s32.totalorder %s152, %s153
      %p162 = scmp.eq.s32.totalorder %s18, 0
      %p163 = por %p161, %p162
      %p164 = scmp.ne.s32.totalorder %s152, %s153
      %p165 = scmp.eq.s32.totalorder %s19, 3
      %p166 = por %p164, %p165
      %p168 = scmp.ne.s32.totalorder %s153, %s167
      %p169 = scmp.eq.s32.totalorder %s19, 0
      %p170 = por %p168, %p169
      %s172 = sadd.s32 %s171, 1
      %p175 = scmp.eq.s32.totalorder %s13, 3
      %p176 = scmp.ne.s32.totalorder %s171, %s173
      %p177 = scmp.eq.s32.totalorder %s13, 0
      %p178 = por %p176, %p177
      %p179 = scmp.ne.s32.totalorder %s171, %s173
      %p180 = scmp.eq.s32.totalorder %s18, 3
      %p181 = por %p179, %p180
      %p182 = scmp.ne.s32.totalorder %s173, %s174
      %p183 = scmp.eq.s32.totalorder %s18, 0
      %p184 = por %p182, %p183
      %p185 = scmp.ne.s32.totalorder %s173, %s174
      %p186 = scmp.eq.s32.totalorder %s19, 3
      %p187 = por %p185, %p186
      %p189 = scmp.ne.s32.totalorder %s174, %s188
      %p190 = scmp.eq.s32.totalorder %s19, 0
      %p191 = por %p189, %p190
      %s192 = ssub.s32 %s20, %s32
      %s193 = ssub.s32 %s21, %s28
      %s194 = sor.u32 %s192, %s193
      %p195 = scmp.eq.s32.totalorder %s194, 0
      %s197 = sadd.s32 %s196, 1
      %s198 = scalar_select %p195, %s196, %s197
      %p201 = pneg %p195
      %p202 = scmp.eq.s32.totalorder %s13, 3
      %p203 = por %p201, %p202
      %p204 = scmp.ne.s32.totalorder %s196, %s199
      %p205 = scmp.eq.s32.totalorder %s13, 0
      %p206 = por %p204, %p205
      %p207 = scmp.ne.s32.totalorder %s196, %s199
      %p208 = scmp.eq.s32.totalorder %s18, 3
      %p209 = por %p207, %p208
      %p210 = scmp.ne.s32.totalorder %s199, %s200
      %p211 = scmp.eq.s32.totalorder %s18, 0
      %p212 = por %p210, %p211
      %p213 = scmp.ne.s32.totalorder %s199, %s200
      %p214 = scmp.eq.s32.totalorder %s19, 3
      %p215 = por %p213, %p214
      %p217 = scmp.ne.s32.totalorder %s200, %s216
      %p218 = scmp.eq.s32.totalorder %s19, 0
      %p219 = por %p217, %p218
      %p220 = scmp.le.s32.totalorder 1, %s13
      %p221 = scmp.lt.s32.totalorder %s13, 5
      %p222 = pnand %p220, %p221
      %p223 = pneg %p222
      // Predicated region
      $region9: #{bottleneck_block.3} parent=5 // pred_check
        _
      $region10: #{bottleneck_block.3} parent=5 // pred_check_branch
        %225 = sbr.rel (%p222) target = $region12
      $region11: #{bottleneck_block.3} parent=5 // pred_region
        %s226 = ssub.s32 %s13, 1
        // Predicated region
        $region13: #{bottleneck_block.3} parent=11 // pred_check
          %p227 = pneg %p142
        $region14: #{bottleneck_block.3} parent=11 // pred_check_branch
          %229 = sbr.rel (%p227) target = $region16
        $region15: #{bottleneck_block.3} parent=11 // pred_region
          _
        $region16: #{bottleneck_block.3} parent=11 // pred_fallthru
          _
        // Predicated region
        $region17: #{bottleneck_block.3} parent=11 // pred_check
          %p230 = pneg %p163
        $region18: #{bottleneck_block.3} parent=11 // pred_check_branch
          %232 = sbr.rel (%p230) target = $region20
        $region19: #{bottleneck_block.3} parent=11 // pred_region
          _
        $region20: #{bottleneck_block.3} parent=11 // pred_fallthru
          _
        // Predicated region
        $region21: #{bottleneck_block.3} parent=11 // pred_check
          %p233 = pneg %p184
        $region22: #{bottleneck_block.3} parent=11 // pred_check_branch
          %235 = sbr.rel (%p233) target = $region24
        $region23: #{bottleneck_block.3} parent=11 // pred_region
          _
        $region24: #{bottleneck_block.3} parent=11 // pred_fallthru
          _
      $region12: #{bottleneck_block.3} parent=5 // pred_fallthru
        _
      %p236 = scmp.lt.s32.totalorder %s13, 4
      // Predicated region
      $region25: #{bottleneck_block.3} parent=5 // pred_check
        %p237 = pneg %p236
      $region26: #{bottleneck_block.3} parent=5 // pred_check_branch
        %239 = sbr.rel (%p237) target = $region28
      $region27: #{bottleneck_block.3} parent=5 // pred_region
        // Predicated region
        $region29: #{bottleneck_block.3} parent=27 // pred_check
          %p240 = pneg %p47
        $region30: #{bottleneck_block.3} parent=27 // pred_check_branch
          %242 = sbr.rel (%p240) target = $region32
        $region31: #{bottleneck_block.3} parent=27 // pred_region
          %s243 = sand.u32 %s37, 1
          %s244 = sand.u32 %s37, 1
          %s245 = smul.addr %s244, 64
          %s246 = scalar_lea.vmem [#allocation2], %s245
          %s247 = smul.u32 4, %s21
          %s248 = smul.addr %s20, 32
          %s249 = sadd.s32 %s247, %s248
          %s250 = smul.addr %s249, 4
          %s251 = scalar_lea.vmem %s0, %s250
          // Predicated region
          $region33: #{bottleneck_block.3} parent=31 // pred_check
            _
          $region34: #{bottleneck_block.3} parent=31 // pred_check_branch
            %253 = sbr.rel (0) target = $region36
          $region35: #{bottleneck_block.3} parent=31 // pred_region
            // Predicated region
            $region37: #{bottleneck_block.3} parent=35 // pred_check
              _
            $region38: #{bottleneck_block.3} parent=35 // pred_check_branch
              %255 = sbr.rel (0) target = $region40
            $region39: #{bottleneck_block.3} parent=35 // pred_region
              loop: start=0, step=1, limit=1
              $region41: #{bottleneck_block.3} parent=39 // loop_pre_header
                _
              $region42: #{bottleneck_block.3} parent=39 // loop_header
                %s257 = sphi 0, %s261
                %p258 = scmp.ge.s32.totalorder %s257, 1
                %s262 = sphi %s251, %s251
                %s263 = sphi %s246, %s246
              $region43: #{bottleneck_block.3} parent=39 // loop_header_branch
                %260 = sbr.rel (%p258) target = $region47
              $region44: #{bottleneck_block.3} parent=39 // loop_body
                %v264 = vld [vmem:[%s262] sm:$0xff]
                %265 = vst [vmem:[%s263] sm:$0xff] %v264
                %v266 = vld [vmem:[%s262 + $0x8] sm:$0xff]
                %267 = vst [vmem:[%s263 + $0x8] sm:$0xff] %v266
                %v268 = vld [vmem:[%s262 + $0x20] sm:$0xff]
                %269 = vst [vmem:[%s263 + $0x10] sm:$0xff] %v268
                %v270 = vld [vmem:[%s262 + $0x28] sm:$0xff]
                %271 = vst [vmem:[%s263 + $0x18] sm:$0xff] %v270
                %v272 = vld [vmem:[%s262 + $0x40] sm:$0xff]
                %273 = vst [vmem:[%s263 + $0x20] sm:$0xff] %v272
                %v274 = vld [vmem:[%s262 + $0x48] sm:$0xff]
                %275 = vst [vmem:[%s263 + $0x28] sm:$0xff] %v274
                %v276 = vld [vmem:[%s262 + $0x60] sm:$0xff]
                %277 = vst [vmem:[%s263 + $0x30] sm:$0xff] %v276
                %v278 = vld [vmem:[%s262 + $0x68] sm:$0xff]
                %279 = vst [vmem:[%s263 + $0x38] sm:$0xff] %v278
              $region45: #{bottleneck_block.3} parent=39 // loop_footer
                %s261 = sadd.s32 1, %s257
              $region46: #{bottleneck_block.3} parent=39 // loop_footer_branch
                %256 = sbr.rel target = $region42
              $region47: #{bottleneck_block.3} parent=39 // loop_exit
                _
            $region40: #{bottleneck_block.3} parent=35 // pred_fallthru
              _
            // Predicated region
            $region48: #{bottleneck_block.3} parent=35 // pred_check
              _
            $region49: #{bottleneck_block.3} parent=35 // pred_check_branch
              %281 = sbr.rel target = $region51
            $region50: #{bottleneck_block.3} parent=35 // pred_region
              _
            $region51: #{bottleneck_block.3} parent=35 // pred_fallthru
              _
          $region36: #{bottleneck_block.3} parent=31 // pred_fallthru
            _
          %282 = vnop
        $region32: #{bottleneck_block.3} parent=27 // pred_fallthru
          _
        // Predicated region
        $region52: #{bottleneck_block.3} parent=27 // pred_check
          %p283 = pneg %p81
        $region53: #{bottleneck_block.3} parent=27 // pred_check_branch
          %285 = sbr.rel (%p283) target = $region55
        $region54: #{bottleneck_block.3} parent=27 // pred_region
          %s286 = ssub.s32 %s21, 1
          %p287 = scmp.gt.s32.totalorder %s286, 0
          %s288 = scalar_select %p287, %s286, 0
          %p289 = scmp.lt.s32.totalorder %s20, 1
          %s290 = scalar_select %p289, %s20, 1
          %p291 = scmp.lt.s32.totalorder %s288, 1
          %s292 = scalar_select %p291, %s288, 1
          %s293 = smul.addr %s292, 8
          %s294 = sadd.s32 4, %s293
          %s295 = smul.addr %s290, 16
          %s296 = sadd.s32 %s294, %s295
          %s297 = smul.addr %s296, 4
          %s298 = scalar_lea.vmem %s1, %s297
          %s299 = ssub.s32 %s21, 1
          %p300 = scmp.gt.s32.totalorder %s299, 0
          %s301 = scalar_select %p300, %s299, 0
        $region55: #{bottleneck_block.3} parent=27 // pred_fallthru
          _
        // Predicated region
        $region56: #{bottleneck_block.3} parent=27 // pred_check
          %p302 = pneg %p115
        $region57: #{bottleneck_block.3} parent=27 // pred_check_branch
          %304 = sbr.rel (%p302) target = $region59
        $region58: #{bottleneck_block.3} parent=27 // pred_region
          %s305 = sadd.s32 %s21, 1
          %p306 = scmp.lt.s32.totalorder %s305, 1
          %s307 = scalar_select %p306, %s305, 1
          %p308 = scmp.lt.s32.totalorder %s20, 1
          %s309 = scalar_select %p308, %s20, 1
          %p310 = scmp.lt.s32.totalorder %s307, 1
          %s311 = scalar_select %p310, %s307, 1
          %s312 = smul.addr %s311, 8
          %s313 = smul.addr %s309, 16
          %s314 = sadd.s32 %s312, %s313
          %s315 = smul.addr %s314, 4
          %s316 = scalar_lea.vmem %s2, %s315
          %s317 = sadd.s32 %s21, 1
          %p318 = scmp.lt.s32.totalorder %s317, 1
          %s319 = scalar_select %p318, %s317, 1
        $region59: #{bottleneck_block.3} parent=27 // pred_fallthru
          _
      $region28: #{bottleneck_block.3} parent=5 // pred_fallthru
        _
      %p320 = scmp.le.s32.totalorder 1, %s13
      %p321 = scmp.lt.s32.totalorder %s13, 5
      %p322 = pnand %p320, %p321
      %p323 = pneg %p322
      // Predicated region
      $region60: #{bottleneck_block.3} parent=5 // pred_check
        _
      $region61: #{bottleneck_block.3} parent=5 // pred_check_branch
        %325 = sbr.rel (%p322) target = $region63
      $region62: #{bottleneck_block.3} parent=5 // pred_region
        %s326 = ssub.s32 %s13, 1
        %s327 = sand.u32 %s40, 1
        %s328 = sand.u32 %s40, 1
        %s329 = smul.addr %s328, 64
        %s330 = scalar_lea.vmem [#allocation2], %s329
        // Predicated region
        $region64: #{bottleneck_block.3} parent=62 // pred_check
          %p331 = pneg %p53
        $region65: #{bottleneck_block.3} parent=62 // pred_check_branch
          %333 = sbr.rel (%p331) target = $region67
        $region66: #{bottleneck_block.3} parent=62 // pred_region
          _
        $region67: #{bottleneck_block.3} parent=62 // pred_fallthru
          _
        %s334 = sand.u32 %s40, 1
        %s335 = sand.u32 %s40, 1
        %s336 = smul.addr %s335, 64
        %s337 = scalar_lea.vmem [#allocation2], %s336
        %p338 = pneg %p53
        %p339 = pneg %p50
        %s340 = ssub.s32 %s23, 1
        %p341 = scmp.gt.s32.totalorder %s340, 0
        %s342 = scalar_select %p341, %s340, 0
        %p343 = scmp.lt.s32.totalorder %s22, 1
        %s344 = scalar_select %p343, %s22, 1
        %p345 = scmp.lt.s32.totalorder %s342, 1
        %s346 = scalar_select %p345, %s342, 1
        %s347 = smul.addr %s346, 8
        %s348 = sadd.s32 4, %s347
        %s349 = smul.addr %s344, 16
        %s350 = sadd.s32 %s348, %s349
        %s351 = smul.addr %s350, 4
        %s352 = scalar_lea.vmem %s1, %s351
        %p353 = pneg %p87
        %p354 = pneg %p84
        %s355 = sadd.s32 %s23, 1
        %p356 = scmp.lt.s32.totalorder %s355, 1
        %s357 = scalar_select %p356, %s355, 1
        %p358 = scmp.lt.s32.totalorder %s22, 1
        %s359 = scalar_select %p358, %s22, 1
        %p360 = scmp.lt.s32.totalorder %s357, 1
        %s361 = scalar_select %p360, %s357, 1
        %s362 = smul.addr %s361, 8
        %s363 = smul.addr %s359, 16
        %s364 = sadd.s32 %s362, %s363
        %s365 = smul.addr %s364, 4
        %s366 = scalar_lea.vmem %s2, %s365
        %p367 = pneg %p121
        %p368 = pneg %p118
        %p369 = pneg %p142
        %p370 = pneg %p139
        %p371 = pneg %p163
        %p372 = pneg %p160
        %p373 = pneg %p184
        %p374 = pneg %p181
        %p375 = pneg %p212
        %p376 = pneg %p209
        %s377 = smul.u32 4, %s23
        %p378 = scmp.lt.s32.totalorder %s22, 1
        %s379 = scalar_select %p378, %s22, 1
        %p380 = scmp.lt.s32.totalorder %s377, 7
        %s381 = scalar_select %p380, %s377, 7
        %s382 = smul.addr %s379, 16
        %s383 = sadd.s32 %s381, %s382
        %s384 = smul.addr %s383, 8
        %s385 = scalar_lea.vmem %s7, %s384
        %s386 = smul.u32 4, %s23
        %s387 = ssub.s32 %s23, 1
        %p388 = scmp.gt.s32.totalorder %s387, 0
        %s389 = scalar_select %p388, %s387, 0
        %p390 = scmp.lt.s32.totalorder %s22, 1
        %s391 = scalar_select %p390, %s22, 1
        %p392 = scmp.lt.s32.totalorder %s389, 1
        %s393 = scalar_select %p392, %s389, 1
        %s394 = smul.addr %s393, 8
        %s395 = sadd.s32 4, %s394
        %s396 = smul.addr %s391, 16
        %s397 = sadd.s32 %s395, %s396
        %s398 = smul.addr %s397, 4
        %s399 = scalar_lea.vmem %s1, %s398
        %s400 = ssub.s32 %s23, 1
        %p401 = scmp.gt.s32.totalorder %s400, 0
        %s402 = scalar_select %p401, %s400, 0
        %s403 = sadd.s32 %s23, 1
        %p404 = scmp.lt.s32.totalorder %s403, 1
        %s405 = scalar_select %p404, %s403, 1
        %p406 = scmp.lt.s32.totalorder %s22, 1
        %s407 = scalar_select %p406, %s22, 1
        %p408 = scmp.lt.s32.totalorder %s405, 1
        %s409 = scalar_select %p408, %s405, 1
        %s410 = smul.addr %s409, 8
        %s411 = smul.addr %s407, 16
        %s412 = sadd.s32 %s410, %s411
        %s413 = smul.addr %s412, 4
        %s414 = scalar_lea.vmem %s2, %s413
        %s415 = sadd.s32 %s23, 1
        %p416 = scmp.lt.s32.totalorder %s415, 1
        %s417 = scalar_select %p416, %s415, 1
        %s418 = smul.u32 4, %s23
        %p419 = scmp.lt.s32.totalorder %s22, 1
        %s420 = scalar_select %p419, %s22, 1
        %p421 = scmp.lt.s32.totalorder %s418, 7
        %s422 = scalar_select %p421, %s418, 7
        %s423 = smul.addr %s420, 16
        %s424 = sadd.s32 %s422, %s423
        %s425 = smul.addr %s424, 8
        %s426 = scalar_lea.vmem %s7, %s425
        %s427 = smul.u32 4, %s23
        %v429 = vld [vmem:[%s3] sm:$0xff]
        %v430 = vld [vmem:[%s3 + $0x8] sm:$0xff]
        %v431 = vld [vmem:[%s3 + $0x10] sm:$0xff]
        %v432 = vld [vmem:[%s3 + $0x18] sm:$0xff]
        %v433 = vld [vmem:[%s4] sm:$0xff]
        %v434 = vld [vmem:[%s4 + $0x8] sm:$0xff]
        %v435 = vld [vmem:[%s4 + $0x10] sm:$0xff]
        %v436 = vld [vmem:[%s4 + $0x18] sm:$0xff]
        %v437 = vld [vmem:[%s330] sm:$0xff]
        %v438 = vld [vmem:[%s330 + $0x8] sm:$0xff]
        %v439 = vld [vmem:[%s330 + $0x10] sm:$0xff]
        %v440 = vld [vmem:[%s330 + $0x18] sm:$0xff]
        %v441 = vld [vmem:[%s330 + $0x20] sm:$0xff]
        %v442 = vld [vmem:[%s330 + $0x28] sm:$0xff]
        %v443 = vld [vmem:[%s330 + $0x30] sm:$0xff]
        %v444 = vld [vmem:[%s330 + $0x38] sm:$0xff]
        %v445 = vunpack.c.l.bf16 %v437
        %v446 = vunpack.c.h.bf16 %v437
        %v447 = vunpack.c.l.bf16 %v438
        %v448 = vunpack.c.h.bf16 %v438
        %v449 = vunpack.c.l.bf16 %v439
        %v450 = vunpack.c.h.bf16 %v439
        %v451 = vunpack.c.l.bf16 %v440
        %v452 = vunpack.c.h.bf16 %v440
        %v453 = vunpack.c.l.bf16 %v441
        %v454 = vunpack.c.h.bf16 %v441
        %v455 = vunpack.c.l.bf16 %v442
        %v456 = vunpack.c.h.bf16 %v442
        %v457 = vunpack.c.l.bf16 %v443
        %v458 = vunpack.c.h.bf16 %v443
        %v459 = vunpack.c.l.bf16 %v444
        %v460 = vunpack.c.h.bf16 %v444
        %462 = vset.pattern.permute.xlu0 0
        %463 = vperm.xlu0 %462, %v429
        %v464 = vpop.permute.xlu0 %463
        %467 = vset.pattern.permute.xlu0 0
        %468 = vperm.xlu0 %467, %v430
        %v469 = vpop.permute.xlu0 %468
        %472 = vset.pattern.permute.xlu0 0
        %473 = vperm.xlu0 %472, %v431
        %v474 = vpop.permute.xlu0 %473
        %477 = vset.pattern.permute.xlu0 0
        %478 = vperm.xlu0 %477, %v432
        %v479 = vpop.permute.xlu0 %478
        %v481 = vmul.f32 %v445, %v464
        %v482 = vmul.f32 %v446, %v464
        %v483 = vmul.f32 %v447, %v464
        %v484 = vmul.f32 %v448, %v464
        %v485 = vmul.f32 %v449, %v469
        %v486 = vmul.f32 %v450, %v469
        %v487 = vmul.f32 %v451, %v469
        %v488 = vmul.f32 %v452, %v469
        %v489 = vmul.f32 %v453, %v474
        %v490 = vmul.f32 %v454, %v474
        %v491 = vmul.f32 %v455, %v474
        %v492 = vmul.f32 %v456, %v474
        %v493 = vmul.f32 %v457, %v479
        %v494 = vmul.f32 %v458, %v479
        %v495 = vmul.f32 %v459, %v479
        %v496 = vmul.f32 %v460, %v479
        %498 = vset.pattern.permute.xlu0 0
        %499 = vperm.xlu0 %498, %v433
        %v500 = vpop.permute.xlu0 %499
        %503 = vset.pattern.permute.xlu0 0
        %504 = vperm.xlu0 %503, %v434
        %v505 = vpop.permute.xlu0 %504
        %508 = vset.pattern.permute.xlu0 0
        %509 = vperm.xlu0 %508, %v435
        %v510 = vpop.permute.xlu0 %509
        %513 = vset.pattern.permute.xlu0 0
        %514 = vperm.xlu0 %513, %v436
        %v515 = vpop.permute.xlu0 %514
        %v517 = vadd.f32 %v481, %v500
        %v518 = vadd.f32 %v482, %v500
        %v519 = vadd.f32 %v483, %v500
        %v520 = vadd.f32 %v484, %v500
        %v521 = vadd.f32 %v485, %v505
        %v522 = vadd.f32 %v486, %v505
        %v523 = vadd.f32 %v487, %v505
        %v524 = vadd.f32 %v488, %v505
        %v525 = vadd.f32 %v489, %v510
        %v526 = vadd.f32 %v490, %v510
        %v527 = vadd.f32 %v491, %v510
        %v528 = vadd.f32 %v492, %v510
        %v529 = vadd.f32 %v493, %v515
        %v530 = vadd.f32 %v494, %v515
        %v531 = vadd.f32 %v495, %v515
        %v532 = vadd.f32 %v496, %v515
        %v533 = vmax.f32 %v517, 0.0
        %v534 = vmax.f32 %v518, 0.0
        %v535 = vmax.f32 %v519, 0.0
        %v536 = vmax.f32 %v520, 0.0
        %v537 = vmax.f32 %v521, 0.0
        %v538 = vmax.f32 %v522, 0.0
        %v539 = vmax.f32 %v523, 0.0
        %v540 = vmax.f32 %v524, 0.0
        %v541 = vmax.f32 %v525, 0.0
        %v542 = vmax.f32 %v526, 0.0
        %v543 = vmax.f32 %v527, 0.0
        %v544 = vmax.f32 %v528, 0.0
        %v545 = vmax.f32 %v529, 0.0
        %v546 = vmax.f32 %v530, 0.0
        %v547 = vmax.f32 %v531, 0.0
        %v548 = vmax.f32 %v532, 0.0
        %v549 = vld [vmem:[%s399] sm:$0xf]
        %v550 = vld [vmem:[%s399 + $0x4] sm:$0xf]
        %v551 = vld [vmem:[%s399 + $0x8] sm:$0xf]
        %v552 = vld [vmem:[%s399 + $0xc] sm:$0xf]
        %v553 = vunpack.c.l.bf16 %v549
        %v554 = vunpack.c.l.bf16 %v550
        %v555 = vunpack.c.l.bf16 %v551
        %v556 = vunpack.c.l.bf16 %v552
        %v557 = vmul.f32 %v553, %v464
        %v558 = vmul.f32 %v554, %v469
        %v559 = vmul.f32 %v555, %v474
        %v560 = vmul.f32 %v556, %v479
        %v561 = vadd.f32 %v557, %v500
        %v562 = vadd.f32 %v558, %v505
        %v563 = vadd.f32 %v559, %v510
        %v564 = vadd.f32 %v560, %v515
        %v565 = vmax.f32 %v561, 0.0
        %v566 = vmax.f32 %v562, 0.0
        %v567 = vmax.f32 %v563, 0.0
        %v568 = vmax.f32 %v564, 0.0
        %v569 = vld [vmem:[%s414] sm:$0xf]
        %v570 = vld [vmem:[%s414 + $0x4] sm:$0xf]
        %v571 = vld [vmem:[%s414 + $0x8] sm:$0xf]
        %v572 = vld [vmem:[%s414 + $0xc] sm:$0xf]
        %v573 = vunpack.c.l.bf16 %v569
        %v574 = vunpack.c.l.bf16 %v570
        %v575 = vunpack.c.l.bf16 %v571
        %v576 = vunpack.c.l.bf16 %v572
        %v577 = vmul.f32 %v573, %v464
        %v578 = vmul.f32 %v574, %v469
        %v579 = vmul.f32 %v575, %v474
        %v580 = vmul.f32 %v576, %v479
        %v581 = vadd.f32 %v577, %v500
        %v582 = vadd.f32 %v578, %v505
        %v583 = vadd.f32 %v579, %v510
        %v584 = vadd.f32 %v580, %v515
        %v585 = vmax.f32 %v581, 0.0
        %v586 = vmax.f32 %v582, 0.0
        %v587 = vmax.f32 %v583, 0.0
        %v588 = vmax.f32 %v584, 0.0
        %p589 = scmp.gt.s32.totalorder %s23, 0
        %s590 = scalar_select %p589, 1, 0
        %v591 = vstv %s590
        %vm592 = vcmp.eq.s32.totalorder %v591, 1
        %v593 = vsel %vm592, %v565, 0.0
        %v594 = vsel %vm592, %v566, 0.0
        %v595 = vsel %vm592, %v567, 0.0
        %v596 = vsel %vm592, %v568, 0.0
        %p597 = scmp.lt.s32.totalorder %s23, 1
        %s598 = scalar_select %p597, 1, 0
        %v599 = vstv %s598
        %vm600 = vcmp.eq.s32.totalorder %v599, 1
        %v601 = vsel %vm600, %v585, 0.0
        %v602 = vsel %vm600, %v586, 0.0
        %v603 = vsel %vm600, %v587, 0.0
        %v604 = vsel %vm600, %v588, 0.0
        %609 = vrot.lane.b32.xlu0 %v593, 1
        %v610 = vpop.permute.xlu0 %609
        %611 = vrot.lane.b32.xlu0 %v594, 1
        %v612 = vpop.permute.xlu0 %611
        %613 = vrot.lane.b32.xlu0 %v595, 1
        %v614 = vpop.permute.xlu0 %613
        %615 = vrot.lane.b32.xlu0 %v596, 1
        %v616 = vpop.permute.xlu0 %615
        %637 = vrot.lane.b32.xlu0 %v533, 33
        %v638 = vpop.permute.xlu0 %637
        %639 = vrot.lane.b32.xlu0 %v534, 33
        %v640 = vpop.permute.xlu0 %639
        %641 = vrot.lane.b32.xlu0 %v535, 33
        %v642 = vpop.permute.xlu0 %641
        %643 = vrot.lane.b32.xlu0 %v536, 33
        %v644 = vpop.permute.xlu0 %643
        %645 = vrot.lane.b32.xlu0 %v537, 33
        %v646 = vpop.permute.xlu0 %645
        %647 = vrot.lane.b32.xlu0 %v538, 33
        %v648 = vpop.permute.xlu0 %647
        %649 = vrot.lane.b32.xlu0 %v539, 33
        %v650 = vpop.permute.xlu0 %649
        %651 = vrot.lane.b32.xlu0 %v540, 33
        %v652 = vpop.permute.xlu0 %651
        %653 = vrot.lane.b32.xlu0 %v541, 33
        %v654 = vpop.permute.xlu0 %653
        %655 = vrot.lane.b32.xlu0 %v542, 33
        %v656 = vpop.permute.xlu0 %655
        %657 = vrot.lane.b32.xlu0 %v543, 33
        %v658 = vpop.permute.xlu0 %657
        %659 = vrot.lane.b32.xlu0 %v544, 33
        %v660 = vpop.permute.xlu0 %659
        %661 = vrot.lane.b32.xlu0 %v545, 33
        %v662 = vpop.permute.xlu0 %661
        %663 = vrot.lane.b32.xlu0 %v546, 33
        %v664 = vpop.permute.xlu0 %663
        %665 = vrot.lane.b32.xlu0 %v547, 33
        %v666 = vpop.permute.xlu0 %665
        %667 = vrot.lane.b32.xlu0 %v548, 33
        %v668 = vpop.permute.xlu0 %667
        %vm669 = vcmask 269312
        %v670 = vsel %vm669, %v638, %v640
        %v671 = vsel %vm669, %v640, %v642
        %v672 = vsel %vm669, %v642, %v644
        %v673 = vsel %vm669, %v646, %v648
        %v674 = vsel %vm669, %v648, %v650
        %v675 = vsel %vm669, %v650, %v652
        %v676 = vsel %vm669, %v654, %v656
        %v677 = vsel %vm669, %v656, %v658
        %v678 = vsel %vm669, %v658, %v660
        %v679 = vsel %vm669, %v662, %v664
        %v680 = vsel %vm669, %v664, %v666
        %v681 = vsel %vm669, %v666, %v668
        %706 = vrot.lane.b32.xlu0 %v601, 33
        %v707 = vpop.permute.xlu0 %706
        %708 = vrot.lane.b32.xlu0 %v602, 33
        %v709 = vpop.permute.xlu0 %708
        %710 = vrot.lane.b32.xlu0 %v603, 33
        %v711 = vpop.permute.xlu0 %710
        %712 = vrot.lane.b32.xlu0 %v604, 33
        %v713 = vpop.permute.xlu0 %712
        %vm718 = vcmask 7168
        %v719 = vsel %vm718, 0.0, %v610
        %v720 = vsel %vm718, 0.0, %v612
        %v721 = vsel %vm718, 0.0, %v614
        %v722 = vsel %vm718, 0.0, %v616
        %v723 = vsel %vm669, %v719, %v638
        %v724 = vsel %vm669, %v720, %v646
        %v725 = vsel %vm669, %v721, %v654
        %v726 = vsel %vm669, %v722, %v662
        %v727 = vsel %vm669, %v644, %v707
        %v728 = vsel %vm669, %v652, %v709
        %v729 = vsel %vm669, %v660, %v711
        %v730 = vsel %vm669, %v668, %v713
        %vm731 = vcmask 531456
        %v732 = vsel %vm731, %v727, 0.0
        %v733 = vsel %vm731, %v728, 0.0
        %v734 = vsel %vm731, %v729, 0.0
        %v735 = vsel %vm731, %v730, 0.0
        %v736 = vlaneseq
        %v737 = vand.u32 %v736, 127
        %v738 = vadd.s32 %v737, 128
        %v739 = vadd.s32 %v737, 256
        %v740 = vadd.s32 %v737, 384
        %vm741 = vcmp.lt.s32.totalorder %v737, 0
        %v742 = vsub.s32 0, %v737
        %v743 = vsel %vm741, %v742, %v737
        %v744 = vshrl.u32 %v743, 5
        %v745 = vand.u32 %v743, 31
        %v746 = vsub.s32 0, %v745
        %v747 = vsel %vm741, %v746, %v745
        %vm748 = vcmp.lt.s32.totalorder %v738, 0
        %v749 = vsub.s32 0, %v738
        %v750 = vsel %vm748, %v749, %v738
        %v751 = vshrl.u32 %v750, 5
        %v752 = vand.u32 %v750, 31
        %v753 = vsub.s32 0, %v752
        %v754 = vsel %vm748, %v753, %v752
        %vm755 = vcmp.lt.s32.totalorder %v739, 0
        %v756 = vsub.s32 0, %v739
        %v757 = vsel %vm755, %v756, %v739
        %v758 = vshrl.u32 %v757, 5
        %v759 = vand.u32 %v757, 31
        %v760 = vsub.s32 0, %v759
        %v761 = vsel %vm755, %v760, %v759
        %vm762 = vcmp.lt.s32.totalorder %v740, 0
        %v763 = vsub.s32 0, %v740
        %v764 = vsel %vm762, %v763, %v740
        %v765 = vshrl.u32 %v764, 5
        %v766 = vand.u32 %v764, 31
        %v767 = vsub.s32 0, %v766
        %v768 = vsel %vm762, %v767, %v766
        %vm769 = vcmp.ne.s32.totalorder %v747, 0
        %vm770 = vcmp.ne.s32.totalorder %v754, 0
        %vm771 = vcmp.ne.s32.totalorder %v761, 0
        %vm772 = vcmp.ne.s32.totalorder %v768, 0
        %vm773 = vcmp.lt.s32.totalorder %v747, 0
        %vm774 = vcmp.lt.s32.totalorder %v754, 0
        %vm775 = vcmp.lt.s32.totalorder %v761, 0
        %vm776 = vcmp.lt.s32.totalorder %v768, 0
        %vm777 = vmand %vm773, %vm769
        %vm778 = vmand %vm774, %vm770
        %vm779 = vmand %vm775, %vm771
        %vm780 = vmand %vm776, %vm772
        %v781 = vadd.s32 %v747, 32
        %v782 = vadd.s32 %v754, 32
        %v783 = vadd.s32 %v761, 32
        %v784 = vadd.s32 %v768, 32
        %v785 = vsel %vm777, %v781, %v747
        %v786 = vsel %vm778, %v782, %v754
        %v787 = vsel %vm779, %v783, %v761
        %v788 = vsel %vm780, %v784, %v768
        %vm789 = vcmp.gt.s32.totalorder %v785, 0
        %vm790 = vcmp.gt.s32.totalorder %v786, 0
        %vm791 = vcmp.gt.s32.totalorder %v787, 0
        %vm792 = vcmp.gt.s32.totalorder %v788, 0
        %vm793 = vcmp.lt.s32.totalorder %v785, 31
        %vm794 = vcmp.lt.s32.totalorder %v786, 31
        %vm795 = vcmp.lt.s32.totalorder %v787, 31
        %vm796 = vcmp.lt.s32.totalorder %v788, 31
        %v797 = vld [vmem:[%s5] sm:$0xff]
        %v798 = vld [vmem:[%s5 + $0x8] sm:$0xf]
        %v799 = vsel %vm789, 1, 0
        %v800 = vsel %vm790, 1, 0
        %v801 = vsel %vm791, 1, 0
        %v802 = vsel %vm792, 1, 0
        %vm803 = vcmp.eq.s32.totalorder %v799, 1
        %vm804 = vcmp.eq.s32.totalorder %v800, 1
        %vm805 = vcmp.eq.s32.totalorder %v801, 1
        %vm806 = vcmp.eq.s32.totalorder %v802, 1
        %v807 = vsel %vm803, %v723, 0.0
        %v808 = vsel %vm804, %v670, 0.0
        %v809 = vsel %vm805, %v671, 0.0
        %v810 = vsel %vm806, %v672, 0.0
        %v811 = vsel %vm803, %v724, 0.0
        %v812 = vsel %vm804, %v673, 0.0
        %v813 = vsel %vm805, %v674, 0.0
        %v814 = vsel %vm806, %v675, 0.0
        %v815 = vsel %vm803, %v725, 0.0
        %v816 = vsel %vm804, %v676, 0.0
        %v817 = vsel %vm805, %v677, 0.0
        %v818 = vsel %vm806, %v678, 0.0
        %v819 = vsel %vm803, %v726, 0.0
        %v820 = vsel %vm804, %v679, 0.0
        %v821 = vsel %vm805, %v680, 0.0
        %v822 = vsel %vm806, %v681, 0.0
        %v823 = vpack.c.bf16 %v811, %v807
        %v824 = vpack.c.bf16 %v812, %v808
        %v825 = vpack.c.bf16 %v813, %v809
        %v826 = vpack.c.bf16 %v814, %v810
        %v827 = vpack.c.bf16 %v819, %v815
        %v828 = vpack.c.bf16 %v820, %v816
        %v829 = vpack.c.bf16 %v821, %v817
        %v830 = vpack.c.bf16 %v822, %v818
        %v831 = vpack.c.bf16 %v724, %v723
        %v832 = vpack.c.bf16 %v673, %v670
        %v833 = vpack.c.bf16 %v674, %v671
        %v834 = vpack.c.bf16 %v675, %v672
        %v835 = vpack.c.bf16 %v733, %v732
        %v836 = vpack.c.bf16 %v726, %v725
        %v837 = vpack.c.bf16 %v679, %v676
        %v838 = vpack.c.bf16 %v680, %v677
        %v839 = vpack.c.bf16 %v681, %v678
        %v840 = vpack.c.bf16 %v735, %v734
        %v842 = vunpack.c.l.b16 %v797
        %v843 = vpack.c.b16 %v842, %v842
        %844 = vrot.lane.b32.xlu0 %v843, 96
        %v845 = vpop.permute.xlu0 %844
        %856 = vrot.lane.b32.xlu0 %v831, 127
        %v857 = vpop.permute.xlu0 %856
        %858 = vrot.lane.b32.xlu0 %v832, 127
        %v859 = vpop.permute.xlu0 %858
        %860 = vrot.lane.b32.xlu0 %v833, 127
        %v861 = vpop.permute.xlu0 %860
        %862 = vrot.lane.b32.xlu0 %v834, 127
        %v863 = vpop.permute.xlu0 %862
        %864 = vrot.lane.b32.xlu0 %v835, 127
        %v865 = vpop.permute.xlu0 %864
        %866 = vrot.lane.b32.xlu0 %v836, 127
        %v867 = vpop.permute.xlu0 %866
        %868 = vrot.lane.b32.xlu0 %v837, 127
        %v869 = vpop.permute.xlu0 %868
        %870 = vrot.lane.b32.xlu0 %v838, 127
        %v871 = vpop.permute.xlu0 %870
        %872 = vrot.lane.b32.xlu0 %v839, 127
        %v873 = vpop.permute.xlu0 %872
        %874 = vrot.lane.b32.xlu0 %v840, 127
        %v875 = vpop.permute.xlu0 %874
        %vm876 = vcmask 1039360
        %v877 = vsel %vm876, %v857, %v859
        %v878 = vsel %vm876, %v859, %v861
        %v879 = vsel %vm876, %v861, %v863
        %v880 = vsel %vm876, %v863, %v865
        %v881 = vsel %vm876, %v867, %v869
        %v882 = vsel %vm876, %v869, %v871
        %v883 = vsel %vm876, %v871, %v873
        %v884 = vsel %vm876, %v873, %v875
        %vm893 = vcmask 261120
        %v895 = vsel %vm893, %v845, 0
        %897 = vmatprep.subr.bf16.mxu0 0
        %898 = vmatpush1.bf16.msra.mxu0 0
        %899 = vmatprep.subr.bf16.mxu0 0
        %900 = vmatpush1.bf16.msra.mxu0 0
        %901 = vmatprep.subr.bf16.mxu0 0
        %902 = vmatpush1.bf16.msra.mxu0 0
        %903 = vmatprep.subr.bf16.mxu0 0
        %904 = vmatpush1.bf16.msra.mxu0 0
        %905 = vmatprep.subr.bf16.mxu0 0
        %906 = vmatpush1.bf16.msra.mxu0 0
        %907 = vmatprep.subr.bf16.mxu0 0
        %908 = vmatpush1.bf16.msra.mxu0 0
        %909 = vmatprep.subr.bf16.mxu0 %v882
        %910 = vmatpush1.bf16.msra.mxu0 %v881
        %911 = vmatprep.subr.bf16.mxu0 %v878
        %912 = vmatpush1.bf16.msra.mxu0 %v877
        %913 = vmatprep.subr.bf16.mxu0 0
        %914 = vmatpush2.bf16.msra.mxu0 0
        %915 = vmatprep.subr.bf16.mxu0 0
        %916 = vmatpush2.bf16.msra.mxu0 0
        %917 = vmatprep.subr.bf16.mxu0 0
        %918 = vmatpush2.bf16.msra.mxu0 0
        %919 = vmatprep.subr.bf16.mxu0 0
        %920 = vmatpush2.bf16.msra.mxu0 0
        %921 = vmatprep.subr.bf16.mxu0 0
        %922 = vmatpush2.bf16.msra.mxu0 0
        %923 = vmatprep.subr.bf16.mxu0 0
        %924 = vmatpush2.bf16.msra.mxu0 0
        %925 = vmatprep.subr.bf16.mxu0 0
        %926 = vmatpush2.bf16.msra.mxu0 0
        %927 = vmatprep.subr.bf16.mxu0 0
        %928 = vmatpush2.bf16.msra.mxu0 0
        %929 = vmatprep.mubr.bf16.mxu0 0
        %930 = vmatmul.mubr.bf16.gmra.mxu0 %v895
        %v931 = vpop.f32.mrf.mxu0
        %v932 = vadd.f32 0.0, %v931
        %v933 = vpop.f32.mrf.mxu0
        %v934 = vadd.f32 0.0, %v933
        %v935 = vpop.f32.mrf.mxu0
        %v936 = vpop.f32.mrf.mxu0
        %937 = vdwg.mxu0
        %938 = vmatprep.subr.bf16.mxu0 0
        %939 = vmatpush1.bf16.msra.mxu0 0
        %940 = vmatprep.subr.bf16.mxu0 0
        %941 = vmatpush1.bf16.msra.mxu0 0
        %942 = vmatprep.subr.bf16.mxu0 0
        %943 = vmatpush1.bf16.msra.mxu0 0
        %944 = vmatprep.subr.bf16.mxu0 0
        %945 = vmatpush1.bf16.msra.mxu0 0
        %946 = vmatprep.subr.bf16.mxu0 0
        %947 = vmatpush1.bf16.msra.mxu0 0
        %948 = vmatprep.subr.bf16.mxu0 0
        %949 = vmatpush1.bf16.msra.mxu0 0
        %950 = vmatprep.subr.bf16.mxu0 %v884
        %951 = vmatpush1.bf16.msra.mxu0 %v883
        %952 = vmatprep.subr.bf16.mxu0 %v880
        %953 = vmatpush1.bf16.msra.mxu0 %v879
        %954 = vmatprep.subr.bf16.mxu0 0
        %955 = vmatpush2.bf16.msra.mxu0 0
        %956 = vmatprep.subr.bf16.mxu0 0
        %957 = vmatpush2.bf16.msra.mxu0 0
        %958 = vmatprep.subr.bf16.mxu0 0
        %959 = vmatpush2.bf16.msra.mxu0 0
        %960 = vmatprep.subr.bf16.mxu0 0
        %961 = vmatpush2.bf16.msra.mxu0 0
        %962 = vmatprep.subr.bf16.mxu0 0
        %963 = vmatpush2.bf16.msra.mxu0 0
        %964 = vmatprep.subr.bf16.mxu0 0
        %965 = vmatpush2.bf16.msra.mxu0 0
        %966 = vmatprep.subr.bf16.mxu0 0
        %967 = vmatpush2.bf16.msra.mxu0 0
        %968 = vmatprep.subr.bf16.mxu0 0
        %969 = vmatpush2.bf16.msra.mxu0 0
        %970 = vmatprep.mubr.bf16.mxu0 0
        %971 = vmatmul.mubr.bf16.gmra.mxu0 %v895
        %v972 = vpop.f32.mrf.mxu0
        %v973 = vadd.f32 0.0, %v972
        %v974 = vpop.f32.mrf.mxu0
        %v975 = vadd.f32 0.0, %v974
        %v976 = vpop.f32.mrf.mxu0
        %v977 = vpop.f32.mrf.mxu0
        %978 = vdwg.mxu0
        %v980 = vsel %vm893, %v797, 0
        %982 = vmatprep.subr.bf16.mxu0 0
        %983 = vmatpush1.bf16.msra.mxu0 0
        %984 = vmatprep.subr.bf16.mxu0 0
        %985 = vmatpush1.bf16.msra.mxu0 0
        %986 = vmatprep.subr.bf16.mxu0 0
        %987 = vmatpush1.bf16.msra.mxu0 0
        %988 = vmatprep.subr.bf16.mxu0 0
        %989 = vmatpush1.bf16.msra.mxu0 0
        %990 = vmatprep.subr.bf16.mxu0 0
        %991 = vmatpush1.bf16.msra.mxu0 0
        %992 = vmatprep.subr.bf16.mxu0 0
        %993 = vmatpush1.bf16.msra.mxu0 0
        %994 = vmatprep.subr.bf16.mxu0 %v828
        %995 = vmatpush1.bf16.msra.mxu0 %v827
        %996 = vmatprep.subr.bf16.mxu0 %v824
        %997 = vmatpush1.bf16.msra.mxu0 %v823
        %998 = vmatprep.subr.bf16.mxu0 0
        %999 = vmatpush2.bf16.msra.mxu0 0
        %1000 = vmatprep.subr.bf16.mxu0 0
        %1001 = vmatpush2.bf16.msra.mxu0 0
        %1002 = vmatprep.subr.bf16.mxu0 0
        %1003 = vmatpush2.bf16.msra.mxu0 0
        %1004 = vmatprep.subr.bf16.mxu0 0
        %1005 = vmatpush2.bf16.msra.mxu0 0
        %1006 = vmatprep.subr.bf16.mxu0 0
        %1007 = vmatpush2.bf16.msra.mxu0 0
        %1008 = vmatprep.subr.bf16.mxu0 0
        %1009 = vmatpush2.bf16.msra.mxu0 0
        %1010 = vmatprep.subr.bf16.mxu0 0
        %1011 = vmatpush2.bf16.msra.mxu0 0
        %1012 = vmatprep.subr.bf16.mxu0 0
        %1013 = vmatpush2.bf16.msra.mxu0 0
        %1014 = vmatprep.mubr.bf16.mxu0 0
        %1015 = vmatmul.mubr.bf16.gmra.mxu0 %v980
        %v1016 = vpop.f32.mrf.mxu0
        %v1017 = vadd.f32 %v932, %v1016
        %v1018 = vpop.f32.mrf.mxu0
        %v1019 = vadd.f32 %v934, %v1018
        %v1020 = vpop.f32.mrf.mxu0
        %v1021 = vpop.f32.mrf.mxu0
        %1022 = vdwg.mxu0
        %1023 = vmatprep.subr.bf16.mxu0 0
        %1024 = vmatpush1.bf16.msra.mxu0 0
        %1025 = vmatprep.subr.bf16.mxu0 0
        %1026 = vmatpush1.bf16.msra.mxu0 0
        %1027 = vmatprep.subr.bf16.mxu0 0
        %1028 = vmatpush1.bf16.msra.mxu0 0
        %1029 = vmatprep.subr.bf16.mxu0 0
        %1030 = vmatpush1.bf16.msra.mxu0 0
        %1031 = vmatprep.subr.bf16.mxu0 0
        %1032 = vmatpush1.bf16.msra.mxu0 0
        %1033 = vmatprep.subr.bf16.mxu0 0
        %1034 = vmatpush1.bf16.msra.mxu0 0
        %1035 = vmatprep.subr.bf16.mxu0 %v830
        %1036 = vmatpush1.bf16.msra.mxu0 %v829
        %1037 = vmatprep.subr.bf16.mxu0 %v826
        %1038 = vmatpush1.bf16.msra.mxu0 %v825
        %1039 = vmatprep.subr.bf16.mxu0 0
        %1040 = vmatpush2.bf16.msra.mxu0 0
        %1041 = vmatprep.subr.bf16.mxu0 0
        %1042 = vmatpush2.bf16.msra.mxu0 0
        %1043 = vmatprep.subr.bf16.mxu0 0
        %1044 = vmatpush2.bf16.msra.mxu0 0
        %1045 = vmatprep.subr.bf16.mxu0 0
        %1046 = vmatpush2.bf16.msra.mxu0 0
        %1047 = vmatprep.subr.bf16.mxu0 0
        %1048 = vmatpush2.bf16.msra.mxu0 0
        %1049 = vmatprep.subr.bf16.mxu0 0
        %1050 = vmatpush2.bf16.msra.mxu0 0
        %1051 = vmatprep.subr.bf16.mxu0 0
        %1052 = vmatpush2.bf16.msra.mxu0 0
        %1053 = vmatprep.subr.bf16.mxu0 0
        %1054 = vmatpush2.bf16.msra.mxu0 0
        %1055 = vmatprep.mubr.bf16.mxu0 0
        %1056 = vmatmul.mubr.bf16.gmra.mxu0 %v980
        %v1057 = vpop.f32.mrf.mxu0
        %v1058 = vadd.f32 %v973, %v1057
        %v1059 = vpop.f32.mrf.mxu0
        %v1060 = vadd.f32 %v975, %v1059
        %v1061 = vpop.f32.mrf.mxu0
        %v1062 = vpop.f32.mrf.mxu0
        %1063 = vdwg.mxu0
        %v1064 = vsel %vm793, 1, 0
        %v1065 = vsel %vm794, 1, 0
        %v1066 = vsel %vm795, 1, 0
        %v1067 = vsel %vm796, 1, 0
        %vm1068 = vcmp.eq.s32.totalorder %v1064, 1
        %vm1069 = vcmp.eq.s32.totalorder %v1065, 1
        %vm1070 = vcmp.eq.s32.totalorder %v1066, 1
        %vm1071 = vcmp.eq.s32.totalorder %v1067, 1
        %1080 = vrot.lane.b32.xlu0 %v723, 126
        %v1081 = vpop.permute.xlu0 %1080
        %1082 = vrot.lane.b32.xlu0 %v670, 126
        %v1083 = vpop.permute.xlu0 %1082
        %1084 = vrot.lane.b32.xlu0 %v671, 126
        %v1085 = vpop.permute.xlu0 %1084
        %1086 = vrot.lane.b32.xlu0 %v672, 126
        %v1087 = vpop.permute.xlu0 %1086
        %1088 = vrot.lane.b32.xlu0 %v732, 126
        %v1089 = vpop.permute.xlu0 %1088
        %1090 = vrot.lane.b32.xlu0 %v724, 126
        %v1091 = vpop.permute.xlu0 %1090
        %1092 = vrot.lane.b32.xlu0 %v673, 126
        %v1093 = vpop.permute.xlu0 %1092
        %1094 = vrot.lane.b32.xlu0 %v674, 126
        %v1095 = vpop.permute.xlu0 %1094
        %1096 = vrot.lane.b32.xlu0 %v675, 126
        %v1097 = vpop.permute.xlu0 %1096
        %1098 = vrot.lane.b32.xlu0 %v733, 126
        %v1099 = vpop.permute.xlu0 %1098
        %1100 = vrot.lane.b32.xlu0 %v725, 126
        %v1101 = vpop.permute.xlu0 %1100
        %1102 = vrot.lane.b32.xlu0 %v676, 126
        %v1103 = vpop.permute.xlu0 %1102
        %1104 = vrot.lane.b32.xlu0 %v677, 126
        %v1105 = vpop.permute.xlu0 %1104
        %1106 = vrot.lane.b32.xlu0 %v678, 126
        %v1107 = vpop.permute.xlu0 %1106
        %1108 = vrot.lane.b32.xlu0 %v734, 126
        %v1109 = vpop.permute.xlu0 %1108
        %1110 = vrot.lane.b32.xlu0 %v726, 126
        %v1111 = vpop.permute.xlu0 %1110
        %1112 = vrot.lane.b32.xlu0 %v679, 126
        %v1113 = vpop.permute.xlu0 %1112
        %1114 = vrot.lane.b32.xlu0 %v680, 126
        %v1115 = vpop.permute.xlu0 %1114
        %1116 = vrot.lane.b32.xlu0 %v681, 126
        %v1117 = vpop.permute.xlu0 %1116
        %1118 = vrot.lane.b32.xlu0 %v735, 126
        %v1119 = vpop.permute.xlu0 %1118
        %vm1120 = vcmask 1031168
        %v1121 = vsel %vm1120, %v1081, %v1083
        %v1122 = vsel %vm1120, %v1083, %v1085
        %v1123 = vsel %vm1120, %v1085, %v1087
        %v1124 = vsel %vm1120, %v1087, %v1089
        %v1125 = vsel %vm1120, %v1091, %v1093
        %v1126 = vsel %vm1120, %v1093, %v1095
        %v1127 = vsel %vm1120, %v1095, %v1097
        %v1128 = vsel %vm1120, %v1097, %v1099
        %v1129 = vsel %vm1120, %v1101, %v1103
        %v1130 = vsel %vm1120, %v1103, %v1105
        %v1131 = vsel %vm1120, %v1105, %v1107
        %v1132 = vsel %vm1120, %v1107, %v1109
        %v1133 = vsel %vm1120, %v1111, %v1113
        %v1134 = vsel %vm1120, %v1113, %v1115
        %v1135 = vsel %vm1120, %v1115, %v1117
        %v1136 = vsel %vm1120, %v1117, %v1119
        %v1153 = vsel %vm1068, %v1121, 0.0
        %v1154 = vsel %vm1069, %v1122, 0.0
        %v1155 = vsel %vm1070, %v1123, 0.0
        %v1156 = vsel %vm1071, %v1124, 0.0
        %v1157 = vsel %vm1068, %v1125, 0.0
        %v1158 = vsel %vm1069, %v1126, 0.0
        %v1159 = vsel %vm1070, %v1127, 0.0
        %v1160 = vsel %vm1071, %v1128, 0.0
        %v1161 = vsel %vm1068, %v1129, 0.0
        %v1162 = vsel %vm1069, %v1130, 0.0
        %v1163 = vsel %vm1070, %v1131, 0.0
        %v1164 = vsel %vm1071, %v1132, 0.0
        %v1165 = vsel %vm1068, %v1133, 0.0
        %v1166 = vsel %vm1069, %v1134, 0.0
        %v1167 = vsel %vm1070, %v1135, 0.0
        %v1168 = vsel %vm1071, %v1136, 0.0
        %v1169 = vpack.c.bf16 %v1157, %v1153
        %v1170 = vpack.c.bf16 %v1158, %v1154
        %v1171 = vpack.c.bf16 %v1159, %v1155
        %v1172 = vpack.c.bf16 %v1160, %v1156
        %v1173 = vpack.c.bf16 %v1165, %v1161
        %v1174 = vpack.c.bf16 %v1166, %v1162
        %v1175 = vpack.c.bf16 %v1167, %v1163
        %v1176 = vpack.c.bf16 %v1168, %v1164
        %1177 = vrot.lane.b32.xlu0 %v843, 64
        %v1178 = vpop.permute.xlu0 %1177
        %v1180 = vsel %vm893, %v1178, 0
        %1182 = vmatprep.subr.bf16.mxu0 0
        %1183 = vmatpush1.bf16.msra.mxu0 0
        %1184 = vmatprep.subr.bf16.mxu0 0
        %1185 = vmatpush1.bf16.msra.mxu0 0
        %1186 = vmatprep.subr.bf16.mxu0 0
        %1187 = vmatpush1.bf16.msra.mxu0 0
        %1188 = vmatprep.subr.bf16.mxu0 0
        %1189 = vmatpush1.bf16.msra.mxu0 0
        %1190 = vmatprep.subr.bf16.mxu0 0
        %1191 = vmatpush1.bf16.msra.mxu0 0
        %1192 = vmatprep.subr.bf16.mxu0 0
        %1193 = vmatpush1.bf16.msra.mxu0 0
        %1194 = vmatprep.subr.bf16.mxu0 %v1174
        %1195 = vmatpush1.bf16.msra.mxu0 %v1173
        %1196 = vmatprep.subr.bf16.mxu0 %v1170
        %1197 = vmatpush1.bf16.msra.mxu0 %v1169
        %1198 = vmatprep.subr.bf16.mxu0 0
        %1199 = vmatpush2.bf16.msra.mxu0 0
        %1200 = vmatprep.subr.bf16.mxu0 0
        %1201 = vmatpush2.bf16.msra.mxu0 0
        %1202 = vmatprep.subr.bf16.mxu0 0
        %1203 = vmatpush2.bf16.msra.mxu0 0
        %1204 = vmatprep.subr.bf16.mxu0 0
        %1205 = vmatpush2.bf16.msra.mxu0 0
        %1206 = vmatprep.subr.bf16.mxu0 0
        %1207 = vmatpush2.bf16.msra.mxu0 0
        %1208 = vmatprep.subr.bf16.mxu0 0
        %1209 = vmatpush2.bf16.msra.mxu0 0
        %1210 = vmatprep.subr.bf16.mxu0 0
        %1211 = vmatpush2.bf16.msra.mxu0 0
        %1212 = vmatprep.subr.bf16.mxu0 0
        %1213 = vmatpush2.bf16.msra.mxu0 0
        %1214 = vmatprep.mubr.bf16.mxu0 0
        %1215 = vmatmul.mubr.bf16.gmra.mxu0 %v1180
        %v1216 = vpop.f32.mrf.mxu0
        %v1217 = vadd.f32 0.0, %v1216
        %v1218 = vpop.f32.mrf.mxu0
        %v1219 = vadd.f32 0.0, %v1218
        %v1220 = vpop.f32.mrf.mxu0
        %v1221 = vpop.f32.mrf.mxu0
        %1222 = vdwg.mxu0
        %1223 = vmatprep.subr.bf16.mxu0 0
        %1224 = vmatpush1.bf16.msra.mxu0 0
        %1225 = vmatprep.subr.bf16.mxu0 0
        %1226 = vmatpush1.bf16.msra.mxu0 0
        %1227 = vmatprep.subr.bf16.mxu0 0
        %1228 = vmatpush1.bf16.msra.mxu0 0
        %1229 = vmatprep.subr.bf16.mxu0 0
        %1230 = vmatpush1.bf16.msra.mxu0 0
        %1231 = vmatprep.subr.bf16.mxu0 0
        %1232 = vmatpush1.bf16.msra.mxu0 0
        %1233 = vmatprep.subr.bf16.mxu0 0
        %1234 = vmatpush1.bf16.msra.mxu0 0
        %1235 = vmatprep.subr.bf16.mxu0 %v1176
        %1236 = vmatpush1.bf16.msra.mxu0 %v1175
        %1237 = vmatprep.subr.bf16.mxu0 %v1172
        %1238 = vmatpush1.bf16.msra.mxu0 %v1171
        %1239 = vmatprep.subr.bf16.mxu0 0
        %1240 = vmatpush2.bf16.msra.mxu0 0
        %1241 = vmatprep.subr.bf16.mxu0 0
        %1242 = vmatpush2.bf16.msra.mxu0 0
        %1243 = vmatprep.subr.bf16.mxu0 0
        %1244 = vmatpush2.bf16.msra.mxu0 0
        %1245 = vmatprep.subr.bf16.mxu0 0
        %1246 = vmatpush2.bf16.msra.mxu0 0
        %1247 = vmatprep.subr.bf16.mxu0 0
        %1248 = vmatpush2.bf16.msra.mxu0 0
        %1249 = vmatprep.subr.bf16.mxu0 0
        %1250 = vmatpush2.bf16.msra.mxu0 0
        %1251 = vmatprep.subr.bf16.mxu0 0
        %1252 = vmatpush2.bf16.msra.mxu0 0
        %1253 = vmatprep.subr.bf16.mxu0 0
        %1254 = vmatpush2.bf16.msra.mxu0 0
        %1255 = vmatprep.mubr.bf16.mxu0 0
        %1256 = vmatmul.mubr.bf16.gmra.mxu0 %v1180
        %v1257 = vpop.f32.mrf.mxu0
        %v1258 = vadd.f32 0.0, %v1257
        %v1259 = vpop.f32.mrf.mxu0
        %v1260 = vadd.f32 0.0, %v1259
        %v1261 = vpop.f32.mrf.mxu0
        %v1262 = vpop.f32.mrf.mxu0
        %1263 = vdwg.mxu0
        %v1264 = vadd.f32 %v1017, %v1217
        %v1265 = vadd.f32 %v1019, %v1219
        %v1266 = vadd.f32 %v1058, %v1258
        %v1267 = vadd.f32 %v1060, %v1260
        %1268 = vrot.lane.b32.xlu0 %v723, 96
        %v1269 = vpop.permute.xlu0 %1268
        %1270 = vrot.lane.b32.xlu0 %v670, 96
        %v1271 = vpop.permute.xlu0 %1270
        %1272 = vrot.lane.b32.xlu0 %v671, 96
        %v1273 = vpop.permute.xlu0 %1272
        %1274 = vrot.lane.b32.xlu0 %v672, 96
        %v1275 = vpop.permute.xlu0 %1274
        %1276 = vrot.lane.b32.xlu0 %v732, 96
        %v1277 = vpop.permute.xlu0 %1276
        %1278 = vrot.lane.b32.xlu0 %v724, 96
        %v1279 = vpop.permute.xlu0 %1278
        %1280 = vrot.lane.b32.xlu0 %v673, 96
        %v1281 = vpop.permute.xlu0 %1280
        %1282 = vrot.lane.b32.xlu0 %v674, 96
        %v1283 = vpop.permute.xlu0 %1282
        %1284 = vrot.lane.b32.xlu0 %v675, 96
        %v1285 = vpop.permute.xlu0 %1284
        %1286 = vrot.lane.b32.xlu0 %v733, 96
        %v1287 = vpop.permute.xlu0 %1286
        %1288 = vrot.lane.b32.xlu0 %v725, 96
        %v1289 = vpop.permute.xlu0 %1288
        %1290 = vrot.lane.b32.xlu0 %v676, 96
        %v1291 = vpop.permute.xlu0 %1290
        %1292 = vrot.lane.b32.xlu0 %v677, 96
        %v1293 = vpop.permute.xlu0 %1292
        %1294 = vrot.lane.b32.xlu0 %v678, 96
        %v1295 = vpop.permute.xlu0 %1294
        %1296 = vrot.lane.b32.xlu0 %v734, 96
        %v1297 = vpop.permute.xlu0 %1296
        %1298 = vrot.lane.b32.xlu0 %v726, 96
        %v1299 = vpop.permute.xlu0 %1298
        %1300 = vrot.lane.b32.xlu0 %v679, 96
        %v1301 = vpop.permute.xlu0 %1300
        %1302 = vrot.lane.b32.xlu0 %v680, 96
        %v1303 = vpop.permute.xlu0 %1302
        %1304 = vrot.lane.b32.xlu0 %v681, 96
        %v1305 = vpop.permute.xlu0 %1304
        %1306 = vrot.lane.b32.xlu0 %v735, 96
        %v1307 = vpop.permute.xlu0 %1306
        %vm1308 = vcmask 785408
        %v1309 = vsel %vm1308, %v1269, %v1271
        %v1310 = vsel %vm1308, %v1271, %v1273
        %v1311 = vsel %vm1308, %v1273, %v1275
        %v1312 = vsel %vm1308, %v1275, %v1277
        %v1313 = vsel %vm1308, %v1279, %v1281
        %v1314 = vsel %vm1308, %v1281, %v1283
        %v1315 = vsel %vm1308, %v1283, %v1285
        %v1316 = vsel %vm1308, %v1285, %v1287
        %v1317 = vsel %vm1308, %v1289, %v1291
        %v1318 = vsel %vm1308, %v1291, %v1293
        %v1319 = vsel %vm1308, %v1293, %v1295
        %v1320 = vsel %vm1308, %v1295, %v1297
        %v1321 = vsel %vm1308, %v1299, %v1301
        %v1322 = vsel %vm1308, %v1301, %v1303
        %v1323 = vsel %vm1308, %v1303, %v1305
        %v1324 = vsel %vm1308, %v1305, %v1307
        %v1341 = vsel %vm803, %v1309, 0.0
        %v1342 = vsel %vm804, %v1310, 0.0
        %v1343 = vsel %vm805, %v1311, 0.0
        %v1344 = vsel %vm806, %v1312, 0.0
        %v1345 = vsel %vm803, %v1313, 0.0
        %v1346 = vsel %vm804, %v1314, 0.0
        %v1347 = vsel %vm805, %v1315, 0.0
        %v1348 = vsel %vm806, %v1316, 0.0
        %v1349 = vsel %vm803, %v1317, 0.0
        %v1350 = vsel %vm804, %v1318, 0.0
        %v1351 = vsel %vm805, %v1319, 0.0
        %v1352 = vsel %vm806, %v1320, 0.0
        %v1353 = vsel %vm803, %v1321, 0.0
        %v1354 = vsel %vm804, %v1322, 0.0
        %v1355 = vsel %vm805, %v1323, 0.0
        %v1356 = vsel %vm806, %v1324, 0.0
        %v1357 = vpack.c.bf16 %v1345, %v1341
        %v1358 = vpack.c.bf16 %v1346, %v1342
        %v1359 = vpack.c.bf16 %v1347, %v1343
        %v1360 = vpack.c.bf16 %v1348, %v1344
        %v1361 = vpack.c.bf16 %v1353, %v1349
        %v1362 = vpack.c.bf16 %v1354, %v1350
        %v1363 = vpack.c.bf16 %v1355, %v1351
        %v1364 = vpack.c.bf16 %v1356, %v1352
        %1365 = vrot.lane.b32.xlu0 %v843, 32
        %v1366 = vpop.permute.xlu0 %1365
        %v1368 = vsel %vm893, %v1366, 0
        %1370 = vmatprep.subr.bf16.mxu0 0
        %1371 = vmatpush1.bf16.msra.mxu0 0
        %1372 = vmatprep.subr.bf16.mxu0 0
        %1373 = vmatpush1.bf16.msra.mxu0 0
        %1374 = vmatprep.subr.bf16.mxu0 0
        %1375 = vmatpush1.bf16.msra.mxu0 0
        %1376 = vmatprep.subr.bf16.mxu0 0
        %1377 = vmatpush1.bf16.msra.mxu0 0
        %1378 = vmatprep.subr.bf16.mxu0 0
        %1379 = vmatpush1.bf16.msra.mxu0 0
        %1380 = vmatprep.subr.bf16.mxu0 0
        %1381 = vmatpush1.bf16.msra.mxu0 0
        %1382 = vmatprep.subr.bf16.mxu0 %v1362
        %1383 = vmatpush1.bf16.msra.mxu0 %v1361
        %1384 = vmatprep.subr.bf16.mxu0 %v1358
        %1385 = vmatpush1.bf16.msra.mxu0 %v1357
        %1386 = vmatprep.subr.bf16.mxu0 0
        %1387 = vmatpush2.bf16.msra.mxu0 0
        %1388 = vmatprep.subr.bf16.mxu0 0
        %1389 = vmatpush2.bf16.msra.mxu0 0
        %1390 = vmatprep.subr.bf16.mxu0 0
        %1391 = vmatpush2.bf16.msra.mxu0 0
        %1392 = vmatprep.subr.bf16.mxu0 0
        %1393 = vmatpush2.bf16.msra.mxu0 0
        %1394 = vmatprep.subr.bf16.mxu0 0
        %1395 = vmatpush2.bf16.msra.mxu0 0
        %1396 = vmatprep.subr.bf16.mxu0 0
        %1397 = vmatpush2.bf16.msra.mxu0 0
        %1398 = vmatprep.subr.bf16.mxu0 0
        %1399 = vmatpush2.bf16.msra.mxu0 0
        %1400 = vmatprep.subr.bf16.mxu0 0
        %1401 = vmatpush2.bf16.msra.mxu0 0
        %1402 = vmatprep.mubr.bf16.mxu0 0
        %1403 = vmatmul.mubr.bf16.gmra.mxu0 %v1368
        %v1404 = vpop.f32.mrf.mxu0
        %v1405 = vadd.f32 0.0, %v1404
        %v1406 = vpop.f32.mrf.mxu0
        %v1407 = vadd.f32 0.0, %v1406
        %v1408 = vpop.f32.mrf.mxu0
        %v1409 = vpop.f32.mrf.mxu0
        %1410 = vdwg.mxu0
        %1411 = vmatprep.subr.bf16.mxu0 0
        %1412 = vmatpush1.bf16.msra.mxu0 0
        %1413 = vmatprep.subr.bf16.mxu0 0
        %1414 = vmatpush1.bf16.msra.mxu0 0
        %1415 = vmatprep.subr.bf16.mxu0 0
        %1416 = vmatpush1.bf16.msra.mxu0 0
        %1417 = vmatprep.subr.bf16.mxu0 0
        %1418 = vmatpush1.bf16.msra.mxu0 0
        %1419 = vmatprep.subr.bf16.mxu0 0
        %1420 = vmatpush1.bf16.msra.mxu0 0
        %1421 = vmatprep.subr.bf16.mxu0 0
        %1422 = vmatpush1.bf16.msra.mxu0 0
        %1423 = vmatprep.subr.bf16.mxu0 %v1364
        %1424 = vmatpush1.bf16.msra.mxu0 %v1363
        %1425 = vmatprep.subr.bf16.mxu0 %v1360
        %1426 = vmatpush1.bf16.msra.mxu0 %v1359
        %1427 = vmatprep.subr.bf16.mxu0 0
        %1428 = vmatpush2.bf16.msra.mxu0 0
        %1429 = vmatprep.subr.bf16.mxu0 0
        %1430 = vmatpush2.bf16.msra.mxu0 0
        %1431 = vmatprep.subr.bf16.mxu0 0
        %1432 = vmatpush2.bf16.msra.mxu0 0
        %1433 = vmatprep.subr.bf16.mxu0 0
        %1434 = vmatpush2.bf16.msra.mxu0 0
        %1435 = vmatprep.subr.bf16.mxu0 0
        %1436 = vmatpush2.bf16.msra.mxu0 0
        %1437 = vmatprep.subr.bf16.mxu0 0
        %1438 = vmatpush2.bf16.msra.mxu0 0
        %1439 = vmatprep.subr.bf16.mxu0 0
        %1440 = vmatpush2.bf16.msra.mxu0 0
        %1441 = vmatprep.subr.bf16.mxu0 0
        %1442 = vmatpush2.bf16.msra.mxu0 0
        %1443 = vmatprep.mubr.bf16.mxu0 0
        %1444 = vmatmul.mubr.bf16.gmra.mxu0 %v1368
        %v1445 = vpop.f32.mrf.mxu0
        %v1446 = vadd.f32 0.0, %v1445
        %v1447 = vpop.f32.mrf.mxu0
        %v1448 = vadd.f32 0.0, %v1447
        %v1449 = vpop.f32.mrf.mxu0
        %v1450 = vpop.f32.mrf.mxu0
        %1451 = vdwg.mxu0
        %v1452 = vadd.f32 %v1264, %v1405
        %v1453 = vadd.f32 %v1265, %v1407
        %v1454 = vadd.f32 %v1266, %v1446
        %v1455 = vadd.f32 %v1267, %v1448
        %v1456 = vunpack.c.h.b16 %v797
        %v1457 = vpack.c.b16 %v1456, %v1456
        %1458 = vrot.lane.b32.xlu0 %v831, 95
        %v1459 = vpop.permute.xlu0 %1458
        %1460 = vrot.lane.b32.xlu0 %v832, 95
        %v1461 = vpop.permute.xlu0 %1460
        %1462 = vrot.lane.b32.xlu0 %v833, 95
        %v1463 = vpop.permute.xlu0 %1462
        %1464 = vrot.lane.b32.xlu0 %v834, 95
        %v1465 = vpop.permute.xlu0 %1464
        %1466 = vrot.lane.b32.xlu0 %v835, 95
        %v1467 = vpop.permute.xlu0 %1466
        %1468 = vrot.lane.b32.xlu0 %v836, 95
        %v1469 = vpop.permute.xlu0 %1468
        %1470 = vrot.lane.b32.xlu0 %v837, 95
        %v1471 = vpop.permute.xlu0 %1470
        %1472 = vrot.lane.b32.xlu0 %v838, 95
        %v1473 = vpop.permute.xlu0 %1472
        %1474 = vrot.lane.b32.xlu0 %v839, 95
        %v1475 = vpop.permute.xlu0 %1474
        %1476 = vrot.lane.b32.xlu0 %v840, 95
        %v1477 = vpop.permute.xlu0 %1476
        %vm1478 = vcmask 777216
        %v1479 = vsel %vm1478, %v1459, %v1461
        %v1480 = vsel %vm1478, %v1461, %v1463
        %v1481 = vsel %vm1478, %v1463, %v1465
        %v1482 = vsel %vm1478, %v1465, %v1467
        %v1483 = vsel %vm1478, %v1469, %v1471
        %v1484 = vsel %vm1478, %v1471, %v1473
        %v1485 = vsel %vm1478, %v1473, %v1475
        %v1486 = vsel %vm1478, %v1475, %v1477
        %v1496 = vsel %vm893, %v1457, 0
        %1498 = vmatprep.subr.bf16.mxu0 0
        %1499 = vmatpush1.bf16.msra.mxu0 0
        %1500 = vmatprep.subr.bf16.mxu0 0
        %1501 = vmatpush1.bf16.msra.mxu0 0
        %1502 = vmatprep.subr.bf16.mxu0 0
        %1503 = vmatpush1.bf16.msra.mxu0 0
        %1504 = vmatprep.subr.bf16.mxu0 0
        %1505 = vmatpush1.bf16.msra.mxu0 0
        %1506 = vmatprep.subr.bf16.mxu0 0
        %1507 = vmatpush1.bf16.msra.mxu0 0
        %1508 = vmatprep.subr.bf16.mxu0 0
        %1509 = vmatpush1.bf16.msra.mxu0 0
        %1510 = vmatprep.subr.bf16.mxu0 %v1484
        %1511 = vmatpush1.bf16.msra.mxu0 %v1483
        %1512 = vmatprep.subr.bf16.mxu0 %v1480
        %1513 = vmatpush1.bf16.msra.mxu0 %v1479
        %1514 = vmatprep.subr.bf16.mxu0 0
        %1515 = vmatpush2.bf16.msra.mxu0 0
        %1516 = vmatprep.subr.bf16.mxu0 0
        %1517 = vmatpush2.bf16.msra.mxu0 0
        %1518 = vmatprep.subr.bf16.mxu0 0
        %1519 = vmatpush2.bf16.msra.mxu0 0
        %1520 = vmatprep.subr.bf16.mxu0 0
        %1521 = vmatpush2.bf16.msra.mxu0 0
        %1522 = vmatprep.subr.bf16.mxu0 0
        %1523 = vmatpush2.bf16.msra.mxu0 0
        %1524 = vmatprep.subr.bf16.mxu0 0
        %1525 = vmatpush2.bf16.msra.mxu0 0
        %1526 = vmatprep.subr.bf16.mxu0 0
        %1527 = vmatpush2.bf16.msra.mxu0 0
        %1528 = vmatprep.subr.bf16.mxu0 0
        %1529 = vmatpush2.bf16.msra.mxu0 0
        %1530 = vmatprep.mubr.bf16.mxu0 0
        %1531 = vmatmul.mubr.bf16.gmra.mxu0 %v1496
        %v1532 = vpop.f32.mrf.mxu0
        %v1533 = vadd.f32 0.0, %v1532
        %v1534 = vpop.f32.mrf.mxu0
        %v1535 = vadd.f32 0.0, %v1534
        %v1536 = vpop.f32.mrf.mxu0
        %v1537 = vpop.f32.mrf.mxu0
        %1538 = vdwg.mxu0
        %1539 = vmatprep.subr.bf16.mxu0 0
        %1540 = vmatpush1.bf16.msra.mxu0 0
        %1541 = vmatprep.subr.bf16.mxu0 0
        %1542 = vmatpush1.bf16.msra.mxu0 0
        %1543 = vmatprep.subr.bf16.mxu0 0
        %1544 = vmatpush1.bf16.msra.mxu0 0
        %1545 = vmatprep.subr.bf16.mxu0 0
        %1546 = vmatpush1.bf16.msra.mxu0 0
        %1547 = vmatprep.subr.bf16.mxu0 0
        %1548 = vmatpush1.bf16.msra.mxu0 0
        %1549 = vmatprep.subr.bf16.mxu0 0
        %1550 = vmatpush1.bf16.msra.mxu0 0
        %1551 = vmatprep.subr.bf16.mxu0 %v1486
        %1552 = vmatpush1.bf16.msra.mxu0 %v1485
        %1553 = vmatprep.subr.bf16.mxu0 %v1482
        %1554 = vmatpush1.bf16.msra.mxu0 %v1481
        %1555 = vmatprep.subr.bf16.mxu0 0
        %1556 = vmatpush2.bf16.msra.mxu0 0
        %1557 = vmatprep.subr.bf16.mxu0 0
        %1558 = vmatpush2.bf16.msra.mxu0 0
        %1559 = vmatprep.subr.bf16.mxu0 0
        %1560 = vmatpush2.bf16.msra.mxu0 0
        %1561 = vmatprep.subr.bf16.mxu0 0
        %1562 = vmatpush2.bf16.msra.mxu0 0
        %1563 = vmatprep.subr.bf16.mxu0 0
        %1564 = vmatpush2.bf16.msra.mxu0 0
        %1565 = vmatprep.subr.bf16.mxu0 0
        %1566 = vmatpush2.bf16.msra.mxu0 0
        %1567 = vmatprep.subr.bf16.mxu0 0
        %1568 = vmatpush2.bf16.msra.mxu0 0
        %1569 = vmatprep.subr.bf16.mxu0 0
        %1570 = vmatpush2.bf16.msra.mxu0 0
        %1571 = vmatprep.mubr.bf16.mxu0 0
        %1572 = vmatmul.mubr.bf16.gmra.mxu0 %v1496
        %v1573 = vpop.f32.mrf.mxu0
        %v1574 = vadd.f32 0.0, %v1573
        %v1575 = vpop.f32.mrf.mxu0
        %v1576 = vadd.f32 0.0, %v1575
        %v1577 = vpop.f32.mrf.mxu0
        %v1578 = vpop.f32.mrf.mxu0
        %1579 = vdwg.mxu0
        %v1580 = vadd.f32 %v1452, %v1533
        %v1581 = vadd.f32 %v1453, %v1535
        %v1582 = vadd.f32 %v1454, %v1574
        %v1583 = vadd.f32 %v1455, %v1576
        %1584 = vrot.lane.b32.xlu0 %v723, 94
        %v1585 = vpop.permute.xlu0 %1584
        %1586 = vrot.lane.b32.xlu0 %v670, 94
        %v1587 = vpop.permute.xlu0 %1586
        %1588 = vrot.lane.b32.xlu0 %v671, 94
        %v1589 = vpop.permute.xlu0 %1588
        %1590 = vrot.lane.b32.xlu0 %v672, 94
        %v1591 = vpop.permute.xlu0 %1590
        %1592 = vrot.lane.b32.xlu0 %v732, 94
        %v1593 = vpop.permute.xlu0 %1592
        %1594 = vrot.lane.b32.xlu0 %v724, 94
        %v1595 = vpop.permute.xlu0 %1594
        %1596 = vrot.lane.b32.xlu0 %v673, 94
        %v1597 = vpop.permute.xlu0 %1596
        %1598 = vrot.lane.b32.xlu0 %v674, 94
        %v1599 = vpop.permute.xlu0 %1598
        %1600 = vrot.lane.b32.xlu0 %v675, 94
        %v1601 = vpop.permute.xlu0 %1600
        %1602 = vrot.lane.b32.xlu0 %v733, 94
        %v1603 = vpop.permute.xlu0 %1602
        %1604 = vrot.lane.b32.xlu0 %v725, 94
        %v1605 = vpop.permute.xlu0 %1604
        %1606 = vrot.lane.b32.xlu0 %v676, 94
        %v1607 = vpop.permute.xlu0 %1606
        %1608 = vrot.lane.b32.xlu0 %v677, 94
        %v1609 = vpop.permute.xlu0 %1608
        %1610 = vrot.lane.b32.xlu0 %v678, 94
        %v1611 = vpop.permute.xlu0 %1610
        %1612 = vrot.lane.b32.xlu0 %v734, 94
        %v1613 = vpop.permute.xlu0 %1612
        %1614 = vrot.lane.b32.xlu0 %v726, 94
        %v1615 = vpop.permute.xlu0 %1614
        %1616 = vrot.lane.b32.xlu0 %v679, 94
        %v1617 = vpop.permute.xlu0 %1616
        %1618 = vrot.lane.b32.xlu0 %v680, 94
        %v1619 = vpop.permute.xlu0 %1618
        %1620 = vrot.lane.b32.xlu0 %v681, 94
        %v1621 = vpop.permute.xlu0 %1620
        %1622 = vrot.lane.b32.xlu0 %v735, 94
        %v1623 = vpop.permute.xlu0 %1622
        %vm1624 = vcmask 769024
        %v1625 = vsel %vm1624, %v1585, %v1587
        %v1626 = vsel %vm1624, %v1587, %v1589
        %v1627 = vsel %vm1624, %v1589, %v1591
        %v1628 = vsel %vm1624, %v1591, %v1593
        %v1629 = vsel %vm1624, %v1595, %v1597
        %v1630 = vsel %vm1624, %v1597, %v1599
        %v1631 = vsel %vm1624, %v1599, %v1601
        %v1632 = vsel %vm1624, %v1601, %v1603
        %v1633 = vsel %vm1624, %v1605, %v1607
        %v1634 = vsel %vm1624, %v1607, %v1609
        %v1635 = vsel %vm1624, %v1609, %v1611
        %v1636 = vsel %vm1624, %v1611, %v1613
        %v1637 = vsel %vm1624, %v1615, %v1617
        %v1638 = vsel %vm1624, %v1617, %v1619
        %v1639 = vsel %vm1624, %v1619, %v1621
        %v1640 = vsel %vm1624, %v1621, %v1623
        %v1657 = vsel %vm1068, %v1625, 0.0
        %v1658 = vsel %vm1069, %v1626, 0.0
        %v1659 = vsel %vm1070, %v1627, 0.0
        %v1660 = vsel %vm1071, %v1628, 0.0
        %v1661 = vsel %vm1068, %v1629, 0.0
        %v1662 = vsel %vm1069, %v1630, 0.0
        %v1663 = vsel %vm1070, %v1631, 0.0
        %v1664 = vsel %vm1071, %v1632, 0.0
        %v1665 = vsel %vm1068, %v1633, 0.0
        %v1666 = vsel %vm1069, %v1634, 0.0
        %v1667 = vsel %vm1070, %v1635, 0.0
        %v1668 = vsel %vm1071, %v1636, 0.0
        %v1669 = vsel %vm1068, %v1637, 0.0
        %v1670 = vsel %vm1069, %v1638, 0.0
        %v1671 = vsel %vm1070, %v1639, 0.0
        %v1672 = vsel %vm1071, %v1640, 0.0
        %v1673 = vpack.c.bf16 %v1661, %v1657
        %v1674 = vpack.c.bf16 %v1662, %v1658
        %v1675 = vpack.c.bf16 %v1663, %v1659
        %v1676 = vpack.c.bf16 %v1664, %v1660
        %v1677 = vpack.c.bf16 %v1669, %v1665
        %v1678 = vpack.c.bf16 %v1670, %v1666
        %v1679 = vpack.c.bf16 %v1671, %v1667
        %v1680 = vpack.c.bf16 %v1672, %v1668
        %1681 = vrot.lane.b32.xlu0 %v1457, 96
        %v1682 = vpop.permute.xlu0 %1681
        %v1684 = vsel %vm893, %v1682, 0
        %1686 = vmatprep.subr.bf16.mxu0 0
        %1687 = vmatpush1.bf16.msra.mxu0 0
        %1688 = vmatprep.subr.bf16.mxu0 0
        %1689 = vmatpush1.bf16.msra.mxu0 0
        %1690 = vmatprep.subr.bf16.mxu0 0
        %1691 = vmatpush1.bf16.msra.mxu0 0
        %1692 = vmatprep.subr.bf16.mxu0 0
        %1693 = vmatpush1.bf16.msra.mxu0 0
        %1694 = vmatprep.subr.bf16.mxu0 0
        %1695 = vmatpush1.bf16.msra.mxu0 0
        %1696 = vmatprep.subr.bf16.mxu0 0
        %1697 = vmatpush1.bf16.msra.mxu0 0
        %1698 = vmatprep.subr.bf16.mxu0 %v1678
        %1699 = vmatpush1.bf16.msra.mxu0 %v1677
        %1700 = vmatprep.subr.bf16.mxu0 %v1674
        %1701 = vmatpush1.bf16.msra.mxu0 %v1673
        %1702 = vmatprep.subr.bf16.mxu0 0
        %1703 = vmatpush2.bf16.msra.mxu0 0
        %1704 = vmatprep.subr.bf16.mxu0 0
        %1705 = vmatpush2.bf16.msra.mxu0 0
        %1706 = vmatprep.subr.bf16.mxu0 0
        %1707 = vmatpush2.bf16.msra.mxu0 0
        %1708 = vmatprep.subr.bf16.mxu0 0
        %1709 = vmatpush2.bf16.msra.mxu0 0
        %1710 = vmatprep.subr.bf16.mxu0 0
        %1711 = vmatpush2.bf16.msra.mxu0 0
        %1712 = vmatprep.subr.bf16.mxu0 0
        %1713 = vmatpush2.bf16.msra.mxu0 0
        %1714 = vmatprep.subr.bf16.mxu0 0
        %1715 = vmatpush2.bf16.msra.mxu0 0
        %1716 = vmatprep.subr.bf16.mxu0 0
        %1717 = vmatpush2.bf16.msra.mxu0 0
        %1718 = vmatprep.mubr.bf16.mxu0 0
        %1719 = vmatmul.mubr.bf16.gmra.mxu0 %v1684
        %v1720 = vpop.f32.mrf.mxu0
        %v1721 = vadd.f32 0.0, %v1720
        %v1722 = vpop.f32.mrf.mxu0
        %v1723 = vadd.f32 0.0, %v1722
        %v1724 = vpop.f32.mrf.mxu0
        %v1725 = vpop.f32.mrf.mxu0
        %1726 = vdwg.mxu0
        %1727 = vmatprep.subr.bf16.mxu0 0
        %1728 = vmatpush1.bf16.msra.mxu0 0
        %1729 = vmatprep.subr.bf16.mxu0 0
        %1730 = vmatpush1.bf16.msra.mxu0 0
        %1731 = vmatprep.subr.bf16.mxu0 0
        %1732 = vmatpush1.bf16.msra.mxu0 0
        %1733 = vmatprep.subr.bf16.mxu0 0
        %1734 = vmatpush1.bf16.msra.mxu0 0
        %1735 = vmatprep.subr.bf16.mxu0 0
        %1736 = vmatpush1.bf16.msra.mxu0 0
        %1737 = vmatprep.subr.bf16.mxu0 0
        %1738 = vmatpush1.bf16.msra.mxu0 0
        %1739 = vmatprep.subr.bf16.mxu0 %v1680
        %1740 = vmatpush1.bf16.msra.mxu0 %v1679
        %1741 = vmatprep.subr.bf16.mxu0 %v1676
        %1742 = vmatpush1.bf16.msra.mxu0 %v1675
        %1743 = vmatprep.subr.bf16.mxu0 0
        %1744 = vmatpush2.bf16.msra.mxu0 0
        %1745 = vmatprep.subr.bf16.mxu0 0
        %1746 = vmatpush2.bf16.msra.mxu0 0
        %1747 = vmatprep.subr.bf16.mxu0 0
        %1748 = vmatpush2.bf16.msra.mxu0 0
        %1749 = vmatprep.subr.bf16.mxu0 0
        %1750 = vmatpush2.bf16.msra.mxu0 0
        %1751 = vmatprep.subr.bf16.mxu0 0
        %1752 = vmatpush2.bf16.msra.mxu0 0
        %1753 = vmatprep.subr.bf16.mxu0 0
        %1754 = vmatpush2.bf16.msra.mxu0 0
        %1755 = vmatprep.subr.bf16.mxu0 0
        %1756 = vmatpush2.bf16.msra.mxu0 0
        %1757 = vmatprep.subr.bf16.mxu0 0
        %1758 = vmatpush2.bf16.msra.mxu0 0
        %1759 = vmatprep.mubr.bf16.mxu0 0
        %1760 = vmatmul.mubr.bf16.gmra.mxu0 %v1684
        %v1761 = vpop.f32.mrf.mxu0
        %v1762 = vadd.f32 0.0, %v1761
        %v1763 = vpop.f32.mrf.mxu0
        %v1764 = vadd.f32 0.0, %v1763
        %v1765 = vpop.f32.mrf.mxu0
        %v1766 = vpop.f32.mrf.mxu0
        %1767 = vdwg.mxu0
        %v1768 = vadd.f32 %v1580, %v1721
        %v1769 = vadd.f32 %v1581, %v1723
        %v1770 = vadd.f32 %v1582, %v1762
        %v1771 = vadd.f32 %v1583, %v1764
        %1772 = vrot.lane.b32.xlu0 %v723, 64
        %v1773 = vpop.permute.xlu0 %1772
        %1774 = vrot.lane.b32.xlu0 %v670, 64
        %v1775 = vpop.permute.xlu0 %1774
        %1776 = vrot.lane.b32.xlu0 %v671, 64
        %v1777 = vpop.permute.xlu0 %1776
        %1778 = vrot.lane.b32.xlu0 %v672, 64
        %v1779 = vpop.permute.xlu0 %1778
        %1780 = vrot.lane.b32.xlu0 %v732, 64
        %v1781 = vpop.permute.xlu0 %1780
        %1782 = vrot.lane.b32.xlu0 %v724, 64
        %v1783 = vpop.permute.xlu0 %1782
        %1784 = vrot.lane.b32.xlu0 %v673, 64
        %v1785 = vpop.permute.xlu0 %1784
        %1786 = vrot.lane.b32.xlu0 %v674, 64
        %v1787 = vpop.permute.xlu0 %1786
        %1788 = vrot.lane.b32.xlu0 %v675, 64
        %v1789 = vpop.permute.xlu0 %1788
        %1790 = vrot.lane.b32.xlu0 %v733, 64
        %v1791 = vpop.permute.xlu0 %1790
        %1792 = vrot.lane.b32.xlu0 %v725, 64
        %v1793 = vpop.permute.xlu0 %1792
        %1794 = vrot.lane.b32.xlu0 %v676, 64
        %v1795 = vpop.permute.xlu0 %1794
        %1796 = vrot.lane.b32.xlu0 %v677, 64
        %v1797 = vpop.permute.xlu0 %1796
        %1798 = vrot.lane.b32.xlu0 %v678, 64
        %v1799 = vpop.permute.xlu0 %1798
        %1800 = vrot.lane.b32.xlu0 %v734, 64
        %v1801 = vpop.permute.xlu0 %1800
        %1802 = vrot.lane.b32.xlu0 %v726, 64
        %v1803 = vpop.permute.xlu0 %1802
        %1804 = vrot.lane.b32.xlu0 %v679, 64
        %v1805 = vpop.permute.xlu0 %1804
        %1806 = vrot.lane.b32.xlu0 %v680, 64
        %v1807 = vpop.permute.xlu0 %1806
        %1808 = vrot.lane.b32.xlu0 %v681, 64
        %v1809 = vpop.permute.xlu0 %1808
        %1810 = vrot.lane.b32.xlu0 %v735, 64
        %v1811 = vpop.permute.xlu0 %1810
        %vm1812 = vcmask 523264
        %v1813 = vsel %vm1812, %v1773, %v1775
        %v1814 = vsel %vm1812, %v1775, %v1777
        %v1815 = vsel %vm1812, %v1777, %v1779
        %v1816 = vsel %vm1812, %v1779, %v1781
        %v1817 = vsel %vm1812, %v1783, %v1785
        %v1818 = vsel %vm1812, %v1785, %v1787
        %v1819 = vsel %vm1812, %v1787, %v1789
        %v1820 = vsel %vm1812, %v1789, %v1791
        %v1821 = vsel %vm1812, %v1793, %v1795
        %v1822 = vsel %vm1812, %v1795, %v1797
        %v1823 = vsel %vm1812, %v1797, %v1799
        %v1824 = vsel %vm1812, %v1799, %v1801
        %v1825 = vsel %vm1812, %v1803, %v1805
        %v1826 = vsel %vm1812, %v1805, %v1807
        %v1827 = vsel %vm1812, %v1807, %v1809
        %v1828 = vsel %vm1812, %v1809, %v1811
        %v1845 = vsel %vm803, %v1813, 0.0
        %v1846 = vsel %vm804, %v1814, 0.0
        %v1847 = vsel %vm805, %v1815, 0.0
        %v1848 = vsel %vm806, %v1816, 0.0
        %v1849 = vsel %vm803, %v1817, 0.0
        %v1850 = vsel %vm804, %v1818, 0.0
        %v1851 = vsel %vm805, %v1819, 0.0
        %v1852 = vsel %vm806, %v1820, 0.0
        %v1853 = vsel %vm803, %v1821, 0.0
        %v1854 = vsel %vm804, %v1822, 0.0
        %v1855 = vsel %vm805, %v1823, 0.0
        %v1856 = vsel %vm806, %v1824, 0.0
        %v1857 = vsel %vm803, %v1825, 0.0
        %v1858 = vsel %vm804, %v1826, 0.0
        %v1859 = vsel %vm805, %v1827, 0.0
        %v1860 = vsel %vm806, %v1828, 0.0
        %v1861 = vpack.c.bf16 %v1849, %v1845
        %v1862 = vpack.c.bf16 %v1850, %v1846
        %v1863 = vpack.c.bf16 %v1851, %v1847
        %v1864 = vpack.c.bf16 %v1852, %v1848
        %v1865 = vpack.c.bf16 %v1857, %v1853
        %v1866 = vpack.c.bf16 %v1858, %v1854
        %v1867 = vpack.c.bf16 %v1859, %v1855
        %v1868 = vpack.c.bf16 %v1860, %v1856
        %1869 = vrot.lane.b32.xlu0 %v1457, 64
        %v1870 = vpop.permute.xlu0 %1869
        %v1872 = vsel %vm893, %v1870, 0
        %1874 = vmatprep.subr.bf16.mxu0 0
        %1875 = vmatpush1.bf16.msra.mxu0 0
        %1876 = vmatprep.subr.bf16.mxu0 0
        %1877 = vmatpush1.bf16.msra.mxu0 0
        %1878 = vmatprep.subr.bf16.mxu0 0
        %1879 = vmatpush1.bf16.msra.mxu0 0
        %1880 = vmatprep.subr.bf16.mxu0 0
        %1881 = vmatpush1.bf16.msra.mxu0 0
        %1882 = vmatprep.subr.bf16.mxu0 0
        %1883 = vmatpush1.bf16.msra.mxu0 0
        %1884 = vmatprep.subr.bf16.mxu0 0
        %1885 = vmatpush1.bf16.msra.mxu0 0
        %1886 = vmatprep.subr.bf16.mxu0 %v1866
        %1887 = vmatpush1.bf16.msra.mxu0 %v1865
        %1888 = vmatprep.subr.bf16.mxu0 %v1862
        %1889 = vmatpush1.bf16.msra.mxu0 %v1861
        %1890 = vmatprep.subr.bf16.mxu0 0
        %1891 = vmatpush2.bf16.msra.mxu0 0
        %1892 = vmatprep.subr.bf16.mxu0 0
        %1893 = vmatpush2.bf16.msra.mxu0 0
        %1894 = vmatprep.subr.bf16.mxu0 0
        %1895 = vmatpush2.bf16.msra.mxu0 0
        %1896 = vmatprep.subr.bf16.mxu0 0
        %1897 = vmatpush2.bf16.msra.mxu0 0
        %1898 = vmatprep.subr.bf16.mxu0 0
        %1899 = vmatpush2.bf16.msra.mxu0 0
        %1900 = vmatprep.subr.bf16.mxu0 0
        %1901 = vmatpush2.bf16.msra.mxu0 0
        %1902 = vmatprep.subr.bf16.mxu0 0
        %1903 = vmatpush2.bf16.msra.mxu0 0
        %1904 = vmatprep.subr.bf16.mxu0 0
        %1905 = vmatpush2.bf16.msra.mxu0 0
        %1906 = vmatprep.mubr.bf16.mxu0 0
        %1907 = vmatmul.mubr.bf16.gmra.mxu0 %v1872
        %v1908 = vpop.f32.mrf.mxu0
        %v1909 = vadd.f32 0.0, %v1908
        %v1910 = vpop.f32.mrf.mxu0
        %v1911 = vadd.f32 0.0, %v1910
        %v1912 = vpop.f32.mrf.mxu0
        %v1913 = vpop.f32.mrf.mxu0
        %1914 = vdwg.mxu0
        %1915 = vmatprep.subr.bf16.mxu0 0
        %1916 = vmatpush1.bf16.msra.mxu0 0
        %1917 = vmatprep.subr.bf16.mxu0 0
        %1918 = vmatpush1.bf16.msra.mxu0 0
        %1919 = vmatprep.subr.bf16.mxu0 0
        %1920 = vmatpush1.bf16.msra.mxu0 0
        %1921 = vmatprep.subr.bf16.mxu0 0
        %1922 = vmatpush1.bf16.msra.mxu0 0
        %1923 = vmatprep.subr.bf16.mxu0 0
        %1924 = vmatpush1.bf16.msra.mxu0 0
        %1925 = vmatprep.subr.bf16.mxu0 0
        %1926 = vmatpush1.bf16.msra.mxu0 0
        %1927 = vmatprep.subr.bf16.mxu0 %v1868
        %1928 = vmatpush1.bf16.msra.mxu0 %v1867
        %1929 = vmatprep.subr.bf16.mxu0 %v1864
        %1930 = vmatpush1.bf16.msra.mxu0 %v1863
        %1931 = vmatprep.subr.bf16.mxu0 0
        %1932 = vmatpush2.bf16.msra.mxu0 0
        %1933 = vmatprep.subr.bf16.mxu0 0
        %1934 = vmatpush2.bf16.msra.mxu0 0
        %1935 = vmatprep.subr.bf16.mxu0 0
        %1936 = vmatpush2.bf16.msra.mxu0 0
        %1937 = vmatprep.subr.bf16.mxu0 0
        %1938 = vmatpush2.bf16.msra.mxu0 0
        %1939 = vmatprep.subr.bf16.mxu0 0
        %1940 = vmatpush2.bf16.msra.mxu0 0
        %1941 = vmatprep.subr.bf16.mxu0 0
        %1942 = vmatpush2.bf16.msra.mxu0 0
        %1943 = vmatprep.subr.bf16.mxu0 0
        %1944 = vmatpush2.bf16.msra.mxu0 0
        %1945 = vmatprep.subr.bf16.mxu0 0
        %1946 = vmatpush2.bf16.msra.mxu0 0
        %1947 = vmatprep.mubr.bf16.mxu0 0
        %1948 = vmatmul.mubr.bf16.gmra.mxu0 %v1872
        %v1949 = vpop.f32.mrf.mxu0
        %v1950 = vadd.f32 0.0, %v1949
        %v1951 = vpop.f32.mrf.mxu0
        %v1952 = vadd.f32 0.0, %v1951
        %v1953 = vpop.f32.mrf.mxu0
        %v1954 = vpop.f32.mrf.mxu0
        %1955 = vdwg.mxu0
        %v1956 = vadd.f32 %v1768, %v1909
        %v1957 = vadd.f32 %v1769, %v1911
        %v1958 = vadd.f32 %v1770, %v1950
        %v1959 = vadd.f32 %v1771, %v1952
        %1960 = vrot.lane.b32.xlu0 %v1457, 32
        %v1961 = vpop.permute.xlu0 %1960
        %1962 = vrot.lane.b32.xlu0 %v831, 63
        %v1963 = vpop.permute.xlu0 %1962
        %1964 = vrot.lane.b32.xlu0 %v832, 63
        %v1965 = vpop.permute.xlu0 %1964
        %1966 = vrot.lane.b32.xlu0 %v833, 63
        %v1967 = vpop.permute.xlu0 %1966
        %1968 = vrot.lane.b32.xlu0 %v834, 63
        %v1969 = vpop.permute.xlu0 %1968
        %1970 = vrot.lane.b32.xlu0 %v835, 63
        %v1971 = vpop.permute.xlu0 %1970
        %1972 = vrot.lane.b32.xlu0 %v836, 63
        %v1973 = vpop.permute.xlu0 %1972
        %1974 = vrot.lane.b32.xlu0 %v837, 63
        %v1975 = vpop.permute.xlu0 %1974
        %1976 = vrot.lane.b32.xlu0 %v838, 63
        %v1977 = vpop.permute.xlu0 %1976
        %1978 = vrot.lane.b32.xlu0 %v839, 63
        %v1979 = vpop.permute.xlu0 %1978
        %1980 = vrot.lane.b32.xlu0 %v840, 63
        %v1981 = vpop.permute.xlu0 %1980
        %vm1982 = vcmask 515072
        %v1983 = vsel %vm1982, %v1963, %v1965
        %v1984 = vsel %vm1982, %v1965, %v1967
        %v1985 = vsel %vm1982, %v1967, %v1969
        %v1986 = vsel %vm1982, %v1969, %v1971
        %v1987 = vsel %vm1982, %v1973, %v1975
        %v1988 = vsel %vm1982, %v1975, %v1977
        %v1989 = vsel %vm1982, %v1977, %v1979
        %v1990 = vsel %vm1982, %v1979, %v1981
        %v2000 = vsel %vm893, %v1961, 0
        %2002 = vmatprep.subr.bf16.mxu0 0
        %2003 = vmatpush1.bf16.msra.mxu0 0
        %2004 = vmatprep.subr.bf16.mxu0 0
        %2005 = vmatpush1.bf16.msra.mxu0 0
        %2006 = vmatprep.subr.bf16.mxu0 0
        %2007 = vmatpush1.bf16.msra.mxu0 0
        %2008 = vmatprep.subr.bf16.mxu0 0
        %2009 = vmatpush1.bf16.msra.mxu0 0
        %2010 = vmatprep.subr.bf16.mxu0 0
        %2011 = vmatpush1.bf16.msra.mxu0 0
        %2012 = vmatprep.subr.bf16.mxu0 0
        %2013 = vmatpush1.bf16.msra.mxu0 0
        %2014 = vmatprep.subr.bf16.mxu0 %v1988
        %2015 = vmatpush1.bf16.msra.mxu0 %v1987
        %2016 = vmatprep.subr.bf16.mxu0 %v1984
        %2017 = vmatpush1.bf16.msra.mxu0 %v1983
        %2018 = vmatprep.subr.bf16.mxu0 0
        %2019 = vmatpush2.bf16.msra.mxu0 0
        %2020 = vmatprep.subr.bf16.mxu0 0
        %2021 = vmatpush2.bf16.msra.mxu0 0
        %2022 = vmatprep.subr.bf16.mxu0 0
        %2023 = vmatpush2.bf16.msra.mxu0 0
        %2024 = vmatprep.subr.bf16.mxu0 0
        %2025 = vmatpush2.bf16.msra.mxu0 0
        %2026 = vmatprep.subr.bf16.mxu0 0
        %2027 = vmatpush2.bf16.msra.mxu0 0
        %2028 = vmatprep.subr.bf16.mxu0 0
        %2029 = vmatpush2.bf16.msra.mxu0 0
        %2030 = vmatprep.subr.bf16.mxu0 0
        %2031 = vmatpush2.bf16.msra.mxu0 0
        %2032 = vmatprep.subr.bf16.mxu0 0
        %2033 = vmatpush2.bf16.msra.mxu0 0
        %2034 = vmatprep.mubr.bf16.mxu0 0
        %2035 = vmatmul.mubr.bf16.gmra.mxu0 %v2000
        %v2036 = vpop.f32.mrf.mxu0
        %v2037 = vadd.f32 0.0, %v2036
        %v2038 = vpop.f32.mrf.mxu0
        %v2039 = vadd.f32 0.0, %v2038
        %v2040 = vpop.f32.mrf.mxu0
        %v2041 = vpop.f32.mrf.mxu0
        %2042 = vdwg.mxu0
        %2043 = vmatprep.subr.bf16.mxu0 0
        %2044 = vmatpush1.bf16.msra.mxu0 0
        %2045 = vmatprep.subr.bf16.mxu0 0
        %2046 = vmatpush1.bf16.msra.mxu0 0
        %2047 = vmatprep.subr.bf16.mxu0 0
        %2048 = vmatpush1.bf16.msra.mxu0 0
        %2049 = vmatprep.subr.bf16.mxu0 0
        %2050 = vmatpush1.bf16.msra.mxu0 0
        %2051 = vmatprep.subr.bf16.mxu0 0
        %2052 = vmatpush1.bf16.msra.mxu0 0
        %2053 = vmatprep.subr.bf16.mxu0 0
        %2054 = vmatpush1.bf16.msra.mxu0 0
        %2055 = vmatprep.subr.bf16.mxu0 %v1990
        %2056 = vmatpush1.bf16.msra.mxu0 %v1989
        %2057 = vmatprep.subr.bf16.mxu0 %v1986
        %2058 = vmatpush1.bf16.msra.mxu0 %v1985
        %2059 = vmatprep.subr.bf16.mxu0 0
        %2060 = vmatpush2.bf16.msra.mxu0 0
        %2061 = vmatprep.subr.bf16.mxu0 0
        %2062 = vmatpush2.bf16.msra.mxu0 0
        %2063 = vmatprep.subr.bf16.mxu0 0
        %2064 = vmatpush2.bf16.msra.mxu0 0
        %2065 = vmatprep.subr.bf16.mxu0 0
        %2066 = vmatpush2.bf16.msra.mxu0 0
        %2067 = vmatprep.subr.bf16.mxu0 0
        %2068 = vmatpush2.bf16.msra.mxu0 0
        %2069 = vmatprep.subr.bf16.mxu0 0
        %2070 = vmatpush2.bf16.msra.mxu0 0
        %2071 = vmatprep.subr.bf16.mxu0 0
        %2072 = vmatpush2.bf16.msra.mxu0 0
        %2073 = vmatprep.subr.bf16.mxu0 0
        %2074 = vmatpush2.bf16.msra.mxu0 0
        %2075 = vmatprep.mubr.bf16.mxu0 0
        %2076 = vmatmul.mubr.bf16.gmra.mxu0 %v2000
        %v2077 = vpop.f32.mrf.mxu0
        %v2078 = vadd.f32 0.0, %v2077
        %v2079 = vpop.f32.mrf.mxu0
        %v2080 = vadd.f32 0.0, %v2079
        %v2081 = vpop.f32.mrf.mxu0
        %v2082 = vpop.f32.mrf.mxu0
        %2083 = vdwg.mxu0
        %v2084 = vadd.f32 %v1956, %v2037
        %v2085 = vadd.f32 %v1957, %v2039
        %v2086 = vadd.f32 %v1958, %v2078
        %v2087 = vadd.f32 %v1959, %v2080
        %2088 = vrot.lane.b32.xlu0 %v723, 62
        %v2089 = vpop.permute.xlu0 %2088
        %2090 = vrot.lane.b32.xlu0 %v670, 62
        %v2091 = vpop.permute.xlu0 %2090
        %2092 = vrot.lane.b32.xlu0 %v671, 62
        %v2093 = vpop.permute.xlu0 %2092
        %2094 = vrot.lane.b32.xlu0 %v672, 62
        %v2095 = vpop.permute.xlu0 %2094
        %2096 = vrot.lane.b32.xlu0 %v732, 62
        %v2097 = vpop.permute.xlu0 %2096
        %2098 = vrot.lane.b32.xlu0 %v724, 62
        %v2099 = vpop.permute.xlu0 %2098
        %2100 = vrot.lane.b32.xlu0 %v673, 62
        %v2101 = vpop.permute.xlu0 %2100
        %2102 = vrot.lane.b32.xlu0 %v674, 62
        %v2103 = vpop.permute.xlu0 %2102
        %2104 = vrot.lane.b32.xlu0 %v675, 62
        %v2105 = vpop.permute.xlu0 %2104
        %2106 = vrot.lane.b32.xlu0 %v733, 62
        %v2107 = vpop.permute.xlu0 %2106
        %2108 = vrot.lane.b32.xlu0 %v725, 62
        %v2109 = vpop.permute.xlu0 %2108
        %2110 = vrot.lane.b32.xlu0 %v676, 62
        %v2111 = vpop.permute.xlu0 %2110
        %2112 = vrot.lane.b32.xlu0 %v677, 62
        %v2113 = vpop.permute.xlu0 %2112
        %2114 = vrot.lane.b32.xlu0 %v678, 62
        %v2115 = vpop.permute.xlu0 %2114
        %2116 = vrot.lane.b32.xlu0 %v734, 62
        %v2117 = vpop.permute.xlu0 %2116
        %2118 = vrot.lane.b32.xlu0 %v726, 62
        %v2119 = vpop.permute.xlu0 %2118
        %2120 = vrot.lane.b32.xlu0 %v679, 62
        %v2121 = vpop.permute.xlu0 %2120
        %2122 = vrot.lane.b32.xlu0 %v680, 62
        %v2123 = vpop.permute.xlu0 %2122
        %2124 = vrot.lane.b32.xlu0 %v681, 62
        %v2125 = vpop.permute.xlu0 %2124
        %2126 = vrot.lane.b32.xlu0 %v735, 62
        %v2127 = vpop.permute.xlu0 %2126
        %vm2128 = vcmask 506880
        %v2129 = vsel %vm2128, %v2089, %v2091
        %v2130 = vsel %vm2128, %v2091, %v2093
        %v2131 = vsel %vm2128, %v2093, %v2095
        %v2132 = vsel %vm2128, %v2095, %v2097
        %v2133 = vsel %vm2128, %v2099, %v2101
        %v2134 = vsel %vm2128, %v2101, %v2103
        %v2135 = vsel %vm2128, %v2103, %v2105
        %v2136 = vsel %vm2128, %v2105, %v2107
        %v2137 = vsel %vm2128, %v2109, %v2111
        %v2138 = vsel %vm2128, %v2111, %v2113
        %v2139 = vsel %vm2128, %v2113, %v2115
        %v2140 = vsel %vm2128, %v2115, %v2117
        %v2141 = vsel %vm2128, %v2119, %v2121
        %v2142 = vsel %vm2128, %v2121, %v2123
        %v2143 = vsel %vm2128, %v2123, %v2125
        %v2144 = vsel %vm2128, %v2125, %v2127
        %v2161 = vsel %vm1068, %v2129, 0.0
        %v2162 = vsel %vm1069, %v2130, 0.0
        %v2163 = vsel %vm1070, %v2131, 0.0
        %v2164 = vsel %vm1071, %v2132, 0.0
        %v2165 = vsel %vm1068, %v2133, 0.0
        %v2166 = vsel %vm1069, %v2134, 0.0
        %v2167 = vsel %vm1070, %v2135, 0.0
        %v2168 = vsel %vm1071, %v2136, 0.0
        %v2169 = vsel %vm1068, %v2137, 0.0
        %v2170 = vsel %vm1069, %v2138, 0.0
        %v2171 = vsel %vm1070, %v2139, 0.0
        %v2172 = vsel %vm1071, %v2140, 0.0
        %v2173 = vsel %vm1068, %v2141, 0.0
        %v2174 = vsel %vm1069, %v2142, 0.0
        %v2175 = vsel %vm1070, %v2143, 0.0
        %v2176 = vsel %vm1071, %v2144, 0.0
        %v2177 = vpack.c.bf16 %v2165, %v2161
        %v2178 = vpack.c.bf16 %v2166, %v2162
        %v2179 = vpack.c.bf16 %v2167, %v2163
        %v2180 = vpack.c.bf16 %v2168, %v2164
        %v2181 = vpack.c.bf16 %v2173, %v2169
        %v2182 = vpack.c.bf16 %v2174, %v2170
        %v2183 = vpack.c.bf16 %v2175, %v2171
        %v2184 = vpack.c.bf16 %v2176, %v2172
        %v2186 = vsel %vm893, %v798, 0
        %2188 = vmatprep.subr.bf16.mxu0 0
        %2189 = vmatpush1.bf16.msra.mxu0 0
        %2190 = vmatprep.subr.bf16.mxu0 0
        %2191 = vmatpush1.bf16.msra.mxu0 0
        %2192 = vmatprep.subr.bf16.mxu0 0
        %2193 = vmatpush1.bf16.msra.mxu0 0
        %2194 = vmatprep.subr.bf16.mxu0 0
        %2195 = vmatpush1.bf16.msra.mxu0 0
        %2196 = vmatprep.subr.bf16.mxu0 0
        %2197 = vmatpush1.bf16.msra.mxu0 0
        %2198 = vmatprep.subr.bf16.mxu0 0
        %2199 = vmatpush1.bf16.msra.mxu0 0
        %2200 = vmatprep.subr.bf16.mxu0 %v2182
        %2201 = vmatpush1.bf16.msra.mxu0 %v2181
        %2202 = vmatprep.subr.bf16.mxu0 %v2178
        %2203 = vmatpush1.bf16.msra.mxu0 %v2177
        %2204 = vmatprep.subr.bf16.mxu0 0
        %2205 = vmatpush2.bf16.msra.mxu0 0
        %2206 = vmatprep.subr.bf16.mxu0 0
        %2207 = vmatpush2.bf16.msra.mxu0 0
        %2208 = vmatprep.subr.bf16.mxu0 0
        %2209 = vmatpush2.bf16.msra.mxu0 0
        %2210 = vmatprep.subr.bf16.mxu0 0
        %2211 = vmatpush2.bf16.msra.mxu0 0
        %2212 = vmatprep.subr.bf16.mxu0 0
        %2213 = vmatpush2.bf16.msra.mxu0 0
        %2214 = vmatprep.subr.bf16.mxu0 0
        %2215 = vmatpush2.bf16.msra.mxu0 0
        %2216 = vmatprep.subr.bf16.mxu0 0
        %2217 = vmatpush2.bf16.msra.mxu0 0
        %2218 = vmatprep.subr.bf16.mxu0 0
        %2219 = vmatpush2.bf16.msra.mxu0 0
        %2220 = vmatprep.mubr.bf16.mxu0 0
        %2221 = vmatmul.mubr.bf16.gmra.mxu0 %v2186
        %v2222 = vpop.f32.mrf.mxu0
        %v2223 = vadd.f32 0.0, %v2222
        %v2224 = vpop.f32.mrf.mxu0
        %v2225 = vadd.f32 0.0, %v2224
        %v2226 = vpop.f32.mrf.mxu0
        %v2227 = vpop.f32.mrf.mxu0
        %2228 = vdwg.mxu0
        %2229 = vmatprep.subr.bf16.mxu0 0
        %2230 = vmatpush1.bf16.msra.mxu0 0
        %2231 = vmatprep.subr.bf16.mxu0 0
        %2232 = vmatpush1.bf16.msra.mxu0 0
        %2233 = vmatprep.subr.bf16.mxu0 0
        %2234 = vmatpush1.bf16.msra.mxu0 0
        %2235 = vmatprep.subr.bf16.mxu0 0
        %2236 = vmatpush1.bf16.msra.mxu0 0
        %2237 = vmatprep.subr.bf16.mxu0 0
        %2238 = vmatpush1.bf16.msra.mxu0 0
        %2239 = vmatprep.subr.bf16.mxu0 0
        %2240 = vmatpush1.bf16.msra.mxu0 0
        %2241 = vmatprep.subr.bf16.mxu0 %v2184
        %2242 = vmatpush1.bf16.msra.mxu0 %v2183
        %2243 = vmatprep.subr.bf16.mxu0 %v2180
        %2244 = vmatpush1.bf16.msra.mxu0 %v2179
        %2245 = vmatprep.subr.bf16.mxu0 0
        %2246 = vmatpush2.bf16.msra.mxu0 0
        %2247 = vmatprep.subr.bf16.mxu0 0
        %2248 = vmatpush2.bf16.msra.mxu0 0
        %2249 = vmatprep.subr.bf16.mxu0 0
        %2250 = vmatpush2.bf16.msra.mxu0 0
        %2251 = vmatprep.subr.bf16.mxu0 0
        %2252 = vmatpush2.bf16.msra.mxu0 0
        %2253 = vmatprep.subr.bf16.mxu0 0
        %2254 = vmatpush2.bf16.msra.mxu0 0
        %2255 = vmatprep.subr.bf16.mxu0 0
        %2256 = vmatpush2.bf16.msra.mxu0 0
        %2257 = vmatprep.subr.bf16.mxu0 0
        %2258 = vmatpush2.bf16.msra.mxu0 0
        %2259 = vmatprep.subr.bf16.mxu0 0
        %2260 = vmatpush2.bf16.msra.mxu0 0
        %2261 = vmatprep.mubr.bf16.mxu0 0
        %2262 = vmatmul.mubr.bf16.gmra.mxu0 %v2186
        %v2263 = vpop.f32.mrf.mxu0
        %v2264 = vadd.f32 0.0, %v2263
        %v2265 = vpop.f32.mrf.mxu0
        %v2266 = vadd.f32 0.0, %v2265
        %v2267 = vpop.f32.mrf.mxu0
        %v2268 = vpop.f32.mrf.mxu0
        %2269 = vdwg.mxu0
        %v2270 = vadd.f32 %v2084, %v2223
        %v2271 = vadd.f32 %v2085, %v2225
        %v2272 = vadd.f32 %v2086, %v2264
        %v2273 = vadd.f32 %v2087, %v2266
        %2274 = vst [vmem:[%s426] sm:$0xff] %v2270
        %2275 = vst [vmem:[%s426 + $0x8] sm:$0xff] %v2271
        %2276 = vst [vmem:[%s426 + $0x10] sm:$0xff] %v2272
        %2277 = vst [vmem:[%s426 + $0x18] sm:$0xff] %v2273
        %s2278 = smul.u32 4, %s23
        %p2279 = scmp.lt.s32.totalorder %s22, 1
        %s2280 = scalar_select %p2279, %s22, 1
        %p2281 = scmp.lt.s32.totalorder %s2278, 7
        %s2282 = scalar_select %p2281, %s2278, 7
        %s2283 = smul.addr %s2280, 16
        %s2284 = sadd.s32 %s2282, %s2283
        %s2285 = smul.addr %s2284, 8
        %s2286 = scalar_lea.vmem %s7, %s2285
        // Predicated region
        $region68: #{bottleneck_block.3} parent=62 // pred_check
          %p2287 = pneg %p209
        $region69: #{bottleneck_block.3} parent=62 // pred_check_branch
          %2289 = sbr.rel (%p2287) target = $region71
        $region70: #{bottleneck_block.3} parent=62 // pred_region
          %s2290 = smul.u32 4, %s23
        $region71: #{bottleneck_block.3} parent=62 // pred_fallthru
          _
      $region63: #{bottleneck_block.3} parent=5 // pred_fallthru
        _
      %p2291 = scmp.le.s32.totalorder 2, %s13
      // Predicated region
      $region72: #{bottleneck_block.3} parent=5 // pred_check
        %p2292 = pneg %p2291
      $region73: #{bottleneck_block.3} parent=5 // pred_check_branch
        %2294 = sbr.rel (%p2292) target = $region75
      $region74: #{bottleneck_block.3} parent=5 // pred_region
        %s2295 = ssub.s32 %s13, 2
        // Predicated region
        $region76: #{bottleneck_block.3} parent=74 // pred_check
          %p2296 = pneg %p215
        $region77: #{bottleneck_block.3} parent=74 // pred_check_branch
          %2298 = sbr.rel (%p2296) target = $region79
        $region78: #{bottleneck_block.3} parent=74 // pred_region
          %s2299 = smul.u32 4, %s25
          %p2300 = scmp.lt.s32.totalorder %s24, 1
          %s2301 = scalar_select %p2300, %s24, 1
          %p2302 = scmp.lt.s32.totalorder %s2299, 7
          %s2303 = scalar_select %p2302, %s2299, 7
          %s2304 = smul.addr %s2301, 16
          %s2305 = sadd.s32 %s2303, %s2304
          %s2306 = smul.addr %s2305, 8
          %s2307 = scalar_lea.vmem %s7, %s2306
        $region79: #{bottleneck_block.3} parent=74 // pred_fallthru
          _
      $region75: #{bottleneck_block.3} parent=5 // pred_fallthru
        _
    $region6: #{bottleneck_block.3} parent=1 // loop_footer
      %s17 = sadd.s32 1, %s13
    $region7: #{bottleneck_block.3} parent=1 // loop_footer_branch
      %12 = sbr.rel target = $region3
    $region8: #{bottleneck_block.3} parent=1 // loop_exit
      _

</llo_original>
